<compile_context>
chip_gen: v7x
topology: tpu7x:2x2x1
jax: 0.10.0
libtpu: 0.0.40
codegen_flags: <defaults>
</compile_context>

<pallas_src>
import functools

import jax
import jax.numpy as jnp
from jax import lax
from jax.experimental import pallas as pl
from jax.experimental.pallas import tpu as pltpu

EPS = 1e-5


# ----------------------------------------------------------------------------
# The fused kernel: one batch tile of `tile_n` samples per grid step.
# Row/feature conventions per tile (T = tile_n):
#   x_ref : (T, 40, 32)  f32   rows 0..31 = conv1's 2-padded 28x28 image
#   y1    : (T*32, 168)        row (n,i) i=0..27 valid, col = c1*28 + j
#   y2    : (T*16, 160)        row (n,i2) i2=0..9 valid, col = c2*10 + j2
#   out   : (T, 128)     f32   cols 0..num_classes-1 = logits (rest zero pad)
# ----------------------------------------------------------------------------
def _lenet5_kernel(x_ref, w1_ref, t1_ref, g1_ref, w2_ref, t2_ref,
                   g2_ref, wfc_ref, bfc_ref, w3_ref, b3_ref, w4_ref, b4_ref,
                   o_ref, *, tile_n):
    f32 = jnp.float32
    bf16 = jnp.bfloat16
    T = tile_n

    # --- layer1: Conv2d(1,6,k5,p2) + BN1 + ReLU  (width-Toeplitz matmuls) ----
    acc1 = jnp.zeros((T * 32, 168), f32)
    for kh in range(5):
        a = x_ref[:, kh:kh + 32, :].reshape(T * 32, 32).astype(bf16)
        acc1 += jnp.dot(a, w1_ref[kh], preferred_element_type=f32)
    y1 = jnp.maximum(acc1 + t1_ref[...], 0.0).astype(bf16)          # (T*32,168)

    # --- avgpool1 rows + conv2 row window (g1), Conv2d(6,16,k5) + BN2 + ReLU -
    # (avgpool1 columns and the 0.25 factor are folded into w2.)
    acc2 = jnp.zeros((T * 16, 160), f32)
    for kh in range(5):
        rows = jnp.dot(g1_ref[kh], y1, preferred_element_type=f32).astype(bf16)
        acc2 += jnp.dot(rows, w2_ref[kh], preferred_element_type=f32)
    y2 = jnp.maximum(acc2 + t2_ref[...], 0.0).astype(bf16)          # (T*16,160)

    # --- avgpool2 rows + NCHW-flatten row select (g2), fc(400,120)+ReLU ------
    # (avgpool2 columns, the 0.25 factor and the NCHW flatten order are folded
    #  into wfc.)
    h = jnp.zeros((T, 120), f32)
    for i in range(5):
        rows = jnp.dot(g2_ref[i], y2, preferred_element_type=f32).astype(bf16)
        h += jnp.dot(rows, wfc_ref[i], preferred_element_type=f32)
    h = jnp.maximum(h + bfc_ref[...], 0.0).astype(bf16)

    # --- fc1(120,84)+ReLU, fc2(84,num_classes) (zero-padded to 128 lanes) ----
    h = jnp.maximum(jnp.dot(h, w3_ref[...], preferred_element_type=f32)
                    + b3_ref[...], 0.0).astype(bf16)
    o_ref[...] = jnp.dot(h, w4_ref[...], preferred_element_type=f32) + b4_ref[...]


# ----------------------------------------------------------------------------
# Weight folding (plain-JAX glue on tiny tensors, done once per call).
# ----------------------------------------------------------------------------
def _prepare(p, tile_n):
    f32 = jnp.float32
    bf16 = jnp.bfloat16
    T = tile_n

    s1 = p["bn1_g"] * lax.rsqrt(p["bn1_v"] + EPS)
    sh1 = p["bn1_b"] - p["bn1_m"] * s1
    s2 = p["bn2_g"] * lax.rsqrt(p["bn2_v"] + EPS)
    sh2 = p["bn2_b"] - p["bn2_m"] * s2

    # conv1 as width-Toeplitz matmuls:  w1t[kh][c, co*28+j] = w1[co,0,kh,c-j]*s1
    w1s = p["conv1_w"][:, 0] * s1[:, None, None]                      # (6,5,5)
    eye28 = jnp.eye(28, dtype=f32)
    w1t = jnp.zeros((5, 32, 6, 28), f32)
    for kh in range(5):
        for kw in range(5):
            w1t = w1t.at[kh, kw:kw + 28].add(
                w1s[:, kh, kw][None, :, None] * eye28[:, None, :])
    w1t = w1t.reshape(5, 32, 168)
    t1 = jnp.repeat(p["conv1_b"] * s1 + sh1, 28).reshape(1, 168)

    # conv2 as width-Toeplitz matmuls with avgpool1's column half (x0.25) folded
    pc28 = 0.25 * (jnp.arange(28)[:, None] // 2
                   == jnp.arange(14)[None, :]).astype(f32)            # (28,14)
    P1 = jnp.kron(jnp.eye(6, dtype=f32), pc28)                        # (168,84)
    w2s = p["conv2_w"] * s2[:, None, None, None]                      # (16,6,5,5)
    eye10 = jnp.eye(10, dtype=f32)
    w2toe = jnp.zeros((5, 6, 14, 16, 10), f32)
    for kh in range(5):
        for kw in range(5):
            w2toe = w2toe.at[kh, :, kw:kw + 10].add(
                w2s[:, :, kh, kw].T[:, None, :, None] * eye10[None, :, None, :])
    w2toe = w2toe.reshape(5, 84, 160)
    w2t = jnp.einsum("af,kfo->kao", P1, w2toe)                        # (5,168,160)
    t2 = jnp.repeat(p["conv2_b"] * s2 + sh2, 10).reshape(1, 160)

    # fc with avgpool2's column half (x0.25) + PyTorch NCHW flatten folded in
    pc10 = 0.25 * (jnp.arange(10)[:, None] // 2
                   == jnp.arange(5)[None, :]).astype(f32)             # (10,5)
    P2 = jnp.kron(jnp.eye(16, dtype=f32), pc10)                       # (160,80)
    fcw = p["fc_w"].reshape(120, 16, 5, 5)
    wfc = jnp.stack([P2 @ fcw[:, :, i, :].transpose(1, 2, 0).reshape(80, 120)
                     for i in range(5)])                              # (5,160,120)
    bfc = p["fc_b"].reshape(1, 120)

    wfc1 = p["fc1_w"].T                                               # (120,84)
    bfc1 = p["fc1_b"].reshape(1, 84)
    nc = p["fc2_w"].shape[0]
    wfc2 = jnp.zeros((84, 128), f32).at[:, :nc].set(p["fc2_w"].T)     # lane-dense
    bfc2 = jnp.zeros((1, 128), f32).at[:, :nc].set(p["fc2_b"])

    # 0/1 row-pool + row-window selection matrices (block-diagonal per sample)
    pair16 = jnp.kron(jnp.eye(16, dtype=f32), jnp.ones((1, 2), f32))  # (16,32)
    g1 = jnp.stack([jnp.kron(jnp.eye(T, dtype=f32),
                             jnp.eye(16, k=kh, dtype=f32) @ pair16)
                    for kh in range(5)])                              # (5,16T,32T)
    eye8 = jnp.eye(8, dtype=f32)
    g2 = jnp.stack([jnp.kron(jnp.eye(T, dtype=f32),
                             jnp.kron(eye8[i:i + 1], jnp.ones((1, 2), f32)))
                    for i in range(5)])                               # (5,T,16T)

    bf = lambda a: a.astype(bf16)
    return (bf(w1t), t1, bf(g1), bf(w2t), t2, bf(g2), bf(wfc), bfc,
            bf(wfc1), bfc1, bf(wfc2), bfc2)


# ----------------------------------------------------------------------------
# LeNet5 forward (vis_features=False)
# ----------------------------------------------------------------------------
def lenet5_forward(x, p, *, tile_n=8):
    """x: (N,1,28,28) f32 NCHW  ->  logits (N, num_classes) f32."""
    N = x.shape[0]
    nc = p["fc2_w"].shape[0]
    assert nc <= 128
    T = tile_n
    Np = ((N + T - 1) // T) * T

    # zero-pad 28x28 -> 40x32 (conv1's pad=2 halo + row slack) and to full tiles
    ximg = x[:, 0].astype(jnp.float32)                                # (N,28,28)
    xk = jnp.pad(ximg, ((0, Np - N), (2, 10), (2, 2)))                # (Np,40,32)

    consts = _prepare(p, T)
    kern = functools.partial(_lenet5_kernel, tile_n=T)

    full = lambda i: (0, 0)
    full3 = lambda i: (0, 0, 0)
    out = pl.pallas_call(
        kern,
        out_shape=jax.ShapeDtypeStruct((Np, 128), jnp.float32),
        grid=(Np // T,),
        in_specs=[
            pl.BlockSpec((T, 40, 32), lambda i: (i, 0, 0)),           # x
            pl.BlockSpec((5, 32, 168), full3),                        # w1t
            pl.BlockSpec((1, 168), full),                             # t1
            pl.BlockSpec((5, 16 * T, 32 * T), full3),                 # g1
            pl.BlockSpec((5, 168, 160), full3),                       # w2t
            pl.BlockSpec((1, 160), full),                             # t2
            pl.BlockSpec((5, T, 16 * T), full3),                      # g2
            pl.BlockSpec((5, 160, 120), full3),                       # wfc
            pl.BlockSpec((1, 120), full),                             # bfc
            pl.BlockSpec((120, 84), full),                            # fc1 w
            pl.BlockSpec((1, 84), full),                              # fc1 b
            pl.BlockSpec((84, 128), full),                            # fc2 w (padded)
            pl.BlockSpec((1, 128), full),                             # fc2 b (padded)
        ],
        out_specs=pl.BlockSpec((T, 128), lambda i: (i, 0)),
        compiler_params=pltpu.CompilerParams(
            dimension_semantics=("parallel",)),
    )(xk, *consts)
    return out[:N, :nc]


# ----------------------------------------------------------------------------
# Pure-JAX f32 reference (correctness check)
# ----------------------------------------------------------------------------
def lenet5_reference(x, p):
    def conv_bn_relu(x, w, b, g, be, mu, var, pad):
        y = lax.conv_general_dilated(x, w, (1, 1), [(pad, pad), (pad, pad)],
                                     dimension_numbers=("NCHW", "OIHW", "NCHW"))
        y = y + b[None, :, None, None]
        s = (g / jnp.sqrt(var + EPS))[None, :, None, None]
        y = (y - mu[None, :, None, None]) * s + be[None, :, None, None]
        return jnp.maximum(y, 0.0)

    def avgpool(x):
        return lax.reduce_window(x, 0.0, lax.add, (1, 1, 2, 2), (1, 1, 2, 2),
                                 "VALID") / 4.0

    y = conv_bn_relu(x, p["conv1_w"], p["conv1_b"],
                     p["bn1_g"], p["bn1_b"], p["bn1_m"], p["bn1_v"], pad=2)
    y = avgpool(y)
    y = conv_bn_relu(y, p["conv2_w"], p["conv2_b"],
                     p["bn2_g"], p["bn2_b"], p["bn2_m"], p["bn2_v"], pad=0)
    y = avgpool(y)
    y = y.reshape(y.shape[0], -1)
    y = jnp.maximum(y @ p["fc_w"].T + p["fc_b"], 0.0)
    y = jnp.maximum(y @ p["fc1_w"].T + p["fc1_b"], 0.0)
    return y @ p["fc2_w"].T + p["fc2_b"]


# ----------------------------------------------------------------------------
# Deterministic parameter init (PyTorch-like uniform(-1/sqrt(fan_in), ...))
# ----------------------------------------------------------------------------
def init_params(key, num_classes=10):
    ks = jax.random.split(key, 20)
    u = lambda k, shape, fan_in: jax.random.uniform(
        k, shape, jnp.float32, -1.0 / jnp.sqrt(fan_in), 1.0 / jnp.sqrt(fan_in))
    p = {}
    p["conv1_w"] = u(ks[0], (6, 1, 5, 5), 25)
    p["conv1_b"] = u(ks[1], (6,), 25)
    p["bn1_g"] = 1.0 + 0.1 * jax.random.normal(ks[2], (6,), jnp.float32)
    p["bn1_b"] = 0.1 * jax.random.normal(ks[3], (6,), jnp.float32)
    p["bn1_m"] = 0.1 * jax.random.normal(ks[4], (6,), jnp.float32)
    p["bn1_v"] = 1.0 + 0.1 * jax.random.uniform(ks[5], (6,), jnp.float32)
    p["conv2_w"] = u(ks[6], (16, 6, 5, 5), 150)
    p["conv2_b"] = u(ks[7], (16,), 150)
    p["bn2_g"] = 1.0 + 0.1 * jax.random.normal(ks[8], (16,), jnp.float32)
    p["bn2_b"] = 0.1 * jax.random.normal(ks[9], (16,), jnp.float32)
    p["bn2_m"] = 0.1 * jax.random.normal(ks[10], (16,), jnp.float32)
    p["bn2_v"] = 1.0 + 0.1 * jax.random.uniform(ks[11], (16,), jnp.float32)
    p["fc_w"] = u(ks[12], (120, 400), 400)
    p["fc_b"] = u(ks[13], (120,), 400)
    p["fc1_w"] = u(ks[14], (84, 120), 120)
    p["fc1_b"] = u(ks[15], (84,), 120)
    p["fc2_w"] = u(ks[16], (num_classes, 84), 84)
    p["fc2_b"] = u(ks[17], (num_classes,), 84)
    return p


if __name__ == "__main__":
    key = jax.random.PRNGKey(0)
    kx, kp = jax.random.split(key)
    params = init_params(kp, num_classes=10)

    fwd = jax.jit(lenet5_forward)
    ref = jax.jit(lenet5_reference)

    # batch=2 (single grid step) and batch=12 (multi-step grid with padding)
    for n in (2, 12):
        x = jax.random.normal(jax.random.fold_in(kx, n), (n, 1, 28, 28),
                              jnp.float32)
        out = jax.block_until_ready(fwd(x, params))
        expect = jax.block_until_ready(ref(x, params))
        assert out.shape == (n, 10) and out.dtype == jnp.float32
        # bf16 matmul operands with f32 accumulation -> loose-but-meaningful tol
        assert jnp.allclose(out, expect, rtol=5e-2, atol=5e-2)

    print("KERNEL_OK")
</pallas_src>

<mosaic_0001>
module attributes {stable_mosaic.version = 11 : i64} {
  func.func @_lenet5_kernel(%arg0: i32, %arg1: memref<8x40x32xf32, #tpu.memory_space<vmem>>, %arg2: memref<5x32x168xbf16, #tpu.memory_space<vmem>>, %arg3: memref<1x168xf32, #tpu.memory_space<vmem>>, %arg4: memref<5x128x256xbf16, #tpu.memory_space<vmem>>, %arg5: memref<5x168x160xbf16, #tpu.memory_space<vmem>>, %arg6: memref<1x160xf32, #tpu.memory_space<vmem>>, %arg7: memref<5x8x128xbf16, #tpu.memory_space<vmem>>, %arg8: memref<5x160x120xbf16, #tpu.memory_space<vmem>>, %arg9: memref<1x120xf32, #tpu.memory_space<vmem>>, %arg10: memref<120x84xbf16, #tpu.memory_space<vmem>>, %arg11: memref<1x84xf32, #tpu.memory_space<vmem>>, %arg12: memref<84x128xbf16, #tpu.memory_space<vmem>>, %arg13: memref<1x128xf32, #tpu.memory_space<vmem>>, %arg14: memref<8x128xf32, #tpu.memory_space<vmem>>) attributes {dimension_semantics = [#tpu.dimension_semantics<parallel>], iteration_bounds = array<i64: 1>, scalar_prefetch = 0 : i64, scratch_operands = 0 : i64, tpu.core_type = #tpu.core_type<tc>, window_params = [{transform_indices = @transform_0, window_bounds = array<i64: 8, 40, 32>}, {pipeline_mode = #tpu.pipeline_mode<synchronous>, transform_indices = @transform_1, window_bounds = array<i64: 5, 32, 168>}, {pipeline_mode = #tpu.pipeline_mode<synchronous>, transform_indices = @transform_2, window_bounds = array<i64: 1, 168>}, {pipeline_mode = #tpu.pipeline_mode<synchronous>, transform_indices = @transform_3, window_bounds = array<i64: 5, 128, 256>}, {pipeline_mode = #tpu.pipeline_mode<synchronous>, transform_indices = @transform_4, window_bounds = array<i64: 5, 168, 160>}, {pipeline_mode = #tpu.pipeline_mode<synchronous>, transform_indices = @transform_5, window_bounds = array<i64: 1, 160>}, {pipeline_mode = #tpu.pipeline_mode<synchronous>, transform_indices = @transform_6, window_bounds = array<i64: 5, 8, 128>}, {pipeline_mode = #tpu.pipeline_mode<synchronous>, transform_indices = @transform_7, window_bounds = array<i64: 5, 160, 120>}, {pipeline_mode = #tpu.pipeline_mode<synchronous>, transform_indices = @transform_8, window_bounds = array<i64: 1, 120>}, {pipeline_mode = #tpu.pipeline_mode<synchronous>, transform_indices = @transform_9, window_bounds = array<i64: 120, 84>}, {pipeline_mode = #tpu.pipeline_mode<synchronous>, transform_indices = @transform_10, window_bounds = array<i64: 1, 84>}, {pipeline_mode = #tpu.pipeline_mode<synchronous>, transform_indices = @transform_11, window_bounds = array<i64: 84, 128>}, {pipeline_mode = #tpu.pipeline_mode<synchronous>, transform_indices = @transform_12, window_bounds = array<i64: 1, 128>}, {transform_indices = @transform_13, window_bounds = array<i64: 8, 128>}]} {
    %cst = arith.constant 0.000000e+00 : f32
    %0 = vector.broadcast %cst : f32 to vector<256x168xf32>
    %c0 = arith.constant 0 : index
    %c0_0 = arith.constant 0 : index
    %c0_1 = arith.constant 0 : index
    %1 = vector.load %arg1[%c0, %c0_0, %c0_1] : memref<8x40x32xf32, #tpu.memory_space<vmem>>, vector<8x32x32xf32>
    %2 = vector.shape_cast %1 : vector<8x32x32xf32> to vector<256x32xf32>
    %3 = arith.truncf %2 : vector<256x32xf32> to vector<256x32xbf16>
    %c0_2 = arith.constant 0 : index
    %c0_3 = arith.constant 0 : index
    %c0_4 = arith.constant 0 : index
    %4 = vector.load %arg2[%c0_2, %c0_3, %c0_4] : memref<5x32x168xbf16, #tpu.memory_space<vmem>>, vector<1x32x168xbf16>
    %5 = vector.shape_cast %4 : vector<1x32x168xbf16> to vector<32x168xbf16>
    %cst_5 = arith.constant dense<0.000000e+00> : vector<256x168xf32>
    %6 = tpu.matmul %3, %5, %cst_5 {dimension_numbers = #tpu.dot_dimension_numbers<[1], [0], [0], [1], [0, 0, 1, 1], [], []>} : vector<256x32xbf16>, vector<32x168xbf16>, vector<256x168xf32> -> vector<256x168xf32>
    %7 = arith.addf %0, %6 : vector<256x168xf32>
    %c0_6 = arith.constant 0 : index
    %c1 = arith.constant 1 : index
    %c0_7 = arith.constant 0 : index
    %8 = vector.load %arg1[%c0_6, %c1, %c0_7] : memref<8x40x32xf32, #tpu.memory_space<vmem>>, vector<8x32x32xf32>
    %9 = vector.shape_cast %8 : vector<8x32x32xf32> to vector<256x32xf32>
    %10 = arith.truncf %9 : vector<256x32xf32> to vector<256x32xbf16>
    %c1_8 = arith.constant 1 : index
    %c0_9 = arith.constant 0 : index
    %c0_10 = arith.constant 0 : index
    %11 = vector.load %arg2[%c1_8, %c0_9, %c0_10] : memref<5x32x168xbf16, #tpu.memory_space<vmem>>, vector<1x32x168xbf16>
    %12 = vector.shape_cast %11 : vector<1x32x168xbf16> to vector<32x168xbf16>
    %cst_11 = arith.constant dense<0.000000e+00> : vector<256x168xf32>
    %13 = tpu.matmul %10, %12, %cst_11 {dimension_numbers = #tpu.dot_dimension_numbers<[1], [0], [0], [1], [0, 0, 1, 1], [], []>} : vector<256x32xbf16>, vector<32x168xbf16>, vector<256x168xf32> -> vector<256x168xf32>
    %14 = arith.addf %7, %13 : vector<256x168xf32>
    %c0_12 = arith.constant 0 : index
    %c2 = arith.constant 2 : index
    %c0_13 = arith.constant 0 : index
    %15 = vector.load %arg1[%c0_12, %c2, %c0_13] : memref<8x40x32xf32, #tpu.memory_space<vmem>>, vector<8x32x32xf32>
    %16 = vector.shape_cast %15 : vector<8x32x32xf32> to vector<256x32xf32>
    %17 = arith.truncf %16 : vector<256x32xf32> to vector<256x32xbf16>
    %c2_14 = arith.constant 2 : index
    %c0_15 = arith.constant 0 : index
    %c0_16 = arith.constant 0 : index
    %18 = vector.load %arg2[%c2_14, %c0_15, %c0_16] : memref<5x32x168xbf16, #tpu.memory_space<vmem>>, vector<1x32x168xbf16>
    %19 = vector.shape_cast %18 : vector<1x32x168xbf16> to vector<32x168xbf16>
    %cst_17 = arith.constant dense<0.000000e+00> : vector<256x168xf32>
    %20 = tpu.matmul %17, %19, %cst_17 {dimension_numbers = #tpu.dot_dimension_numbers<[1], [0], [0], [1], [0, 0, 1, 1], [], []>} : vector<256x32xbf16>, vector<32x168xbf16>, vector<256x168xf32> -> vector<256x168xf32>
    %21 = arith.addf %14, %20 : vector<256x168xf32>
    %c0_18 = arith.constant 0 : index
    %c3 = arith.constant 3 : index
    %c0_19 = arith.constant 0 : index
    %22 = vector.load %arg1[%c0_18, %c3, %c0_19] : memref<8x40x32xf32, #tpu.memory_space<vmem>>, vector<8x32x32xf32>
    %23 = vector.shape_cast %22 : vector<8x32x32xf32> to vector<256x32xf32>
    %24 = arith.truncf %23 : vector<256x32xf32> to vector<256x32xbf16>
    %c3_20 = arith.constant 3 : index
    %c0_21 = arith.constant 0 : index
    %c0_22 = arith.constant 0 : index
    %25 = vector.load %arg2[%c3_20, %c0_21, %c0_22] : memref<5x32x168xbf16, #tpu.memory_space<vmem>>, vector<1x32x168xbf16>
    %26 = vector.shape_cast %25 : vector<1x32x168xbf16> to vector<32x168xbf16>
    %cst_23 = arith.constant dense<0.000000e+00> : vector<256x168xf32>
    %27 = tpu.matmul %24, %26, %cst_23 {dimension_numbers = #tpu.dot_dimension_numbers<[1], [0], [0], [1], [0, 0, 1, 1], [], []>} : vector<256x32xbf16>, vector<32x168xbf16>, vector<256x168xf32> -> vector<256x168xf32>
    %28 = arith.addf %21, %27 : vector<256x168xf32>
    %c0_24 = arith.constant 0 : index
    %c4 = arith.constant 4 : index
    %c0_25 = arith.constant 0 : index
    %29 = vector.load %arg1[%c0_24, %c4, %c0_25] : memref<8x40x32xf32, #tpu.memory_space<vmem>>, vector<8x32x32xf32>
    %30 = vector.shape_cast %29 : vector<8x32x32xf32> to vector<256x32xf32>
    %31 = arith.truncf %30 : vector<256x32xf32> to vector<256x32xbf16>
    %c4_26 = arith.constant 4 : index
    %c0_27 = arith.constant 0 : index
    %c0_28 = arith.constant 0 : index
    %32 = vector.load %arg2[%c4_26, %c0_27, %c0_28] : memref<5x32x168xbf16, #tpu.memory_space<vmem>>, vector<1x32x168xbf16>
    %33 = vector.shape_cast %32 : vector<1x32x168xbf16> to vector<32x168xbf16>
    %cst_29 = arith.constant dense<0.000000e+00> : vector<256x168xf32>
    %34 = tpu.matmul %31, %33, %cst_29 {dimension_numbers = #tpu.dot_dimension_numbers<[1], [0], [0], [1], [0, 0, 1, 1], [], []>} : vector<256x32xbf16>, vector<32x168xbf16>, vector<256x168xf32> -> vector<256x168xf32>
    %35 = arith.addf %28, %34 : vector<256x168xf32>
    %c0_30 = arith.constant 0 : index
    %c0_31 = arith.constant 0 : index
    %36 = vector.load %arg3[%c0_30, %c0_31] : memref<1x168xf32, #tpu.memory_space<vmem>>, vector<1x168xf32>
    %37 = vector.broadcast %36 : vector<1x168xf32> to vector<256x168xf32>
    %38 = arith.addf %35, %37 : vector<256x168xf32>
    %cst_32 = arith.constant 0.000000e+00 : f32
    %39 = vector.broadcast %cst_32 : f32 to vector<256x168xf32>
    %40 = arith.maximumf %38, %39 : vector<256x168xf32>
    %41 = arith.truncf %40 : vector<256x168xf32> to vector<256x168xbf16>
    %cst_33 = arith.constant 0.000000e+00 : f32
    %42 = vector.broadcast %cst_33 : f32 to vector<128x160xf32>
    %c0_34 = arith.constant 0 : index
    %c0_35 = arith.constant 0 : index
    %c0_36 = arith.constant 0 : index
    %43 = vector.load %arg4[%c0_34, %c0_35, %c0_36] : memref<5x128x256xbf16, #tpu.memory_space<vmem>>, vector<1x128x256xbf16>
    %44 = vector.shape_cast %43 : vector<1x128x256xbf16> to vector<128x256xbf16>
    %cst_37 = arith.constant dense<0.000000e+00> : vector<128x168xf32>
    %45 = tpu.matmul %44, %41, %cst_37 {dimension_numbers = #tpu.dot_dimension_numbers<[1], [0], [0], [1], [0, 0, 1, 1], [], []>} : vector<128x256xbf16>, vector<256x168xbf16>, vector<128x168xf32> -> vector<128x168xf32>
    %46 = arith.truncf %45 : vector<128x168xf32> to vector<128x168xbf16>
    %c0_38 = arith.constant 0 : index
    %c0_39 = arith.constant 0 : index
    %c0_40 = arith.constant 0 : index
    %47 = vector.load %arg5[%c0_38, %c0_39, %c0_40] : memref<5x168x160xbf16, #tpu.memory_space<vmem>>, vector<1x168x160xbf16>
    %48 = vector.shape_cast %47 : vector<1x168x160xbf16> to vector<168x160xbf16>
    %cst_41 = arith.constant dense<0.000000e+00> : vector<128x160xf32>
    %49 = tpu.matmul %46, %48, %cst_41 {dimension_numbers = #tpu.dot_dimension_numbers<[1], [0], [0], [1], [0, 0, 1, 1], [], []>} : vector<128x168xbf16>, vector<168x160xbf16>, vector<128x160xf32> -> vector<128x160xf32>
    %50 = arith.addf %42, %49 : vector<128x160xf32>
    %c1_42 = arith.constant 1 : index
    %c0_43 = arith.constant 0 : index
    %c0_44 = arith.constant 0 : index
    %51 = vector.load %arg4[%c1_42, %c0_43, %c0_44] : memref<5x128x256xbf16, #tpu.memory_space<vmem>>, vector<1x128x256xbf16>
    %52 = vector.shape_cast %51 : vector<1x128x256xbf16> to vector<128x256xbf16>
    %cst_45 = arith.constant dense<0.000000e+00> : vector<128x168xf32>
    %53 = tpu.matmul %52, %41, %cst_45 {dimension_numbers = #tpu.dot_dimension_numbers<[1], [0], [0], [1], [0, 0, 1, 1], [], []>} : vector<128x256xbf16>, vector<256x168xbf16>, vector<128x168xf32> -> vector<128x168xf32>
    %54 = arith.truncf %53 : vector<128x168xf32> to vector<128x168xbf16>
    %c1_46 = arith.constant 1 : index
    %c0_47 = arith.constant 0 : index
    %c0_48 = arith.constant 0 : index
    %55 = vector.load %arg5[%c1_46, %c0_47, %c0_48] : memref<5x168x160xbf16, #tpu.memory_space<vmem>>, vector<1x168x160xbf16>
    %56 = vector.shape_cast %55 : vector<1x168x160xbf16> to vector<168x160xbf16>
    %cst_49 = arith.constant dense<0.000000e+00> : vector<128x160xf32>
    %57 = tpu.matmul %54, %56, %cst_49 {dimension_numbers = #tpu.dot_dimension_numbers<[1], [0], [0], [1], [0, 0, 1, 1], [], []>} : vector<128x168xbf16>, vector<168x160xbf16>, vector<128x160xf32> -> vector<128x160xf32>
    %58 = arith.addf %50, %57 : vector<128x160xf32>
    %c2_50 = arith.constant 2 : index
    %c0_51 = arith.constant 0 : index
    %c0_52 = arith.constant 0 : index
    %59 = vector.load %arg4[%c2_50, %c0_51, %c0_52] : memref<5x128x256xbf16, #tpu.memory_space<vmem>>, vector<1x128x256xbf16>
    %60 = vector.shape_cast %59 : vector<1x128x256xbf16> to vector<128x256xbf16>
    %cst_53 = arith.constant dense<0.000000e+00> : vector<128x168xf32>
    %61 = tpu.matmul %60, %41, %cst_53 {dimension_numbers = #tpu.dot_dimension_numbers<[1], [0], [0], [1], [0, 0, 1, 1], [], []>} : vector<128x256xbf16>, vector<256x168xbf16>, vector<128x168xf32> -> vector<128x168xf32>
    %62 = arith.truncf %61 : vector<128x168xf32> to vector<128x168xbf16>
    %c2_54 = arith.constant 2 : index
    %c0_55 = arith.constant 0 : index
    %c0_56 = arith.constant 0 : index
    %63 = vector.load %arg5[%c2_54, %c0_55, %c0_56] : memref<5x168x160xbf16, #tpu.memory_space<vmem>>, vector<1x168x160xbf16>
    %64 = vector.shape_cast %63 : vector<1x168x160xbf16> to vector<168x160xbf16>
    %cst_57 = arith.constant dense<0.000000e+00> : vector<128x160xf32>
    %65 = tpu.matmul %62, %64, %cst_57 {dimension_numbers = #tpu.dot_dimension_numbers<[1], [0], [0], [1], [0, 0, 1, 1], [], []>} : vector<128x168xbf16>, vector<168x160xbf16>, vector<128x160xf32> -> vector<128x160xf32>
    %66 = arith.addf %58, %65 : vector<128x160xf32>
    %c3_58 = arith.constant 3 : index
    %c0_59 = arith.constant 0 : index
    %c0_60 = arith.constant 0 : index
    %67 = vector.load %arg4[%c3_58, %c0_59, %c0_60] : memref<5x128x256xbf16, #tpu.memory_space<vmem>>, vector<1x128x256xbf16>
    %68 = vector.shape_cast %67 : vector<1x128x256xbf16> to vector<128x256xbf16>
    %cst_61 = arith.constant dense<0.000000e+00> : vector<128x168xf32>
    %69 = tpu.matmul %68, %41, %cst_61 {dimension_numbers = #tpu.dot_dimension_numbers<[1], [0], [0], [1], [0, 0, 1, 1], [], []>} : vector<128x256xbf16>, vector<256x168xbf16>, vector<128x168xf32> -> vector<128x168xf32>
    %70 = arith.truncf %69 : vector<128x168xf32> to vector<128x168xbf16>
    %c3_62 = arith.constant 3 : index
    %c0_63 = arith.constant 0 : index
    %c0_64 = arith.constant 0 : index
    %71 = vector.load %arg5[%c3_62, %c0_63, %c0_64] : memref<5x168x160xbf16, #tpu.memory_space<vmem>>, vector<1x168x160xbf16>
    %72 = vector.shape_cast %71 : vector<1x168x160xbf16> to vector<168x160xbf16>
    %cst_65 = arith.constant dense<0.000000e+00> : vector<128x160xf32>
    %73 = tpu.matmul %70, %72, %cst_65 {dimension_numbers = #tpu.dot_dimension_numbers<[1], [0], [0], [1], [0, 0, 1, 1], [], []>} : vector<128x168xbf16>, vector<168x160xbf16>, vector<128x160xf32> -> vector<128x160xf32>
    %74 = arith.addf %66, %73 : vector<128x160xf32>
    %c4_66 = arith.constant 4 : index
    %c0_67 = arith.constant 0 : index
    %c0_68 = arith.constant 0 : index
    %75 = vector.load %arg4[%c4_66, %c0_67, %c0_68] : memref<5x128x256xbf16, #tpu.memory_space<vmem>>, vector<1x128x256xbf16>
    %76 = vector.shape_cast %75 : vector<1x128x256xbf16> to vector<128x256xbf16>
    %cst_69 = arith.constant dense<0.000000e+00> : vector<128x168xf32>
    %77 = tpu.matmul %76, %41, %cst_69 {dimension_numbers = #tpu.dot_dimension_numbers<[1], [0], [0], [1], [0, 0, 1, 1], [], []>} : vector<128x256xbf16>, vector<256x168xbf16>, vector<128x168xf32> -> vector<128x168xf32>
    %78 = arith.truncf %77 : vector<128x168xf32> to vector<128x168xbf16>
    %c4_70 = arith.constant 4 : index
    %c0_71 = arith.constant 0 : index
    %c0_72 = arith.constant 0 : index
    %79 = vector.load %arg5[%c4_70, %c0_71, %c0_72] : memref<5x168x160xbf16, #tpu.memory_space<vmem>>, vector<1x168x160xbf16>
    %80 = vector.shape_cast %79 : vector<1x168x160xbf16> to vector<168x160xbf16>
    %cst_73 = arith.constant dense<0.000000e+00> : vector<128x160xf32>
    %81 = tpu.matmul %78, %80, %cst_73 {dimension_numbers = #tpu.dot_dimension_numbers<[1], [0], [0], [1], [0, 0, 1, 1], [], []>} : vector<128x168xbf16>, vector<168x160xbf16>, vector<128x160xf32> -> vector<128x160xf32>
    %82 = arith.addf %74, %81 : vector<128x160xf32>
    %c0_74 = arith.constant 0 : index
    %c0_75 = arith.constant 0 : index
    %83 = vector.load %arg6[%c0_74, %c0_75] : memref<1x160xf32, #tpu.memory_space<vmem>>, vector<1x160xf32>
    %84 = vector.broadcast %83 : vector<1x160xf32> to vector<128x160xf32>
    %85 = arith.addf %82, %84 : vector<128x160xf32>
    %cst_76 = arith.constant 0.000000e+00 : f32
    %86 = vector.broadcast %cst_76 : f32 to vector<128x160xf32>
    %87 = arith.maximumf %85, %86 : vector<128x160xf32>
    %88 = arith.truncf %87 : vector<128x160xf32> to vector<128x160xbf16>
    %cst_77 = arith.constant 0.000000e+00 : f32
    %89 = vector.broadcast %cst_77 : f32 to vector<8x120xf32>
    %c0_78 = arith.constant 0 : index
    %c0_79 = arith.constant 0 : index
    %c0_80 = arith.constant 0 : index
    %90 = vector.load %arg7[%c0_78, %c0_79, %c0_80] : memref<5x8x128xbf16, #tpu.memory_space<vmem>>, vector<1x8x128xbf16>
    %91 = vector.shape_cast %90 : vector<1x8x128xbf16> to vector<8x128xbf16>
    %cst_81 = arith.constant dense<0.000000e+00> : vector<8x160xf32>
    %92 = tpu.matmul %91, %88, %cst_81 {dimension_numbers = #tpu.dot_dimension_numbers<[1], [0], [0], [1], [0, 0, 1, 1], [], []>} : vector<8x128xbf16>, vector<128x160xbf16>, vector<8x160xf32> -> vector<8x160xf32>
    %93 = arith.truncf %92 : vector<8x160xf32> to vector<8x160xbf16>
    %c0_82 = arith.constant 0 : index
    %c0_83 = arith.constant 0 : index
    %c0_84 = arith.constant 0 : index
    %94 = vector.load %arg8[%c0_82, %c0_83, %c0_84] : memref<5x160x120xbf16, #tpu.memory_space<vmem>>, vector<1x160x120xbf16>
    %95 = vector.shape_cast %94 : vector<1x160x120xbf16> to vector<160x120xbf16>
    %cst_85 = arith.constant dense<0.000000e+00> : vector<8x120xf32>
    %96 = tpu.matmul %93, %95, %cst_85 {dimension_numbers = #tpu.dot_dimension_numbers<[1], [0], [0], [1], [0, 0, 1, 1], [], []>} : vector<8x160xbf16>, vector<160x120xbf16>, vector<8x120xf32> -> vector<8x120xf32>
    %97 = arith.addf %89, %96 : vector<8x120xf32>
    %c1_86 = arith.constant 1 : index
    %c0_87 = arith.constant 0 : index
    %c0_88 = arith.constant 0 : index
    %98 = vector.load %arg7[%c1_86, %c0_87, %c0_88] : memref<5x8x128xbf16, #tpu.memory_space<vmem>>, vector<1x8x128xbf16>
    %99 = vector.shape_cast %98 : vector<1x8x128xbf16> to vector<8x128xbf16>
    %cst_89 = arith.constant dense<0.000000e+00> : vector<8x160xf32>
    %100 = tpu.matmul %99, %88, %cst_89 {dimension_numbers = #tpu.dot_dimension_numbers<[1], [0], [0], [1], [0, 0, 1, 1], [], []>} : vector<8x128xbf16>, vector<128x160xbf16>, vector<8x160xf32> -> vector<8x160xf32>
    %101 = arith.truncf %100 : vector<8x160xf32> to vector<8x160xbf16>
    %c1_90 = arith.constant 1 : index
    %c0_91 = arith.constant 0 : index
    %c0_92 = arith.constant 0 : index
    %102 = vector.load %arg8[%c1_90, %c0_91, %c0_92] : memref<5x160x120xbf16, #tpu.memory_space<vmem>>, vector<1x160x120xbf16>
    %103 = vector.shape_cast %102 : vector<1x160x120xbf16> to vector<160x120xbf16>
    %cst_93 = arith.constant dense<0.000000e+00> : vector<8x120xf32>
    %104 = tpu.matmul %101, %103, %cst_93 {dimension_numbers = #tpu.dot_dimension_numbers<[1], [0], [0], [1], [0, 0, 1, 1], [], []>} : vector<8x160xbf16>, vector<160x120xbf16>, vector<8x120xf32> -> vector<8x120xf32>
    %105 = arith.addf %97, %104 : vector<8x120xf32>
    %c2_94 = arith.constant 2 : index
    %c0_95 = arith.constant 0 : index
    %c0_96 = arith.constant 0 : index
    %106 = vector.load %arg7[%c2_94, %c0_95, %c0_96] : memref<5x8x128xbf16, #tpu.memory_space<vmem>>, vector<1x8x128xbf16>
    %107 = vector.shape_cast %106 : vector<1x8x128xbf16> to vector<8x128xbf16>
    %cst_97 = arith.constant dense<0.000000e+00> : vector<8x160xf32>
    %108 = tpu.matmul %107, %88, %cst_97 {dimension_numbers = #tpu.dot_dimension_numbers<[1], [0], [0], [1], [0, 0, 1, 1], [], []>} : vector<8x128xbf16>, vector<128x160xbf16>, vector<8x160xf32> -> vector<8x160xf32>
    %109 = arith.truncf %108 : vector<8x160xf32> to vector<8x160xbf16>
    %c2_98 = arith.constant 2 : index
    %c0_99 = arith.constant 0 : index
    %c0_100 = arith.constant 0 : index
    %110 = vector.load %arg8[%c2_98, %c0_99, %c0_100] : memref<5x160x120xbf16, #tpu.memory_space<vmem>>, vector<1x160x120xbf16>
    %111 = vector.shape_cast %110 : vector<1x160x120xbf16> to vector<160x120xbf16>
    %cst_101 = arith.constant dense<0.000000e+00> : vector<8x120xf32>
    %112 = tpu.matmul %109, %111, %cst_101 {dimension_numbers = #tpu.dot_dimension_numbers<[1], [0], [0], [1], [0, 0, 1, 1], [], []>} : vector<8x160xbf16>, vector<160x120xbf16>, vector<8x120xf32> -> vector<8x120xf32>
    %113 = arith.addf %105, %112 : vector<8x120xf32>
    %c3_102 = arith.constant 3 : index
    %c0_103 = arith.constant 0 : index
    %c0_104 = arith.constant 0 : index
    %114 = vector.load %arg7[%c3_102, %c0_103, %c0_104] : memref<5x8x128xbf16, #tpu.memory_space<vmem>>, vector<1x8x128xbf16>
    %115 = vector.shape_cast %114 : vector<1x8x128xbf16> to vector<8x128xbf16>
    %cst_105 = arith.constant dense<0.000000e+00> : vector<8x160xf32>
    %116 = tpu.matmul %115, %88, %cst_105 {dimension_numbers = #tpu.dot_dimension_numbers<[1], [0], [0], [1], [0, 0, 1, 1], [], []>} : vector<8x128xbf16>, vector<128x160xbf16>, vector<8x160xf32> -> vector<8x160xf32>
    %117 = arith.truncf %116 : vector<8x160xf32> to vector<8x160xbf16>
    %c3_106 = arith.constant 3 : index
    %c0_107 = arith.constant 0 : index
    %c0_108 = arith.constant 0 : index
    %118 = vector.load %arg8[%c3_106, %c0_107, %c0_108] : memref<5x160x120xbf16, #tpu.memory_space<vmem>>, vector<1x160x120xbf16>
    %119 = vector.shape_cast %118 : vector<1x160x120xbf16> to vector<160x120xbf16>
    %cst_109 = arith.constant dense<0.000000e+00> : vector<8x120xf32>
    %120 = tpu.matmul %117, %119, %cst_109 {dimension_numbers = #tpu.dot_dimension_numbers<[1], [0], [0], [1], [0, 0, 1, 1], [], []>} : vector<8x160xbf16>, vector<160x120xbf16>, vector<8x120xf32> -> vector<8x120xf32>
    %121 = arith.addf %113, %120 : vector<8x120xf32>
    %c4_110 = arith.constant 4 : index
    %c0_111 = arith.constant 0 : index
    %c0_112 = arith.constant 0 : index
    %122 = vector.load %arg7[%c4_110, %c0_111, %c0_112] : memref<5x8x128xbf16, #tpu.memory_space<vmem>>, vector<1x8x128xbf16>
    %123 = vector.shape_cast %122 : vector<1x8x128xbf16> to vector<8x128xbf16>
    %cst_113 = arith.constant dense<0.000000e+00> : vector<8x160xf32>
    %124 = tpu.matmul %123, %88, %cst_113 {dimension_numbers = #tpu.dot_dimension_numbers<[1], [0], [0], [1], [0, 0, 1, 1], [], []>} : vector<8x128xbf16>, vector<128x160xbf16>, vector<8x160xf32> -> vector<8x160xf32>
    %125 = arith.truncf %124 : vector<8x160xf32> to vector<8x160xbf16>
    %c4_114 = arith.constant 4 : index
    %c0_115 = arith.constant 0 : index
    %c0_116 = arith.constant 0 : index
    %126 = vector.load %arg8[%c4_114, %c0_115, %c0_116] : memref<5x160x120xbf16, #tpu.memory_space<vmem>>, vector<1x160x120xbf16>
    %127 = vector.shape_cast %126 : vector<1x160x120xbf16> to vector<160x120xbf16>
    %cst_117 = arith.constant dense<0.000000e+00> : vector<8x120xf32>
    %128 = tpu.matmul %125, %127, %cst_117 {dimension_numbers = #tpu.dot_dimension_numbers<[1], [0], [0], [1], [0, 0, 1, 1], [], []>} : vector<8x160xbf16>, vector<160x120xbf16>, vector<8x120xf32> -> vector<8x120xf32>
    %129 = arith.addf %121, %128 : vector<8x120xf32>
    %c0_118 = arith.constant 0 : index
    %c0_119 = arith.constant 0 : index
    %130 = vector.load %arg9[%c0_118, %c0_119] : memref<1x120xf32, #tpu.memory_space<vmem>>, vector<1x120xf32>
    %131 = vector.broadcast %130 : vector<1x120xf32> to vector<8x120xf32>
    %132 = arith.addf %129, %131 : vector<8x120xf32>
    %cst_120 = arith.constant 0.000000e+00 : f32
    %133 = vector.broadcast %cst_120 : f32 to vector<8x120xf32>
    %134 = arith.maximumf %132, %133 : vector<8x120xf32>
    %135 = arith.truncf %134 : vector<8x120xf32> to vector<8x120xbf16>
    %c0_121 = arith.constant 0 : index
    %c0_122 = arith.constant 0 : index
    %136 = vector.load %arg10[%c0_121, %c0_122] : memref<120x84xbf16, #tpu.memory_space<vmem>>, vector<120x84xbf16>
    %cst_123 = arith.constant dense<0.000000e+00> : vector<8x84xf32>
    %137 = tpu.matmul %135, %136, %cst_123 {dimension_numbers = #tpu.dot_dimension_numbers<[1], [0], [0], [1], [0, 0, 1, 1], [], []>} : vector<8x120xbf16>, vector<120x84xbf16>, vector<8x84xf32> -> vector<8x84xf32>
    %c0_124 = arith.constant 0 : index
    %c0_125 = arith.constant 0 : index
    %138 = vector.load %arg11[%c0_124, %c0_125] : memref<1x84xf32, #tpu.memory_space<vmem>>, vector<1x84xf32>
    %139 = vector.broadcast %138 : vector<1x84xf32> to vector<8x84xf32>
    %140 = arith.addf %137, %139 : vector<8x84xf32>
    %cst_126 = arith.constant 0.000000e+00 : f32
    %141 = vector.broadcast %cst_126 : f32 to vector<8x84xf32>
    %142 = arith.maximumf %140, %141 : vector<8x84xf32>
    %143 = arith.truncf %142 : vector<8x84xf32> to vector<8x84xbf16>
    %c0_127 = arith.constant 0 : index
    %c0_128 = arith.constant 0 : index
    %144 = vector.load %arg12[%c0_127, %c0_128] : memref<84x128xbf16, #tpu.memory_space<vmem>>, vector<84x128xbf16>
    %cst_129 = arith.constant dense<0.000000e+00> : vector<8x128xf32>
    %145 = tpu.matmul %143, %144, %cst_129 {dimension_numbers = #tpu.dot_dimension_numbers<[1], [0], [0], [1], [0, 0, 1, 1], [], []>} : vector<8x84xbf16>, vector<84x128xbf16>, vector<8x128xf32> -> vector<8x128xf32>
    %c0_130 = arith.constant 0 : index
    %c0_131 = arith.constant 0 : index
    %146 = vector.load %arg13[%c0_130, %c0_131] : memref<1x128xf32, #tpu.memory_space<vmem>>, vector<1x128xf32>
    %147 = vector.broadcast %146 : vector<1x128xf32> to vector<8x128xf32>
    %148 = arith.addf %145, %147 : vector<8x128xf32>
    %c0_132 = arith.constant 0 : index
    %c0_133 = arith.constant 0 : index
    %149 = vector.load %arg14[%c0_132, %c0_133] : memref<8x128xf32, #tpu.memory_space<vmem>>, vector<8x128xf32>
    tpu.vector_store %arg14[%c0_132, %c0_133], %148 {strides = array<i32>} : memref<8x128xf32, #tpu.memory_space<vmem>>, vector<8x128xf32>,
    return
  }
  func.func @transform_0(%arg0: i32) -> (i32, i32, i32) {
    %c0_i32 = arith.constant 0 : i32
    %c0_i32_0 = arith.constant 0 : i32
    %c0_i32_1 = arith.constant 0 : i32
    return %arg0, %c0_i32, %c0_i32_0 : i32, i32, i32
  }
  func.func @transform_1(%arg0: i32) -> (i32, i32, i32) {
    %c0_i32 = arith.constant 0 : i32
    %c0_i32_0 = arith.constant 0 : i32
    %c0_i32_1 = arith.constant 0 : i32
    %c0_i32_2 = arith.constant 0 : i32
    return %c0_i32, %c0_i32_0, %c0_i32_1 : i32, i32, i32
  }
  func.func @transform_2(%arg0: i32) -> (i32, i32) {
    %c0_i32 = arith.constant 0 : i32
    %c0_i32_0 = arith.constant 0 : i32
    %c0_i32_1 = arith.constant 0 : i32
    return %c0_i32, %c0_i32_0 : i32, i32
  }
  func.func @transform_3(%arg0: i32) -> (i32, i32, i32) {
    %c0_i32 = arith.constant 0 : i32
    %c0_i32_0 = arith.constant 0 : i32
    %c0_i32_1 = arith.constant 0 : i32
    %c0_i32_2 = arith.constant 0 : i32
    return %c0_i32, %c0_i32_0, %c0_i32_1 : i32, i32, i32
  }
  func.func @transform_4(%arg0: i32) -> (i32, i32, i32) {
    %c0_i32 = arith.constant 0 : i32
    %c0_i32_0 = arith.constant 0 : i32
    %c0_i32_1 = arith.constant 0 : i32
    %c0_i32_2 = arith.constant 0 : i32
    return %c0_i32, %c0_i32_0, %c0_i32_1 : i32, i32, i32
  }
  func.func @transform_5(%arg0: i32) -> (i32, i32) {
    %c0_i32 = arith.constant 0 : i32
    %c0_i32_0 = arith.constant 0 : i32
    %c0_i32_1 = arith.constant 0 : i32
    return %c0_i32, %c0_i32_0 : i32, i32
  }
  func.func @transform_6(%arg0: i32) -> (i32, i32, i32) {
    %c0_i32 = arith.constant 0 : i32
    %c0_i32_0 = arith.constant 0 : i32
    %c0_i32_1 = arith.constant 0 : i32
    %c0_i32_2 = arith.constant 0 : i32
    return %c0_i32, %c0_i32_0, %c0_i32_1 : i32, i32, i32
  }
  func.func @transform_7(%arg0: i32) -> (i32, i32, i32) {
    %c0_i32 = arith.constant 0 : i32
    %c0_i32_0 = arith.constant 0 : i32
    %c0_i32_1 = arith.constant 0 : i32
    %c0_i32_2 = arith.constant 0 : i32
    return %c0_i32, %c0_i32_0, %c0_i32_1 : i32, i32, i32
  }
  func.func @transform_8(%arg0: i32) -> (i32, i32) {
    %c0_i32 = arith.constant 0 : i32
    %c0_i32_0 = arith.constant 0 : i32
    %c0_i32_1 = arith.constant 0 : i32
    return %c0_i32, %c0_i32_0 : i32, i32
  }
  func.func @transform_9(%arg0: i32) -> (i32, i32) {
    %c0_i32 = arith.constant 0 : i32
    %c0_i32_0 = arith.constant 0 : i32
    %c0_i32_1 = arith.constant 0 : i32
    return %c0_i32, %c0_i32_0 : i32, i32
  }
  func.func @transform_10(%arg0: i32) -> (i32, i32) {
    %c0_i32 = arith.constant 0 : i32
    %c0_i32_0 = arith.constant 0 : i32
    %c0_i32_1 = arith.constant 0 : i32
    return %c0_i32, %c0_i32_0 : i32, i32
  }
  func.func @transform_11(%arg0: i32) -> (i32, i32) {
    %c0_i32 = arith.constant 0 : i32
    %c0_i32_0 = arith.constant 0 : i32
    %c0_i32_1 = arith.constant 0 : i32
    return %c0_i32, %c0_i32_0 : i32, i32
  }
  func.func @transform_12(%arg0: i32) -> (i32, i32) {
    %c0_i32 = arith.constant 0 : i32
    %c0_i32_0 = arith.constant 0 : i32
    %c0_i32_1 = arith.constant 0 : i32
    return %c0_i32, %c0_i32_0 : i32, i32
  }
  func.func @transform_13(%arg0: i32) -> (i32, i32) {
    %c0_i32 = arith.constant 0 : i32
    %c0_i32_0 = arith.constant 0 : i32
    return %arg0, %c0_i32 : i32, i32
  }
}

</mosaic_0001>

<llo_original>
// kernel: lenet5_forward.1
$region0: #{lenet5_forward.1}
  #allocation0 [shape = 'u32[]', space=smem, size = 0x4, offset = 0x4, fixed_abs, tag = 'smem constant byte address 0x4 - core index']
  #allocation1 [shape = 'u32[144,128]{1,0:T(1,128)}', space=vmem, size = 0x12000, scoped, tag = 'internal scratch']
  %s0 = inlined_call_operand.vmem [shape: f32[8,40,32], index: 0, kind: input, shape index: {}]
  %s1 = inlined_call_operand.vmem [shape: bf16[5,32,168], index: 1, kind: input, shape index: {}]
  %s2 = inlined_call_operand.vmem [shape: f32[1,168], index: 2, kind: input, shape index: {}]
  %s3 = inlined_call_operand.vmem [shape: bf16[5,128,256], index: 3, kind: input, shape index: {}]
  %s4 = inlined_call_operand.vmem [shape: bf16[5,168,160], index: 4, kind: input, shape index: {}]
  %s5 = inlined_call_operand.vmem [shape: f32[1,160], index: 5, kind: input, shape index: {}]
  %s6 = inlined_call_operand.vmem [shape: bf16[5,8,128], index: 6, kind: input, shape index: {}]
  %s7 = inlined_call_operand.vmem [shape: bf16[5,160,120], index: 7, kind: input, shape index: {}]
  %s8 = inlined_call_operand.vmem [shape: f32[1,120], index: 8, kind: input, shape index: {}]
  %s9 = inlined_call_operand.vmem [shape: bf16[120,84], index: 9, kind: input, shape index: {}]
  %s10 = inlined_call_operand.vmem [shape: f32[1,84], index: 10, kind: input, shape index: {}]
  %s11 = inlined_call_operand.vmem [shape: bf16[84,128], index: 11, kind: input, shape index: {}]
  %s12 = inlined_call_operand.vmem [shape: f32[1,128], index: 12, kind: input, shape index: {}]
  %s13 = inlined_call_operand.vmem [shape: f32[8,128], index: 13, kind: output, shape index: {}]
  %s14 = sld [smem:[#allocation0]]
  $region62: #{lenet5_forward.1} parent=0
    _
  %s16 = ssub.s32 1, %s14
  %s17 = scalar_select 0, %s16, %s14
  // Predicated region
  $region2: #{lenet5_forward.1} parent=0 // pred_check
    _
  $region3: #{lenet5_forward.1} parent=0 // pred_check_branch
    %19 = sbr.rel (0) target = $region5
  $region4: #{lenet5_forward.1} parent=0 // pred_region
    _
  $region5: #{lenet5_forward.1} parent=0 // pred_fallthru
    _
  // Predicated region
  $region6: #{lenet5_forward.1} parent=0 // pred_check
    _
  $region7: #{lenet5_forward.1} parent=0 // pred_check_branch
    %21 = sbr.rel (0) target = $region9
  $region8: #{lenet5_forward.1} parent=0 // pred_region
    _
  $region9: #{lenet5_forward.1} parent=0 // pred_fallthru
    _
  // Predicated region
  $region10: #{lenet5_forward.1} parent=0 // pred_check
    _
  $region11: #{lenet5_forward.1} parent=0 // pred_check_branch
    %23 = sbr.rel (0) target = $region13
  $region12: #{lenet5_forward.1} parent=0 // pred_region
    _
  $region13: #{lenet5_forward.1} parent=0 // pred_fallthru
    _
  // Predicated region
  $region14: #{lenet5_forward.1} parent=0 // pred_check
    _
  $region15: #{lenet5_forward.1} parent=0 // pred_check_branch
    %25 = sbr.rel (0) target = $region17
  $region16: #{lenet5_forward.1} parent=0 // pred_region
    _
  $region17: #{lenet5_forward.1} parent=0 // pred_fallthru
    _
  // Predicated region
  $region18: #{lenet5_forward.1} parent=0 // pred_check
    _
  $region19: #{lenet5_forward.1} parent=0 // pred_check_branch
    %27 = sbr.rel (0) target = $region21
  $region20: #{lenet5_forward.1} parent=0 // pred_region
    _
  $region21: #{lenet5_forward.1} parent=0 // pred_fallthru
    _
  // Predicated region
  $region22: #{lenet5_forward.1} parent=0 // pred_check
    _
  $region23: #{lenet5_forward.1} parent=0 // pred_check_branch
    %29 = sbr.rel (0) target = $region25
  $region24: #{lenet5_forward.1} parent=0 // pred_region
    _
  $region25: #{lenet5_forward.1} parent=0 // pred_fallthru
    _
  // Predicated region
  $region26: #{lenet5_forward.1} parent=0 // pred_check
    _
  $region27: #{lenet5_forward.1} parent=0 // pred_check_branch
    %31 = sbr.rel (0) target = $region29
  $region28: #{lenet5_forward.1} parent=0 // pred_region
    _
  $region29: #{lenet5_forward.1} parent=0 // pred_fallthru
    _
  // Predicated region
  $region30: #{lenet5_forward.1} parent=0 // pred_check
    _
  $region31: #{lenet5_forward.1} parent=0 // pred_check_branch
    %33 = sbr.rel (0) target = $region33
  $region32: #{lenet5_forward.1} parent=0 // pred_region
    _
  $region33: #{lenet5_forward.1} parent=0 // pred_fallthru
    _
  // Predicated region
  $region34: #{lenet5_forward.1} parent=0 // pred_check
    _
  $region35: #{lenet5_forward.1} parent=0 // pred_check_branch
    %35 = sbr.rel (0) target = $region37
  $region36: #{lenet5_forward.1} parent=0 // pred_region
    _
  $region37: #{lenet5_forward.1} parent=0 // pred_fallthru
    _
  // Predicated region
  $region38: #{lenet5_forward.1} parent=0 // pred_check
    _
  $region39: #{lenet5_forward.1} parent=0 // pred_check_branch
    %37 = sbr.rel (0) target = $region41
  $region40: #{lenet5_forward.1} parent=0 // pred_region
    _
  $region41: #{lenet5_forward.1} parent=0 // pred_fallthru
    _
  // Predicated region
  $region42: #{lenet5_forward.1} parent=0 // pred_check
    _
  $region43: #{lenet5_forward.1} parent=0 // pred_check_branch
    %39 = sbr.rel (0) target = $region45
  $region44: #{lenet5_forward.1} parent=0 // pred_region
    _
  $region45: #{lenet5_forward.1} parent=0 // pred_fallthru
    _
  // Predicated region
  $region46: #{lenet5_forward.1} parent=0 // pred_check
    _
  $region47: #{lenet5_forward.1} parent=0 // pred_check_branch
    %41 = sbr.rel (0) target = $region49
  $region48: #{lenet5_forward.1} parent=0 // pred_region
    _
  $region49: #{lenet5_forward.1} parent=0 // pred_fallthru
    _
  // Predicated region
  $region50: #{lenet5_forward.1} parent=0 // pred_check
    _
  $region51: #{lenet5_forward.1} parent=0 // pred_check_branch
    %43 = sbr.rel (0) target = $region53
  $region52: #{lenet5_forward.1} parent=0 // pred_region
    _
  $region53: #{lenet5_forward.1} parent=0 // pred_fallthru
    _
  %v45 = vld [vmem:[%s0] sm:$0xff]
  %v46 = vld [vmem:[%s0 + $0x8] sm:$0xff]
  %v47 = vld [vmem:[%s0 + $0x10] sm:$0xff]
  %v48 = vld [vmem:[%s0 + $0x18] sm:$0xff]
  %v49 = vld [vmem:[%s0 + $0x28] sm:$0xff]
  %v50 = vld [vmem:[%s0 + $0x30] sm:$0xff]
  %v51 = vld [vmem:[%s0 + $0x38] sm:$0xff]
  %v52 = vld [vmem:[%s0 + $0x40] sm:$0xff]
  %v53 = vld [vmem:[%s0 + $0x50] sm:$0xff]
  %v54 = vld [vmem:[%s0 + $0x58] sm:$0xff]
  %v55 = vld [vmem:[%s0 + $0x60] sm:$0xff]
  %v56 = vld [vmem:[%s0 + $0x68] sm:$0xff]
  %v57 = vld [vmem:[%s0 + $0x78] sm:$0xff]
  %v58 = vld [vmem:[%s0 + $0x80] sm:$0xff]
  %v59 = vld [vmem:[%s0 + $0x88] sm:$0xff]
  %v60 = vld [vmem:[%s0 + $0x90] sm:$0xff]
  %v61 = vld [vmem:[%s0 + $0xa0] sm:$0xff]
  %v62 = vld [vmem:[%s0 + $0xa8] sm:$0xff]
  %v63 = vld [vmem:[%s0 + $0xb0] sm:$0xff]
  %v64 = vld [vmem:[%s0 + $0xb8] sm:$0xff]
  %v65 = vld [vmem:[%s0 + $0xc8] sm:$0xff]
  %v66 = vld [vmem:[%s0 + $0xd0] sm:$0xff]
  %v67 = vld [vmem:[%s0 + $0xd8] sm:$0xff]
  %v68 = vld [vmem:[%s0 + $0xe0] sm:$0xff]
  %v69 = vld [vmem:[%s0 + $0xf0] sm:$0xff]
  %v70 = vld [vmem:[%s0 + $0xf8] sm:$0xff]
  %v71 = vld [vmem:[%s0 + $0x100] sm:$0xff]
  %v72 = vld [vmem:[%s0 + $0x108] sm:$0xff]
  %v73 = vld [vmem:[%s0 + $0x118] sm:$0xff]
  %v74 = vld [vmem:[%s0 + $0x120] sm:$0xff]
  %v75 = vld [vmem:[%s0 + $0x128] sm:$0xff]
  %v76 = vld [vmem:[%s0 + $0x130] sm:$0xff]
  %v77 = vpack.c.bf16 %v46, %v45
  %v78 = vpack.c.bf16 %v48, %v47
  %v79 = vpack.c.bf16 %v50, %v49
  %v80 = vpack.c.bf16 %v52, %v51
  %v81 = vpack.c.bf16 %v54, %v53
  %v82 = vpack.c.bf16 %v56, %v55
  %v83 = vpack.c.bf16 %v58, %v57
  %v84 = vpack.c.bf16 %v60, %v59
  %v85 = vpack.c.bf16 %v62, %v61
  %v86 = vpack.c.bf16 %v64, %v63
  %v87 = vpack.c.bf16 %v66, %v65
  %v88 = vpack.c.bf16 %v68, %v67
  %v89 = vpack.c.bf16 %v70, %v69
  %v90 = vpack.c.bf16 %v72, %v71
  %v91 = vpack.c.bf16 %v74, %v73
  %v92 = vpack.c.bf16 %v76, %v75
  %v93 = vld [vmem:[%s1] sm:$0xff]
  %v94 = vld [vmem:[%s1 + $0x8] sm:$0xff]
  %v95 = vld [vmem:[%s1 + $0x10] sm:$0xff]
  %v96 = vld [vmem:[%s1 + $0x18] sm:$0xff]
  %v97 = vld [vmem:[%s0 + $0x1] sm:$0xff]
  %v98 = vld [vmem:[%s0 + $0x9] sm:$0xff]
  %v99 = vld [vmem:[%s0 + $0x11] sm:$0xff]
  %v100 = vld [vmem:[%s0 + $0x19] sm:$0xff]
  %v101 = vld [vmem:[%s0 + $0x29] sm:$0xff]
  %v102 = vld [vmem:[%s0 + $0x31] sm:$0xff]
  %v103 = vld [vmem:[%s0 + $0x39] sm:$0xff]
  %v104 = vld [vmem:[%s0 + $0x41] sm:$0xff]
  %v105 = vld [vmem:[%s0 + $0x51] sm:$0xff]
  %v106 = vld [vmem:[%s0 + $0x59] sm:$0xff]
  %v107 = vld [vmem:[%s0 + $0x61] sm:$0xff]
  %v108 = vld [vmem:[%s0 + $0x69] sm:$0xff]
  %v109 = vld [vmem:[%s0 + $0x79] sm:$0xff]
  %v110 = vld [vmem:[%s0 + $0x81] sm:$0xff]
  %v111 = vld [vmem:[%s0 + $0x89] sm:$0xff]
  %v112 = vld [vmem:[%s0 + $0x91] sm:$0xff]
  %v113 = vld [vmem:[%s0 + $0xa1] sm:$0xff]
  %v114 = vld [vmem:[%s0 + $0xa9] sm:$0xff]
  %v115 = vld [vmem:[%s0 + $0xb1] sm:$0xff]
  %v116 = vld [vmem:[%s0 + $0xb9] sm:$0xff]
  %v117 = vld [vmem:[%s0 + $0xc9] sm:$0xff]
  %v118 = vld [vmem:[%s0 + $0xd1] sm:$0xff]
  %v119 = vld [vmem:[%s0 + $0xd9] sm:$0xff]
  %v120 = vld [vmem:[%s0 + $0xe1] sm:$0xff]
  %v121 = vld [vmem:[%s0 + $0xf1] sm:$0xff]
  %v122 = vld [vmem:[%s0 + $0xf9] sm:$0xff]
  %v123 = vld [vmem:[%s0 + $0x101] sm:$0xff]
  %v124 = vld [vmem:[%s0 + $0x109] sm:$0xff]
  %v125 = vld [vmem:[%s0 + $0x119] sm:$0xff]
  %v126 = vld [vmem:[%s0 + $0x121] sm:$0xff]
  %v127 = vld [vmem:[%s0 + $0x129] sm:$0xff]
  %v128 = vld [vmem:[%s0 + $0x131] sm:$0xff]
  %v129 = vpack.c.bf16 %v98, %v97
  %v130 = vpack.c.bf16 %v100, %v99
  %v131 = vpack.c.bf16 %v102, %v101
  %v132 = vpack.c.bf16 %v104, %v103
  %v133 = vpack.c.bf16 %v106, %v105
  %v134 = vpack.c.bf16 %v108, %v107
  %v135 = vpack.c.bf16 %v110, %v109
  %v136 = vpack.c.bf16 %v112, %v111
  %v137 = vpack.c.bf16 %v114, %v113
  %v138 = vpack.c.bf16 %v116, %v115
  %v139 = vpack.c.bf16 %v118, %v117
  %v140 = vpack.c.bf16 %v120, %v119
  %v141 = vpack.c.bf16 %v122, %v121
  %v142 = vpack.c.bf16 %v124, %v123
  %v143 = vpack.c.bf16 %v126, %v125
  %v144 = vpack.c.bf16 %v128, %v127
  %s145 = scalar_lea.vmem %s1, 32
  %v146 = vld [vmem:[%s145] sm:$0xff]
  %v147 = vld [vmem:[%s145 + $0x8] sm:$0xff]
  %v148 = vld [vmem:[%s145 + $0x10] sm:$0xff]
  %v149 = vld [vmem:[%s145 + $0x18] sm:$0xff]
  %v154 = vunpack.c.l.b16 %v146
  %v155 = vunpack.c.h.b16 %v146
  %v156 = vunpack.c.l.b16 %v147
  %v157 = vunpack.c.h.b16 %v147
  %v158 = vunpack.c.l.b16 %v148
  %v159 = vunpack.c.h.b16 %v148
  %v160 = vunpack.c.l.b16 %v149
  %v161 = vunpack.c.h.b16 %v149
  %v162 = vpack.c.b16 %v156, %v154
  %v163 = vpack.c.b16 %v157, %v155
  %v164 = vpack.c.b16 %v160, %v158
  %v165 = vpack.c.b16 %v161, %v159
  %vm170 = vcmask 261120
  %v172 = vsel %vm170, %v129, 0
  %v175 = vsel %vm170, %v130, 0
  %v178 = vsel %vm170, %v131, 0
  %v181 = vsel %vm170, %v132, 0
  %v184 = vsel %vm170, %v133, 0
  %v187 = vsel %vm170, %v134, 0
  %v190 = vsel %vm170, %v135, 0
  %v193 = vsel %vm170, %v136, 0
  %v196 = vsel %vm170, %v137, 0
  %v199 = vsel %vm170, %v138, 0
  %v202 = vsel %vm170, %v139, 0
  %v205 = vsel %vm170, %v140, 0
  %v208 = vsel %vm170, %v141, 0
  %v211 = vsel %vm170, %v142, 0
  %v214 = vsel %vm170, %v143, 0
  %v217 = vsel %vm170, %v144, 0
  %219 = vmatprep.subr.bf16.mxu0 %v163
  %220 = vmatpush1.bf16.msra.mxu0 %v162
  %221 = vmatprep.subr.bf16.mxu0 %v165
  %222 = vmatpush1.bf16.msra.mxu0 %v164
  %223 = vmatprep.subr.bf16.mxu0 0
  %224 = vmatpush1.bf16.msra.mxu0 0
  %225 = vmatprep.subr.bf16.mxu0 0
  %226 = vmatpush1.bf16.msra.mxu0 0
  %227 = vmatprep.subr.bf16.mxu0 0
  %228 = vmatpush1.bf16.msra.mxu0 0
  %229 = vmatprep.subr.bf16.mxu0 0
  %230 = vmatpush1.bf16.msra.mxu0 0
  %231 = vmatprep.subr.bf16.mxu0 0
  %232 = vmatpush1.bf16.msra.mxu0 0
  %233 = vmatprep.subr.bf16.mxu0 0
  %234 = vmatpush1.bf16.msra.mxu0 0
  %235 = vmatprep.subr.bf16.mxu0 0
  %236 = vmatpush1.bf16.msra.mxu0 0
  %237 = vmatprep.subr.bf16.mxu0 0
  %238 = vmatpush1.bf16.msra.mxu0 0
  %239 = vmatprep.subr.bf16.mxu0 0
  %240 = vmatpush1.bf16.msra.mxu0 0
  %241 = vmatprep.subr.bf16.mxu0 0
  %242 = vmatpush1.bf16.msra.mxu0 0
  %243 = vmatprep.subr.bf16.mxu0 0
  %244 = vmatpush1.bf16.msra.mxu0 0
  %245 = vmatprep.subr.bf16.mxu0 0
  %246 = vmatpush1.bf16.msra.mxu0 0
  %247 = vmatprep.subr.bf16.mxu0 0
  %248 = vmatpush1.bf16.msra.mxu0 0
  %249 = vmatprep.subr.bf16.mxu0 0
  %250 = vmatpush1.bf16.msra.mxu0 0
  %251 = vmatprep.mubr.bf16.mxu0 0
  %252 = vmatmul.mubr.bf16.gmra.mrb[0].mxu0 %v172
  %v253 = vpop.f32.mrb[0].mxu0
  %v254 = vadd.f32 0.0, %v253
  %v255 = vpop.f32.mrb[0].mxu0
  %v256 = vadd.f32 0.0, %v255
  %v257 = vpop.f32.mrb[0].mxu0
  %v258 = vadd.f32 0.0, %v257
  %v259 = vpop.f32.mrb[0].mxu0
  %v260 = vadd.f32 0.0, %v259
  %261 = vmatprep.mubr.bf16.mxu0 0
  %262 = vmatmul.mubr.bf16.gmra.mrb[0].mxu0 %v175
  %v263 = vpop.f32.mrb[0].mxu0
  %v264 = vadd.f32 0.0, %v263
  %v265 = vpop.f32.mrb[0].mxu0
  %v266 = vadd.f32 0.0, %v265
  %v267 = vpop.f32.mrb[0].mxu0
  %v268 = vadd.f32 0.0, %v267
  %v269 = vpop.f32.mrb[0].mxu0
  %v270 = vadd.f32 0.0, %v269
  %271 = vmatprep.mubr.bf16.mxu0 0
  %272 = vmatmul.mubr.bf16.gmra.mrb[0].mxu0 %v178
  %v273 = vpop.f32.mrb[0].mxu0
  %v274 = vadd.f32 0.0, %v273
  %v275 = vpop.f32.mrb[0].mxu0
  %v276 = vadd.f32 0.0, %v275
  %v277 = vpop.f32.mrb[0].mxu0
  %v278 = vadd.f32 0.0, %v277
  %v279 = vpop.f32.mrb[0].mxu0
  %v280 = vadd.f32 0.0, %v279
  %281 = vmatprep.mubr.bf16.mxu0 0
  %282 = vmatmul.mubr.bf16.gmra.mrb[0].mxu0 %v181
  %v283 = vpop.f32.mrb[0].mxu0
  %v284 = vadd.f32 0.0, %v283
  %v285 = vpop.f32.mrb[0].mxu0
  %v286 = vadd.f32 0.0, %v285
  %v287 = vpop.f32.mrb[0].mxu0
  %v288 = vadd.f32 0.0, %v287
  %v289 = vpop.f32.mrb[0].mxu0
  %v290 = vadd.f32 0.0, %v289
  %291 = vmatprep.mubr.bf16.mxu0 0
  %292 = vmatmul.mubr.bf16.gmra.mrb[0].mxu0 %v184
  %v293 = vpop.f32.mrb[0].mxu0
  %v294 = vadd.f32 0.0, %v293
  %v295 = vpop.f32.mrb[0].mxu0
  %v296 = vadd.f32 0.0, %v295
  %v297 = vpop.f32.mrb[0].mxu0
  %v298 = vadd.f32 0.0, %v297
  %v299 = vpop.f32.mrb[0].mxu0
  %v300 = vadd.f32 0.0, %v299
  %301 = vmatprep.mubr.bf16.mxu0 0
  %302 = vmatmul.mubr.bf16.gmra.mrb[0].mxu0 %v187
  %v303 = vpop.f32.mrb[0].mxu0
  %v304 = vadd.f32 0.0, %v303
  %v305 = vpop.f32.mrb[0].mxu0
  %v306 = vadd.f32 0.0, %v305
  %v307 = vpop.f32.mrb[0].mxu0
  %v308 = vadd.f32 0.0, %v307
  %v309 = vpop.f32.mrb[0].mxu0
  %v310 = vadd.f32 0.0, %v309
  %311 = vmatprep.mubr.bf16.mxu0 0
  %312 = vmatmul.mubr.bf16.gmra.mrb[0].mxu0 %v190
  %v313 = vpop.f32.mrb[0].mxu0
  %v314 = vadd.f32 0.0, %v313
  %v315 = vpop.f32.mrb[0].mxu0
  %v316 = vadd.f32 0.0, %v315
  %v317 = vpop.f32.mrb[0].mxu0
  %v318 = vadd.f32 0.0, %v317
  %v319 = vpop.f32.mrb[0].mxu0
  %v320 = vadd.f32 0.0, %v319
  %321 = vmatprep.mubr.bf16.mxu0 0
  %322 = vmatmul.mubr.bf16.gmra.mrb[0].mxu0 %v193
  %v323 = vpop.f32.mrb[0].mxu0
  %v324 = vadd.f32 0.0, %v323
  %v325 = vpop.f32.mrb[0].mxu0
  %v326 = vadd.f32 0.0, %v325
  %v327 = vpop.f32.mrb[0].mxu0
  %v328 = vadd.f32 0.0, %v327
  %v329 = vpop.f32.mrb[0].mxu0
  %v330 = vadd.f32 0.0, %v329
  %331 = vmatprep.mubr.bf16.mxu0 0
  %332 = vmatmul.mubr.bf16.gmra.mrb[0].mxu0 %v196
  %v333 = vpop.f32.mrb[0].mxu0
  %v334 = vadd.f32 0.0, %v333
  %v335 = vpop.f32.mrb[0].mxu0
  %v336 = vadd.f32 0.0, %v335
  %v337 = vpop.f32.mrb[0].mxu0
  %v338 = vadd.f32 0.0, %v337
  %v339 = vpop.f32.mrb[0].mxu0
  %v340 = vadd.f32 0.0, %v339
  %341 = vmatprep.mubr.bf16.mxu0 0
  %342 = vmatmul.mubr.bf16.gmra.mrb[0].mxu0 %v199
  %v343 = vpop.f32.mrb[0].mxu0
  %v344 = vadd.f32 0.0, %v343
  %v345 = vpop.f32.mrb[0].mxu0
  %v346 = vadd.f32 0.0, %v345
  %v347 = vpop.f32.mrb[0].mxu0
  %v348 = vadd.f32 0.0, %v347
  %v349 = vpop.f32.mrb[0].mxu0
  %v350 = vadd.f32 0.0, %v349
  %351 = vmatprep.mubr.bf16.mxu0 0
  %352 = vmatmul.mubr.bf16.gmra.mrb[0].mxu0 %v202
  %v353 = vpop.f32.mrb[0].mxu0
  %v354 = vadd.f32 0.0, %v353
  %v355 = vpop.f32.mrb[0].mxu0
  %v356 = vadd.f32 0.0, %v355
  %v357 = vpop.f32.mrb[0].mxu0
  %v358 = vadd.f32 0.0, %v357
  %v359 = vpop.f32.mrb[0].mxu0
  %v360 = vadd.f32 0.0, %v359
  %361 = vmatprep.mubr.bf16.mxu0 0
  %362 = vmatmul.mubr.bf16.gmra.mrb[0].mxu0 %v205
  %v363 = vpop.f32.mrb[0].mxu0
  %v364 = vadd.f32 0.0, %v363
  %v365 = vpop.f32.mrb[0].mxu0
  %v366 = vadd.f32 0.0, %v365
  %v367 = vpop.f32.mrb[0].mxu0
  %v368 = vadd.f32 0.0, %v367
  %v369 = vpop.f32.mrb[0].mxu0
  %v370 = vadd.f32 0.0, %v369
  %371 = vmatprep.mubr.bf16.mxu0 0
  %372 = vmatmul.mubr.bf16.gmra.mrb[0].mxu0 %v208
  %v373 = vpop.f32.mrb[0].mxu0
  %v374 = vadd.f32 0.0, %v373
  %v375 = vpop.f32.mrb[0].mxu0
  %v376 = vadd.f32 0.0, %v375
  %v377 = vpop.f32.mrb[0].mxu0
  %v378 = vadd.f32 0.0, %v377
  %v379 = vpop.f32.mrb[0].mxu0
  %v380 = vadd.f32 0.0, %v379
  %381 = vmatprep.mubr.bf16.mxu0 0
  %382 = vmatmul.mubr.bf16.gmra.mrb[0].mxu0 %v211
  %v383 = vpop.f32.mrb[0].mxu0
  %v384 = vadd.f32 0.0, %v383
  %v385 = vpop.f32.mrb[0].mxu0
  %v386 = vadd.f32 0.0, %v385
  %v387 = vpop.f32.mrb[0].mxu0
  %v388 = vadd.f32 0.0, %v387
  %v389 = vpop.f32.mrb[0].mxu0
  %v390 = vadd.f32 0.0, %v389
  %391 = vmatprep.mubr.bf16.mxu0 0
  %392 = vmatmul.mubr.bf16.gmra.mrb[0].mxu0 %v214
  %v393 = vpop.f32.mrb[0].mxu0
  %v394 = vadd.f32 0.0, %v393
  %v395 = vpop.f32.mrb[0].mxu0
  %v396 = vadd.f32 0.0, %v395
  %v397 = vpop.f32.mrb[0].mxu0
  %v398 = vadd.f32 0.0, %v397
  %v399 = vpop.f32.mrb[0].mxu0
  %v400 = vadd.f32 0.0, %v399
  %401 = vmatprep.mubr.bf16.mxu0 0
  %402 = vmatmul.mubr.bf16.gmra.mrb[0].mxu0 %v217
  %v403 = vpop.f32.mrb[0].mxu0
  %v404 = vadd.f32 0.0, %v403
  %v405 = vpop.f32.mrb[0].mxu0
  %v406 = vadd.f32 0.0, %v405
  %v407 = vpop.f32.mrb[0].mxu0
  %v408 = vadd.f32 0.0, %v407
  %v409 = vpop.f32.mrb[0].mxu0
  %v410 = vadd.f32 0.0, %v409
  %411 = vdwg.mxu0
  %v416 = vunpack.c.l.b16 %v93
  %v417 = vunpack.c.h.b16 %v93
  %v418 = vunpack.c.l.b16 %v94
  %v419 = vunpack.c.h.b16 %v94
  %v420 = vunpack.c.l.b16 %v95
  %v421 = vunpack.c.h.b16 %v95
  %v422 = vunpack.c.l.b16 %v96
  %v423 = vunpack.c.h.b16 %v96
  %v424 = vpack.c.b16 %v418, %v416
  %v425 = vpack.c.b16 %v419, %v417
  %v426 = vpack.c.b16 %v422, %v420
  %v427 = vpack.c.b16 %v423, %v421
  %v433 = vsel %vm170, %v77, 0
  %v436 = vsel %vm170, %v78, 0
  %v439 = vsel %vm170, %v79, 0
  %v442 = vsel %vm170, %v80, 0
  %v445 = vsel %vm170, %v81, 0
  %v448 = vsel %vm170, %v82, 0
  %v451 = vsel %vm170, %v83, 0
  %v454 = vsel %vm170, %v84, 0
  %v457 = vsel %vm170, %v85, 0
  %v460 = vsel %vm170, %v86, 0
  %v463 = vsel %vm170, %v87, 0
  %v466 = vsel %vm170, %v88, 0
  %v469 = vsel %vm170, %v89, 0
  %v472 = vsel %vm170, %v90, 0
  %v475 = vsel %vm170, %v91, 0
  %v478 = vsel %vm170, %v92, 0
  %480 = vmatprep.subr.bf16.mxu0 %v425
  %481 = vmatpush1.bf16.msra.mxu0 %v424
  %482 = vmatprep.subr.bf16.mxu0 %v427
  %483 = vmatpush1.bf16.msra.mxu0 %v426
  %484 = vmatprep.subr.bf16.mxu0 0
  %485 = vmatpush1.bf16.msra.mxu0 0
  %486 = vmatprep.subr.bf16.mxu0 0
  %487 = vmatpush1.bf16.msra.mxu0 0
  %488 = vmatprep.subr.bf16.mxu0 0
  %489 = vmatpush1.bf16.msra.mxu0 0
  %490 = vmatprep.subr.bf16.mxu0 0
  %491 = vmatpush1.bf16.msra.mxu0 0
  %492 = vmatprep.subr.bf16.mxu0 0
  %493 = vmatpush1.bf16.msra.mxu0 0
  %494 = vmatprep.subr.bf16.mxu0 0
  %495 = vmatpush1.bf16.msra.mxu0 0
  %496 = vmatprep.subr.bf16.mxu0 0
  %497 = vmatpush1.bf16.msra.mxu0 0
  %498 = vmatprep.subr.bf16.mxu0 0
  %499 = vmatpush1.bf16.msra.mxu0 0
  %500 = vmatprep.subr.bf16.mxu0 0
  %501 = vmatpush1.bf16.msra.mxu0 0
  %502 = vmatprep.subr.bf16.mxu0 0
  %503 = vmatpush1.bf16.msra.mxu0 0
  %504 = vmatprep.subr.bf16.mxu0 0
  %505 = vmatpush1.bf16.msra.mxu0 0
  %506 = vmatprep.subr.bf16.mxu0 0
  %507 = vmatpush1.bf16.msra.mxu0 0
  %508 = vmatprep.subr.bf16.mxu0 0
  %509 = vmatpush1.bf16.msra.mxu0 0
  %510 = vmatprep.subr.bf16.mxu0 0
  %511 = vmatpush1.bf16.msra.mxu0 0
  %512 = vmatprep.mubr.bf16.mxu0 0
  %513 = vmatmul.mubr.bf16.gmra.mrb[0].mxu0 %v433
  %v514 = vpop.f32.mrb[0].mxu0
  %v515 = vadd.f32 %v254, %v514
  %v516 = vpop.f32.mrb[0].mxu0
  %v517 = vadd.f32 %v256, %v516
  %v518 = vpop.f32.mrb[0].mxu0
  %v519 = vadd.f32 %v258, %v518
  %v520 = vpop.f32.mrb[0].mxu0
  %v521 = vadd.f32 %v260, %v520
  %522 = vmatprep.mubr.bf16.mxu0 0
  %523 = vmatmul.mubr.bf16.gmra.mrb[0].mxu0 %v436
  %v524 = vpop.f32.mrb[0].mxu0
  %v525 = vadd.f32 %v264, %v524
  %v526 = vpop.f32.mrb[0].mxu0
  %v527 = vadd.f32 %v266, %v526
  %v528 = vpop.f32.mrb[0].mxu0
  %v529 = vadd.f32 %v268, %v528
  %v530 = vpop.f32.mrb[0].mxu0
  %v531 = vadd.f32 %v270, %v530
  %532 = vmatprep.mubr.bf16.mxu0 0
  %533 = vmatmul.mubr.bf16.gmra.mrb[0].mxu0 %v439
  %v534 = vpop.f32.mrb[0].mxu0
  %v535 = vadd.f32 %v274, %v534
  %v536 = vpop.f32.mrb[0].mxu0
  %v537 = vadd.f32 %v276, %v536
  %v538 = vpop.f32.mrb[0].mxu0
  %v539 = vadd.f32 %v278, %v538
  %v540 = vpop.f32.mrb[0].mxu0
  %v541 = vadd.f32 %v280, %v540
  %542 = vmatprep.mubr.bf16.mxu0 0
  %543 = vmatmul.mubr.bf16.gmra.mrb[0].mxu0 %v442
  %v544 = vpop.f32.mrb[0].mxu0
  %v545 = vadd.f32 %v284, %v544
  %v546 = vpop.f32.mrb[0].mxu0
  %v547 = vadd.f32 %v286, %v546
  %v548 = vpop.f32.mrb[0].mxu0
  %v549 = vadd.f32 %v288, %v548
  %v550 = vpop.f32.mrb[0].mxu0
  %v551 = vadd.f32 %v290, %v550
  %552 = vmatprep.mubr.bf16.mxu0 0
  %553 = vmatmul.mubr.bf16.gmra.mrb[0].mxu0 %v445
  %v554 = vpop.f32.mrb[0].mxu0
  %v555 = vadd.f32 %v294, %v554
  %v556 = vpop.f32.mrb[0].mxu0
  %v557 = vadd.f32 %v296, %v556
  %v558 = vpop.f32.mrb[0].mxu0
  %v559 = vadd.f32 %v298, %v558
  %v560 = vpop.f32.mrb[0].mxu0
  %v561 = vadd.f32 %v300, %v560
  %562 = vmatprep.mubr.bf16.mxu0 0
  %563 = vmatmul.mubr.bf16.gmra.mrb[0].mxu0 %v448
  %v564 = vpop.f32.mrb[0].mxu0
  %v565 = vadd.f32 %v304, %v564
  %v566 = vpop.f32.mrb[0].mxu0
  %v567 = vadd.f32 %v306, %v566
  %v568 = vpop.f32.mrb[0].mxu0
  %v569 = vadd.f32 %v308, %v568
  %v570 = vpop.f32.mrb[0].mxu0
  %v571 = vadd.f32 %v310, %v570
  %572 = vmatprep.mubr.bf16.mxu0 0
  %573 = vmatmul.mubr.bf16.gmra.mrb[0].mxu0 %v451
  %v574 = vpop.f32.mrb[0].mxu0
  %v575 = vadd.f32 %v314, %v574
  %v576 = vpop.f32.mrb[0].mxu0
  %v577 = vadd.f32 %v316, %v576
  %v578 = vpop.f32.mrb[0].mxu0
  %v579 = vadd.f32 %v318, %v578
  %v580 = vpop.f32.mrb[0].mxu0
  %v581 = vadd.f32 %v320, %v580
  %582 = vmatprep.mubr.bf16.mxu0 0
  %583 = vmatmul.mubr.bf16.gmra.mrb[0].mxu0 %v454
  %v584 = vpop.f32.mrb[0].mxu0
  %v585 = vadd.f32 %v324, %v584
  %v586 = vpop.f32.mrb[0].mxu0
  %v587 = vadd.f32 %v326, %v586
  %v588 = vpop.f32.mrb[0].mxu0
  %v589 = vadd.f32 %v328, %v588
  %v590 = vpop.f32.mrb[0].mxu0
  %v591 = vadd.f32 %v330, %v590
  %592 = vmatprep.mubr.bf16.mxu0 0
  %593 = vmatmul.mubr.bf16.gmra.mrb[0].mxu0 %v457
  %v594 = vpop.f32.mrb[0].mxu0
  %v595 = vadd.f32 %v334, %v594
  %v596 = vpop.f32.mrb[0].mxu0
  %v597 = vadd.f32 %v336, %v596
  %v598 = vpop.f32.mrb[0].mxu0
  %v599 = vadd.f32 %v338, %v598
  %v600 = vpop.f32.mrb[0].mxu0
  %v601 = vadd.f32 %v340, %v600
  %602 = vmatprep.mubr.bf16.mxu0 0
  %603 = vmatmul.mubr.bf16.gmra.mrb[0].mxu0 %v460
  %v604 = vpop.f32.mrb[0].mxu0
  %v605 = vadd.f32 %v344, %v604
  %v606 = vpop.f32.mrb[0].mxu0
  %v607 = vadd.f32 %v346, %v606
  %v608 = vpop.f32.mrb[0].mxu0
  %v609 = vadd.f32 %v348, %v608
  %v610 = vpop.f32.mrb[0].mxu0
  %v611 = vadd.f32 %v350, %v610
  %612 = vmatprep.mubr.bf16.mxu0 0
  %613 = vmatmul.mubr.bf16.gmra.mrb[0].mxu0 %v463
  %v614 = vpop.f32.mrb[0].mxu0
  %v615 = vadd.f32 %v354, %v614
  %v616 = vpop.f32.mrb[0].mxu0
  %v617 = vadd.f32 %v356, %v616
  %v618 = vpop.f32.mrb[0].mxu0
  %v619 = vadd.f32 %v358, %v618
  %v620 = vpop.f32.mrb[0].mxu0
  %v621 = vadd.f32 %v360, %v620
  %622 = vmatprep.mubr.bf16.mxu0 0
  %623 = vmatmul.mubr.bf16.gmra.mrb[0].mxu0 %v466
  %v624 = vpop.f32.mrb[0].mxu0
  %v625 = vadd.f32 %v364, %v624
  %v626 = vpop.f32.mrb[0].mxu0
  %v627 = vadd.f32 %v366, %v626
  %v628 = vpop.f32.mrb[0].mxu0
  %v629 = vadd.f32 %v368, %v628
  %v630 = vpop.f32.mrb[0].mxu0
  %v631 = vadd.f32 %v370, %v630
  %632 = vmatprep.mubr.bf16.mxu0 0
  %633 = vmatmul.mubr.bf16.gmra.mrb[0].mxu0 %v469
  %v634 = vpop.f32.mrb[0].mxu0
  %v635 = vadd.f32 %v374, %v634
  %v636 = vpop.f32.mrb[0].mxu0
  %v637 = vadd.f32 %v376, %v636
  %v638 = vpop.f32.mrb[0].mxu0
  %v639 = vadd.f32 %v378, %v638
  %v640 = vpop.f32.mrb[0].mxu0
  %v641 = vadd.f32 %v380, %v640
  %642 = vmatprep.mubr.bf16.mxu0 0
  %643 = vmatmul.mubr.bf16.gmra.mrb[0].mxu0 %v472
  %v644 = vpop.f32.mrb[0].mxu0
  %v645 = vadd.f32 %v384, %v644
  %v646 = vpop.f32.mrb[0].mxu0
  %v647 = vadd.f32 %v386, %v646
  %v648 = vpop.f32.mrb[0].mxu0
  %v649 = vadd.f32 %v388, %v648
  %v650 = vpop.f32.mrb[0].mxu0
  %v651 = vadd.f32 %v390, %v650
  %652 = vmatprep.mubr.bf16.mxu0 0
  %653 = vmatmul.mubr.bf16.gmra.mrb[0].mxu0 %v475
  %v654 = vpop.f32.mrb[0].mxu0
  %v655 = vadd.f32 %v394, %v654
  %v656 = vpop.f32.mrb[0].mxu0
  %v657 = vadd.f32 %v396, %v656
  %v658 = vpop.f32.mrb[0].mxu0
  %v659 = vadd.f32 %v398, %v658
  %v660 = vpop.f32.mrb[0].mxu0
  %v661 = vadd.f32 %v400, %v660
  %662 = vmatprep.mubr.bf16.mxu0 0
  %663 = vmatmul.mubr.bf16.gmra.mrb[0].mxu0 %v478
  %v664 = vpop.f32.mrb[0].mxu0
  %v665 = vadd.f32 %v404, %v664
  %v666 = vpop.f32.mrb[0].mxu0
  %v667 = vadd.f32 %v406, %v666
  %v668 = vpop.f32.mrb[0].mxu0
  %v669 = vadd.f32 %v408, %v668
  %v670 = vpop.f32.mrb[0].mxu0
  %v671 = vadd.f32 %v410, %v670
  %672 = vdwg.mxu0
  %v673 = vld [vmem:[%s0 + $0x2] sm:$0xff]
  %v674 = vld [vmem:[%s0 + $0xa] sm:$0xff]
  %v675 = vld [vmem:[%s0 + $0x12] sm:$0xff]
  %v676 = vld [vmem:[%s0 + $0x1a] sm:$0xff]
  %v677 = vld [vmem:[%s0 + $0x2a] sm:$0xff]
  %v678 = vld [vmem:[%s0 + $0x32] sm:$0xff]
  %v679 = vld [vmem:[%s0 + $0x3a] sm:$0xff]
  %v680 = vld [vmem:[%s0 + $0x42] sm:$0xff]
  %v681 = vld [vmem:[%s0 + $0x52] sm:$0xff]
  %v682 = vld [vmem:[%s0 + $0x5a] sm:$0xff]
  %v683 = vld [vmem:[%s0 + $0x62] sm:$0xff]
  %v684 = vld [vmem:[%s0 + $0x6a] sm:$0xff]
  %v685 = vld [vmem:[%s0 + $0x7a] sm:$0xff]
  %v686 = vld [vmem:[%s0 + $0x82] sm:$0xff]
  %v687 = vld [vmem:[%s0 + $0x8a] sm:$0xff]
  %v688 = vld [vmem:[%s0 + $0x92] sm:$0xff]
  %v689 = vld [vmem:[%s0 + $0xa2] sm:$0xff]
  %v690 = vld [vmem:[%s0 + $0xaa] sm:$0xff]
  %v691 = vld [vmem:[%s0 + $0xb2] sm:$0xff]
  %v692 = vld [vmem:[%s0 + $0xba] sm:$0xff]
  %v693 = vld [vmem:[%s0 + $0xca] sm:$0xff]
  %v694 = vld [vmem:[%s0 + $0xd2] sm:$0xff]
  %v695 = vld [vmem:[%s0 + $0xda] sm:$0xff]
  %v696 = vld [vmem:[%s0 + $0xe2] sm:$0xff]
  %v697 = vld [vmem:[%s0 + $0xf2] sm:$0xff]
  %v698 = vld [vmem:[%s0 + $0xfa] sm:$0xff]
  %v699 = vld [vmem:[%s0 + $0x102] sm:$0xff]
  %v700 = vld [vmem:[%s0 + $0x10a] sm:$0xff]
  %v701 = vld [vmem:[%s0 + $0x11a] sm:$0xff]
  %v702 = vld [vmem:[%s0 + $0x122] sm:$0xff]
  %v703 = vld [vmem:[%s0 + $0x12a] sm:$0xff]
  %v704 = vld [vmem:[%s0 + $0x132] sm:$0xff]
  %v705 = vpack.c.bf16 %v674, %v673
  %v706 = vpack.c.bf16 %v676, %v675
  %v707 = vpack.c.bf16 %v678, %v677
  %v708 = vpack.c.bf16 %v680, %v679
  %v709 = vpack.c.bf16 %v682, %v681
  %v710 = vpack.c.bf16 %v684, %v683
  %v711 = vpack.c.bf16 %v686, %v685
  %v712 = vpack.c.bf16 %v688, %v687
  %v713 = vpack.c.bf16 %v690, %v689
  %v714 = vpack.c.bf16 %v692, %v691
  %v715 = vpack.c.bf16 %v694, %v693
  %v716 = vpack.c.bf16 %v696, %v695
  %v717 = vpack.c.bf16 %v698, %v697
  %v718 = vpack.c.bf16 %v700, %v699
  %v719 = vpack.c.bf16 %v702, %v701
  %v720 = vpack.c.bf16 %v704, %v703
  %s721 = scalar_lea.vmem %s1, 64
  %v722 = vld [vmem:[%s721] sm:$0xff]
  %v723 = vld [vmem:[%s721 + $0x8] sm:$0xff]
  %v724 = vld [vmem:[%s721 + $0x10] sm:$0xff]
  %v725 = vld [vmem:[%s721 + $0x18] sm:$0xff]
  %v730 = vunpack.c.l.b16 %v722
  %v731 = vunpack.c.h.b16 %v722
  %v732 = vunpack.c.l.b16 %v723
  %v733 = vunpack.c.h.b16 %v723
  %v734 = vunpack.c.l.b16 %v724
  %v735 = vunpack.c.h.b16 %v724
  %v736 = vunpack.c.l.b16 %v725
  %v737 = vunpack.c.h.b16 %v725
  %v738 = vpack.c.b16 %v732, %v730
  %v739 = vpack.c.b16 %v733, %v731
  %v740 = vpack.c.b16 %v736, %v734
  %v741 = vpack.c.b16 %v737, %v735
  %v747 = vsel %vm170, %v705, 0
  %v750 = vsel %vm170, %v706, 0
  %v753 = vsel %vm170, %v707, 0
  %v756 = vsel %vm170, %v708, 0
  %v759 = vsel %vm170, %v709, 0
  %v762 = vsel %vm170, %v710, 0
  %v765 = vsel %vm170, %v711, 0
  %v768 = vsel %vm170, %v712, 0
  %v771 = vsel %vm170, %v713, 0
  %v774 = vsel %vm170, %v714, 0
  %v777 = vsel %vm170, %v715, 0
  %v780 = vsel %vm170, %v716, 0
  %v783 = vsel %vm170, %v717, 0
  %v786 = vsel %vm170, %v718, 0
  %v789 = vsel %vm170, %v719, 0
  %v792 = vsel %vm170, %v720, 0
  %794 = vmatprep.subr.bf16.mxu0 %v739
  %795 = vmatpush1.bf16.msra.mxu0 %v738
  %796 = vmatprep.subr.bf16.mxu0 %v741
  %797 = vmatpush1.bf16.msra.mxu0 %v740
  %798 = vmatprep.subr.bf16.mxu0 0
  %799 = vmatpush1.bf16.msra.mxu0 0
  %800 = vmatprep.subr.bf16.mxu0 0
  %801 = vmatpush1.bf16.msra.mxu0 0
  %802 = vmatprep.subr.bf16.mxu0 0
  %803 = vmatpush1.bf16.msra.mxu0 0
  %804 = vmatprep.subr.bf16.mxu0 0
  %805 = vmatpush1.bf16.msra.mxu0 0
  %806 = vmatprep.subr.bf16.mxu0 0
  %807 = vmatpush1.bf16.msra.mxu0 0
  %808 = vmatprep.subr.bf16.mxu0 0
  %809 = vmatpush1.bf16.msra.mxu0 0
  %810 = vmatprep.subr.bf16.mxu0 0
  %811 = vmatpush1.bf16.msra.mxu0 0
  %812 = vmatprep.subr.bf16.mxu0 0
  %813 = vmatpush1.bf16.msra.mxu0 0
  %814 = vmatprep.subr.bf16.mxu0 0
  %815 = vmatpush1.bf16.msra.mxu0 0
  %816 = vmatprep.subr.bf16.mxu0 0
  %817 = vmatpush1.bf16.msra.mxu0 0
  %818 = vmatprep.subr.bf16.mxu0 0
  %819 = vmatpush1.bf16.msra.mxu0 0
  %820 = vmatprep.subr.bf16.mxu0 0
  %821 = vmatpush1.bf16.msra.mxu0 0
  %822 = vmatprep.subr.bf16.mxu0 0
  %823 = vmatpush1.bf16.msra.mxu0 0
  %824 = vmatprep.subr.bf16.mxu0 0
  %825 = vmatpush1.bf16.msra.mxu0 0
  %826 = vmatprep.mubr.bf16.mxu0 0
  %827 = vmatmul.mubr.bf16.gmra.mrb[0].mxu0 %v747
  %v828 = vpop.f32.mrb[0].mxu0
  %v829 = vadd.f32 0.0, %v828
  %v830 = vpop.f32.mrb[0].mxu0
  %v831 = vadd.f32 0.0, %v830
  %v832 = vpop.f32.mrb[0].mxu0
  %v833 = vadd.f32 0.0, %v832
  %v834 = vpop.f32.mrb[0].mxu0
  %v835 = vadd.f32 0.0, %v834
  %836 = vmatprep.mubr.bf16.mxu0 0
  %837 = vmatmul.mubr.bf16.gmra.mrb[0].mxu0 %v750
  %v838 = vpop.f32.mrb[0].mxu0
  %v839 = vadd.f32 0.0, %v838
  %v840 = vpop.f32.mrb[0].mxu0
  %v841 = vadd.f32 0.0, %v840
  %v842 = vpop.f32.mrb[0].mxu0
  %v843 = vadd.f32 0.0, %v842
  %v844 = vpop.f32.mrb[0].mxu0
  %v845 = vadd.f32 0.0, %v844
  %846 = vmatprep.mubr.bf16.mxu0 0
  %847 = vmatmul.mubr.bf16.gmra.mrb[0].mxu0 %v753
  %v848 = vpop.f32.mrb[0].mxu0
  %v849 = vadd.f32 0.0, %v848
  %v850 = vpop.f32.mrb[0].mxu0
  %v851 = vadd.f32 0.0, %v850
  %v852 = vpop.f32.mrb[0].mxu0
  %v853 = vadd.f32 0.0, %v852
  %v854 = vpop.f32.mrb[0].mxu0
  %v855 = vadd.f32 0.0, %v854
  %856 = vmatprep.mubr.bf16.mxu0 0
  %857 = vmatmul.mubr.bf16.gmra.mrb[0].mxu0 %v756
  %v858 = vpop.f32.mrb[0].mxu0
  %v859 = vadd.f32 0.0, %v858
  %v860 = vpop.f32.mrb[0].mxu0
  %v861 = vadd.f32 0.0, %v860
  %v862 = vpop.f32.mrb[0].mxu0
  %v863 = vadd.f32 0.0, %v862
  %v864 = vpop.f32.mrb[0].mxu0
  %v865 = vadd.f32 0.0, %v864
  %866 = vmatprep.mubr.bf16.mxu0 0
  %867 = vmatmul.mubr.bf16.gmra.mrb[0].mxu0 %v759
  %v868 = vpop.f32.mrb[0].mxu0
  %v869 = vadd.f32 0.0, %v868
  %v870 = vpop.f32.mrb[0].mxu0
  %v871 = vadd.f32 0.0, %v870
  %v872 = vpop.f32.mrb[0].mxu0
  %v873 = vadd.f32 0.0, %v872
  %v874 = vpop.f32.mrb[0].mxu0
  %v875 = vadd.f32 0.0, %v874
  %876 = vmatprep.mubr.bf16.mxu0 0
  %877 = vmatmul.mubr.bf16.gmra.mrb[0].mxu0 %v762
  %v878 = vpop.f32.mrb[0].mxu0
  %v879 = vadd.f32 0.0, %v878
  %v880 = vpop.f32.mrb[0].mxu0
  %v881 = vadd.f32 0.0, %v880
  %v882 = vpop.f32.mrb[0].mxu0
  %v883 = vadd.f32 0.0, %v882
  %v884 = vpop.f32.mrb[0].mxu0
  %v885 = vadd.f32 0.0, %v884
  %886 = vmatprep.mubr.bf16.mxu0 0
  %887 = vmatmul.mubr.bf16.gmra.mrb[0].mxu0 %v765
  %v888 = vpop.f32.mrb[0].mxu0
  %v889 = vadd.f32 0.0, %v888
  %v890 = vpop.f32.mrb[0].mxu0
  %v891 = vadd.f32 0.0, %v890
  %v892 = vpop.f32.mrb[0].mxu0
  %v893 = vadd.f32 0.0, %v892
  %v894 = vpop.f32.mrb[0].mxu0
  %v895 = vadd.f32 0.0, %v894
  %896 = vmatprep.mubr.bf16.mxu0 0
  %897 = vmatmul.mubr.bf16.gmra.mrb[0].mxu0 %v768
  %v898 = vpop.f32.mrb[0].mxu0
  %v899 = vadd.f32 0.0, %v898
  %v900 = vpop.f32.mrb[0].mxu0
  %v901 = vadd.f32 0.0, %v900
  %v902 = vpop.f32.mrb[0].mxu0
  %v903 = vadd.f32 0.0, %v902
  %v904 = vpop.f32.mrb[0].mxu0
  %v905 = vadd.f32 0.0, %v904
  %906 = vmatprep.mubr.bf16.mxu0 0
  %907 = vmatmul.mubr.bf16.gmra.mrb[0].mxu0 %v771
  %v908 = vpop.f32.mrb[0].mxu0
  %v909 = vadd.f32 0.0, %v908
  %v910 = vpop.f32.mrb[0].mxu0
  %v911 = vadd.f32 0.0, %v910
  %v912 = vpop.f32.mrb[0].mxu0
  %v913 = vadd.f32 0.0, %v912
  %v914 = vpop.f32.mrb[0].mxu0
  %v915 = vadd.f32 0.0, %v914
  %916 = vmatprep.mubr.bf16.mxu0 0
  %917 = vmatmul.mubr.bf16.gmra.mrb[0].mxu0 %v774
  %v918 = vpop.f32.mrb[0].mxu0
  %v919 = vadd.f32 0.0, %v918
  %v920 = vpop.f32.mrb[0].mxu0
  %v921 = vadd.f32 0.0, %v920
  %v922 = vpop.f32.mrb[0].mxu0
  %v923 = vadd.f32 0.0, %v922
  %v924 = vpop.f32.mrb[0].mxu0
  %v925 = vadd.f32 0.0, %v924
  %926 = vmatprep.mubr.bf16.mxu0 0
  %927 = vmatmul.mubr.bf16.gmra.mrb[0].mxu0 %v777
  %v928 = vpop.f32.mrb[0].mxu0
  %v929 = vadd.f32 0.0, %v928
  %v930 = vpop.f32.mrb[0].mxu0
  %v931 = vadd.f32 0.0, %v930
  %v932 = vpop.f32.mrb[0].mxu0
  %v933 = vadd.f32 0.0, %v932
  %v934 = vpop.f32.mrb[0].mxu0
  %v935 = vadd.f32 0.0, %v934
  %936 = vmatprep.mubr.bf16.mxu0 0
  %937 = vmatmul.mubr.bf16.gmra.mrb[0].mxu0 %v780
  %v938 = vpop.f32.mrb[0].mxu0
  %v939 = vadd.f32 0.0, %v938
  %v940 = vpop.f32.mrb[0].mxu0
  %v941 = vadd.f32 0.0, %v940
  %v942 = vpop.f32.mrb[0].mxu0
  %v943 = vadd.f32 0.0, %v942
  %v944 = vpop.f32.mrb[0].mxu0
  %v945 = vadd.f32 0.0, %v944
  %946 = vmatprep.mubr.bf16.mxu0 0
  %947 = vmatmul.mubr.bf16.gmra.mrb[0].mxu0 %v783
  %v948 = vpop.f32.mrb[0].mxu0
  %v949 = vadd.f32 0.0, %v948
  %v950 = vpop.f32.mrb[0].mxu0
  %v951 = vadd.f32 0.0, %v950
  %v952 = vpop.f32.mrb[0].mxu0
  %v953 = vadd.f32 0.0, %v952
  %v954 = vpop.f32.mrb[0].mxu0
  %v955 = vadd.f32 0.0, %v954
  %956 = vmatprep.mubr.bf16.mxu0 0
  %957 = vmatmul.mubr.bf16.gmra.mrb[0].mxu0 %v786
  %v958 = vpop.f32.mrb[0].mxu0
  %v959 = vadd.f32 0.0, %v958
  %v960 = vpop.f32.mrb[0].mxu0
  %v961 = vadd.f32 0.0, %v960
  %v962 = vpop.f32.mrb[0].mxu0
  %v963 = vadd.f32 0.0, %v962
  %v964 = vpop.f32.mrb[0].mxu0
  %v965 = vadd.f32 0.0, %v964
  %966 = vmatprep.mubr.bf16.mxu0 0
  %967 = vmatmul.mubr.bf16.gmra.mrb[0].mxu0 %v789
  %v968 = vpop.f32.mrb[0].mxu0
  %v969 = vadd.f32 0.0, %v968
  %v970 = vpop.f32.mrb[0].mxu0
  %v971 = vadd.f32 0.0, %v970
  %v972 = vpop.f32.mrb[0].mxu0
  %v973 = vadd.f32 0.0, %v972
  %v974 = vpop.f32.mrb[0].mxu0
  %v975 = vadd.f32 0.0, %v974
  %976 = vmatprep.mubr.bf16.mxu0 0
  %977 = vmatmul.mubr.bf16.gmra.mrb[0].mxu0 %v792
  %v978 = vpop.f32.mrb[0].mxu0
  %v979 = vadd.f32 0.0, %v978
  %v980 = vpop.f32.mrb[0].mxu0
  %v981 = vadd.f32 0.0, %v980
  %v982 = vpop.f32.mrb[0].mxu0
  %v983 = vadd.f32 0.0, %v982
  %v984 = vpop.f32.mrb[0].mxu0
  %v985 = vadd.f32 0.0, %v984
  %986 = vdwg.mxu0
  %v987 = vadd.f32 %v515, %v829
  %v988 = vadd.f32 %v517, %v831
  %v989 = vadd.f32 %v519, %v833
  %v990 = vadd.f32 %v521, %v835
  %v991 = vadd.f32 %v525, %v839
  %v992 = vadd.f32 %v527, %v841
  %v993 = vadd.f32 %v529, %v843
  %v994 = vadd.f32 %v531, %v845
  %v995 = vadd.f32 %v535, %v849
  %v996 = vadd.f32 %v537, %v851
  %v997 = vadd.f32 %v539, %v853
  %v998 = vadd.f32 %v541, %v855
  %v999 = vadd.f32 %v545, %v859
  %v1000 = vadd.f32 %v547, %v861
  %v1001 = vadd.f32 %v549, %v863
  %v1002 = vadd.f32 %v551, %v865
  %v1003 = vadd.f32 %v555, %v869
  %v1004 = vadd.f32 %v557, %v871
  %v1005 = vadd.f32 %v559, %v873
  %v1006 = vadd.f32 %v561, %v875
  %v1007 = vadd.f32 %v565, %v879
  %v1008 = vadd.f32 %v567, %v881
  %v1009 = vadd.f32 %v569, %v883
  %v1010 = vadd.f32 %v571, %v885
  %v1011 = vadd.f32 %v575, %v889
  %v1012 = vadd.f32 %v577, %v891
  %v1013 = vadd.f32 %v579, %v893
  %v1014 = vadd.f32 %v581, %v895
  %v1015 = vadd.f32 %v585, %v899
  %v1016 = vadd.f32 %v587, %v901
  %v1017 = vadd.f32 %v589, %v903
  %v1018 = vadd.f32 %v591, %v905
  %v1019 = vadd.f32 %v595, %v909
  %v1020 = vadd.f32 %v597, %v911
  %v1021 = vadd.f32 %v599, %v913
  %v1022 = vadd.f32 %v601, %v915
  %v1023 = vadd.f32 %v605, %v919
  %v1024 = vadd.f32 %v607, %v921
  %v1025 = vadd.f32 %v609, %v923
  %v1026 = vadd.f32 %v611, %v925
  %v1027 = vadd.f32 %v615, %v929
  %v1028 = vadd.f32 %v617, %v931
  %v1029 = vadd.f32 %v619, %v933
  %v1030 = vadd.f32 %v621, %v935
  %v1031 = vadd.f32 %v625, %v939
  %v1032 = vadd.f32 %v627, %v941
  %v1033 = vadd.f32 %v629, %v943
  %v1034 = vadd.f32 %v631, %v945
  %v1035 = vadd.f32 %v635, %v949
  %v1036 = vadd.f32 %v637, %v951
  %v1037 = vadd.f32 %v639, %v953
  %v1038 = vadd.f32 %v641, %v955
  %v1039 = vadd.f32 %v645, %v959
  %v1040 = vadd.f32 %v647, %v961
  %v1041 = vadd.f32 %v649, %v963
  %v1042 = vadd.f32 %v651, %v965
  %v1043 = vadd.f32 %v655, %v969
  %v1044 = vadd.f32 %v657, %v971
  %v1045 = vadd.f32 %v659, %v973
  %v1046 = vadd.f32 %v661, %v975
  %v1047 = vadd.f32 %v665, %v979
  %v1048 = vadd.f32 %v667, %v981
  %v1049 = vadd.f32 %v669, %v983
  %v1050 = vadd.f32 %v671, %v985
  %v1051 = vld [vmem:[%s0 + $0x3] sm:$0xff]
  %v1052 = vld [vmem:[%s0 + $0xb] sm:$0xff]
  %v1053 = vld [vmem:[%s0 + $0x13] sm:$0xff]
  %v1054 = vld [vmem:[%s0 + $0x1b] sm:$0xff]
  %v1055 = vld [vmem:[%s0 + $0x2b] sm:$0xff]
  %v1056 = vld [vmem:[%s0 + $0x33] sm:$0xff]
  %v1057 = vld [vmem:[%s0 + $0x3b] sm:$0xff]
  %v1058 = vld [vmem:[%s0 + $0x43] sm:$0xff]
  %v1059 = vld [vmem:[%s0 + $0x53] sm:$0xff]
  %v1060 = vld [vmem:[%s0 + $0x5b] sm:$0xff]
  %v1061 = vld [vmem:[%s0 + $0x63] sm:$0xff]
  %v1062 = vld [vmem:[%s0 + $0x6b] sm:$0xff]
  %v1063 = vld [vmem:[%s0 + $0x7b] sm:$0xff]
  %v1064 = vld [vmem:[%s0 + $0x83] sm:$0xff]
  %v1065 = vld [vmem:[%s0 + $0x8b] sm:$0xff]
  %v1066 = vld [vmem:[%s0 + $0x93] sm:$0xff]
  %v1067 = vld [vmem:[%s0 + $0xa3] sm:$0xff]
  %v1068 = vld [vmem:[%s0 + $0xab] sm:$0xff]
  %v1069 = vld [vmem:[%s0 + $0xb3] sm:$0xff]
  %v1070 = vld [vmem:[%s0 + $0xbb] sm:$0xff]
  %v1071 = vld [vmem:[%s0 + $0xcb] sm:$0xff]
  %v1072 = vld [vmem:[%s0 + $0xd3] sm:$0xff]
  %v1073 = vld [vmem:[%s0 + $0xdb] sm:$0xff]
  %v1074 = vld [vmem:[%s0 + $0xe3] sm:$0xff]
  %v1075 = vld [vmem:[%s0 + $0xf3] sm:$0xff]
  %v1076 = vld [vmem:[%s0 + $0xfb] sm:$0xff]
  %v1077 = vld [vmem:[%s0 + $0x103] sm:$0xff]
  %v1078 = vld [vmem:[%s0 + $0x10b] sm:$0xff]
  %v1079 = vld [vmem:[%s0 + $0x11b] sm:$0xff]
  %v1080 = vld [vmem:[%s0 + $0x123] sm:$0xff]
  %v1081 = vld [vmem:[%s0 + $0x12b] sm:$0xff]
  %v1082 = vld [vmem:[%s0 + $0x133] sm:$0xff]
  %v1083 = vpack.c.bf16 %v1052, %v1051
  %v1084 = vpack.c.bf16 %v1054, %v1053
  %v1085 = vpack.c.bf16 %v1056, %v1055
  %v1086 = vpack.c.bf16 %v1058, %v1057
  %v1087 = vpack.c.bf16 %v1060, %v1059
  %v1088 = vpack.c.bf16 %v1062, %v1061
  %v1089 = vpack.c.bf16 %v1064, %v1063
  %v1090 = vpack.c.bf16 %v1066, %v1065
  %v1091 = vpack.c.bf16 %v1068, %v1067
  %v1092 = vpack.c.bf16 %v1070, %v1069
  %v1093 = vpack.c.bf16 %v1072, %v1071
  %v1094 = vpack.c.bf16 %v1074, %v1073
  %v1095 = vpack.c.bf16 %v1076, %v1075
  %v1096 = vpack.c.bf16 %v1078, %v1077
  %v1097 = vpack.c.bf16 %v1080, %v1079
  %v1098 = vpack.c.bf16 %v1082, %v1081
  %s1099 = scalar_lea.vmem %s1, 96
  %v1100 = vld [vmem:[%s1099] sm:$0xff]
  %v1101 = vld [vmem:[%s1099 + $0x8] sm:$0xff]
  %v1102 = vld [vmem:[%s1099 + $0x10] sm:$0xff]
  %v1103 = vld [vmem:[%s1099 + $0x18] sm:$0xff]
  %v1108 = vunpack.c.l.b16 %v1100
  %v1109 = vunpack.c.h.b16 %v1100
  %v1110 = vunpack.c.l.b16 %v1101
  %v1111 = vunpack.c.h.b16 %v1101
  %v1112 = vunpack.c.l.b16 %v1102
  %v1113 = vunpack.c.h.b16 %v1102
  %v1114 = vunpack.c.l.b16 %v1103
  %v1115 = vunpack.c.h.b16 %v1103
  %v1116 = vpack.c.b16 %v1110, %v1108
  %v1117 = vpack.c.b16 %v1111, %v1109
  %v1118 = vpack.c.b16 %v1114, %v1112
  %v1119 = vpack.c.b16 %v1115, %v1113
  %v1125 = vsel %vm170, %v1083, 0
  %v1128 = vsel %vm170, %v1084, 0
  %v1131 = vsel %vm170, %v1085, 0
  %v1134 = vsel %vm170, %v1086, 0
  %v1137 = vsel %vm170, %v1087, 0
  %v1140 = vsel %vm170, %v1088, 0
  %v1143 = vsel %vm170, %v1089, 0
  %v1146 = vsel %vm170, %v1090, 0
  %v1149 = vsel %vm170, %v1091, 0
  %v1152 = vsel %vm170, %v1092, 0
  %v1155 = vsel %vm170, %v1093, 0
  %v1158 = vsel %vm170, %v1094, 0
  %v1161 = vsel %vm170, %v1095, 0
  %v1164 = vsel %vm170, %v1096, 0
  %v1167 = vsel %vm170, %v1097, 0
  %v1170 = vsel %vm170, %v1098, 0
  %1172 = vmatprep.subr.bf16.mxu0 %v1117
  %1173 = vmatpush1.bf16.msra.mxu0 %v1116
  %1174 = vmatprep.subr.bf16.mxu0 %v1119
  %1175 = vmatpush1.bf16.msra.mxu0 %v1118
  %1176 = vmatprep.subr.bf16.mxu0 0
  %1177 = vmatpush1.bf16.msra.mxu0 0
  %1178 = vmatprep.subr.bf16.mxu0 0
  %1179 = vmatpush1.bf16.msra.mxu0 0
  %1180 = vmatprep.subr.bf16.mxu0 0
  %1181 = vmatpush1.bf16.msra.mxu0 0
  %1182 = vmatprep.subr.bf16.mxu0 0
  %1183 = vmatpush1.bf16.msra.mxu0 0
  %1184 = vmatprep.subr.bf16.mxu0 0
  %1185 = vmatpush1.bf16.msra.mxu0 0
  %1186 = vmatprep.subr.bf16.mxu0 0
  %1187 = vmatpush1.bf16.msra.mxu0 0
  %1188 = vmatprep.subr.bf16.mxu0 0
  %1189 = vmatpush1.bf16.msra.mxu0 0
  %1190 = vmatprep.subr.bf16.mxu0 0
  %1191 = vmatpush1.bf16.msra.mxu0 0
  %1192 = vmatprep.subr.bf16.mxu0 0
  %1193 = vmatpush1.bf16.msra.mxu0 0
  %1194 = vmatprep.subr.bf16.mxu0 0
  %1195 = vmatpush1.bf16.msra.mxu0 0
  %1196 = vmatprep.subr.bf16.mxu0 0
  %1197 = vmatpush1.bf16.msra.mxu0 0
  %1198 = vmatprep.subr.bf16.mxu0 0
  %1199 = vmatpush1.bf16.msra.mxu0 0
  %1200 = vmatprep.subr.bf16.mxu0 0
  %1201 = vmatpush1.bf16.msra.mxu0 0
  %1202 = vmatprep.subr.bf16.mxu0 0
  %1203 = vmatpush1.bf16.msra.mxu0 0
  %1204 = vmatprep.mubr.bf16.mxu0 0
  %1205 = vmatmul.mubr.bf16.gmra.mrb[0].mxu0 %v1125
  %v1206 = vpop.f32.mrb[0].mxu0
  %v1207 = vadd.f32 0.0, %v1206
  %v1208 = vpop.f32.mrb[0].mxu0
  %v1209 = vadd.f32 0.0, %v1208
  %v1210 = vpop.f32.mrb[0].mxu0
  %v1211 = vadd.f32 0.0, %v1210
  %v1212 = vpop.f32.mrb[0].mxu0
  %v1213 = vadd.f32 0.0, %v1212
  %1214 = vmatprep.mubr.bf16.mxu0 0
  %1215 = vmatmul.mubr.bf16.gmra.mrb[0].mxu0 %v1128
  %v1216 = vpop.f32.mrb[0].mxu0
  %v1217 = vadd.f32 0.0, %v1216
  %v1218 = vpop.f32.mrb[0].mxu0
  %v1219 = vadd.f32 0.0, %v1218
  %v1220 = vpop.f32.mrb[0].mxu0
  %v1221 = vadd.f32 0.0, %v1220
  %v1222 = vpop.f32.mrb[0].mxu0
  %v1223 = vadd.f32 0.0, %v1222
  %1224 = vmatprep.mubr.bf16.mxu0 0
  %1225 = vmatmul.mubr.bf16.gmra.mrb[0].mxu0 %v1131
  %v1226 = vpop.f32.mrb[0].mxu0
  %v1227 = vadd.f32 0.0, %v1226
  %v1228 = vpop.f32.mrb[0].mxu0
  %v1229 = vadd.f32 0.0, %v1228
  %v1230 = vpop.f32.mrb[0].mxu0
  %v1231 = vadd.f32 0.0, %v1230
  %v1232 = vpop.f32.mrb[0].mxu0
  %v1233 = vadd.f32 0.0, %v1232
  %1234 = vmatprep.mubr.bf16.mxu0 0
  %1235 = vmatmul.mubr.bf16.gmra.mrb[0].mxu0 %v1134
  %v1236 = vpop.f32.mrb[0].mxu0
  %v1237 = vadd.f32 0.0, %v1236
  %v1238 = vpop.f32.mrb[0].mxu0
  %v1239 = vadd.f32 0.0, %v1238
  %v1240 = vpop.f32.mrb[0].mxu0
  %v1241 = vadd.f32 0.0, %v1240
  %v1242 = vpop.f32.mrb[0].mxu0
  %v1243 = vadd.f32 0.0, %v1242
  %1244 = vmatprep.mubr.bf16.mxu0 0
  %1245 = vmatmul.mubr.bf16.gmra.mrb[0].mxu0 %v1137
  %v1246 = vpop.f32.mrb[0].mxu0
  %v1247 = vadd.f32 0.0, %v1246
  %v1248 = vpop.f32.mrb[0].mxu0
  %v1249 = vadd.f32 0.0, %v1248
  %v1250 = vpop.f32.mrb[0].mxu0
  %v1251 = vadd.f32 0.0, %v1250
  %v1252 = vpop.f32.mrb[0].mxu0
  %v1253 = vadd.f32 0.0, %v1252
  %1254 = vmatprep.mubr.bf16.mxu0 0
  %1255 = vmatmul.mubr.bf16.gmra.mrb[0].mxu0 %v1140
  %v1256 = vpop.f32.mrb[0].mxu0
  %v1257 = vadd.f32 0.0, %v1256
  %v1258 = vpop.f32.mrb[0].mxu0
  %v1259 = vadd.f32 0.0, %v1258
  %v1260 = vpop.f32.mrb[0].mxu0
  %v1261 = vadd.f32 0.0, %v1260
  %v1262 = vpop.f32.mrb[0].mxu0
  %v1263 = vadd.f32 0.0, %v1262
  %1264 = vmatprep.mubr.bf16.mxu0 0
  %1265 = vmatmul.mubr.bf16.gmra.mrb[0].mxu0 %v1143
  %v1266 = vpop.f32.mrb[0].mxu0
  %v1267 = vadd.f32 0.0, %v1266
  %v1268 = vpop.f32.mrb[0].mxu0
  %v1269 = vadd.f32 0.0, %v1268
  %v1270 = vpop.f32.mrb[0].mxu0
  %v1271 = vadd.f32 0.0, %v1270
  %v1272 = vpop.f32.mrb[0].mxu0
  %v1273 = vadd.f32 0.0, %v1272
  %1274 = vmatprep.mubr.bf16.mxu0 0
  %1275 = vmatmul.mubr.bf16.gmra.mrb[0].mxu0 %v1146
  %v1276 = vpop.f32.mrb[0].mxu0
  %v1277 = vadd.f32 0.0, %v1276
  %v1278 = vpop.f32.mrb[0].mxu0
  %v1279 = vadd.f32 0.0, %v1278
  %v1280 = vpop.f32.mrb[0].mxu0
  %v1281 = vadd.f32 0.0, %v1280
  %v1282 = vpop.f32.mrb[0].mxu0
  %v1283 = vadd.f32 0.0, %v1282
  %1284 = vmatprep.mubr.bf16.mxu0 0
  %1285 = vmatmul.mubr.bf16.gmra.mrb[0].mxu0 %v1149
  %v1286 = vpop.f32.mrb[0].mxu0
  %v1287 = vadd.f32 0.0, %v1286
  %v1288 = vpop.f32.mrb[0].mxu0
  %v1289 = vadd.f32 0.0, %v1288
  %v1290 = vpop.f32.mrb[0].mxu0
  %v1291 = vadd.f32 0.0, %v1290
  %v1292 = vpop.f32.mrb[0].mxu0
  %v1293 = vadd.f32 0.0, %v1292
  %1294 = vmatprep.mubr.bf16.mxu0 0
  %1295 = vmatmul.mubr.bf16.gmra.mrb[0].mxu0 %v1152
  %v1296 = vpop.f32.mrb[0].mxu0
  %v1297 = vadd.f32 0.0, %v1296
  %v1298 = vpop.f32.mrb[0].mxu0
  %v1299 = vadd.f32 0.0, %v1298
  %v1300 = vpop.f32.mrb[0].mxu0
  %v1301 = vadd.f32 0.0, %v1300
  %v1302 = vpop.f32.mrb[0].mxu0
  %v1303 = vadd.f32 0.0, %v1302
  %1304 = vmatprep.mubr.bf16.mxu0 0
  %1305 = vmatmul.mubr.bf16.gmra.mrb[0].mxu0 %v1155
  %v1306 = vpop.f32.mrb[0].mxu0
  %v1307 = vadd.f32 0.0, %v1306
  %v1308 = vpop.f32.mrb[0].mxu0
  %v1309 = vadd.f32 0.0, %v1308
  %v1310 = vpop.f32.mrb[0].mxu0
  %v1311 = vadd.f32 0.0, %v1310
  %v1312 = vpop.f32.mrb[0].mxu0
  %v1313 = vadd.f32 0.0, %v1312
  %1314 = vmatprep.mubr.bf16.mxu0 0
  %1315 = vmatmul.mubr.bf16.gmra.mrb[0].mxu0 %v1158
  %v1316 = vpop.f32.mrb[0].mxu0
  %v1317 = vadd.f32 0.0, %v1316
  %v1318 = vpop.f32.mrb[0].mxu0
  %v1319 = vadd.f32 0.0, %v1318
  %v1320 = vpop.f32.mrb[0].mxu0
  %v1321 = vadd.f32 0.0, %v1320
  %v1322 = vpop.f32.mrb[0].mxu0
  %v1323 = vadd.f32 0.0, %v1322
  %1324 = vmatprep.mubr.bf16.mxu0 0
  %1325 = vmatmul.mubr.bf16.gmra.mrb[0].mxu0 %v1161
  %v1326 = vpop.f32.mrb[0].mxu0
  %v1327 = vadd.f32 0.0, %v1326
  %v1328 = vpop.f32.mrb[0].mxu0
  %v1329 = vadd.f32 0.0, %v1328
  %v1330 = vpop.f32.mrb[0].mxu0
  %v1331 = vadd.f32 0.0, %v1330
  %v1332 = vpop.f32.mrb[0].mxu0
  %v1333 = vadd.f32 0.0, %v1332
  %1334 = vmatprep.mubr.bf16.mxu0 0
  %1335 = vmatmul.mubr.bf16.gmra.mrb[0].mxu0 %v1164
  %v1336 = vpop.f32.mrb[0].mxu0
  %v1337 = vadd.f32 0.0, %v1336
  %v1338 = vpop.f32.mrb[0].mxu0
  %v1339 = vadd.f32 0.0, %v1338
  %v1340 = vpop.f32.mrb[0].mxu0
  %v1341 = vadd.f32 0.0, %v1340
  %v1342 = vpop.f32.mrb[0].mxu0
  %v1343 = vadd.f32 0.0, %v1342
  %1344 = vmatprep.mubr.bf16.mxu0 0
  %1345 = vmatmul.mubr.bf16.gmra.mrb[0].mxu0 %v1167
  %v1346 = vpop.f32.mrb[0].mxu0
  %v1347 = vadd.f32 0.0, %v1346
  %v1348 = vpop.f32.mrb[0].mxu0
  %v1349 = vadd.f32 0.0, %v1348
  %v1350 = vpop.f32.mrb[0].mxu0
  %v1351 = vadd.f32 0.0, %v1350
  %v1352 = vpop.f32.mrb[0].mxu0
  %v1353 = vadd.f32 0.0, %v1352
  %1354 = vmatprep.mubr.bf16.mxu0 0
  %1355 = vmatmul.mubr.bf16.gmra.mrb[0].mxu0 %v1170
  %v1356 = vpop.f32.mrb[0].mxu0
  %v1357 = vadd.f32 0.0, %v1356
  %v1358 = vpop.f32.mrb[0].mxu0
  %v1359 = vadd.f32 0.0, %v1358
  %v1360 = vpop.f32.mrb[0].mxu0
  %v1361 = vadd.f32 0.0, %v1360
  %v1362 = vpop.f32.mrb[0].mxu0
  %v1363 = vadd.f32 0.0, %v1362
  %1364 = vdwg.mxu0
  %v1365 = vadd.f32 %v987, %v1207
  %v1366 = vadd.f32 %v988, %v1209
  %v1367 = vadd.f32 %v989, %v1211
  %v1368 = vadd.f32 %v990, %v1213
  %v1369 = vadd.f32 %v991, %v1217
  %v1370 = vadd.f32 %v992, %v1219
  %v1371 = vadd.f32 %v993, %v1221
  %v1372 = vadd.f32 %v994, %v1223
  %v1373 = vadd.f32 %v995, %v1227
  %v1374 = vadd.f32 %v996, %v1229
  %v1375 = vadd.f32 %v997, %v1231
  %v1376 = vadd.f32 %v998, %v1233
  %v1377 = vadd.f32 %v999, %v1237
  %v1378 = vadd.f32 %v1000, %v1239
  %v1379 = vadd.f32 %v1001, %v1241
  %v1380 = vadd.f32 %v1002, %v1243
  %v1381 = vadd.f32 %v1003, %v1247
  %v1382 = vadd.f32 %v1004, %v1249
  %v1383 = vadd.f32 %v1005, %v1251
  %v1384 = vadd.f32 %v1006, %v1253
  %v1385 = vadd.f32 %v1007, %v1257
  %v1386 = vadd.f32 %v1008, %v1259
  %v1387 = vadd.f32 %v1009, %v1261
  %v1388 = vadd.f32 %v1010, %v1263
  %v1389 = vadd.f32 %v1011, %v1267
  %v1390 = vadd.f32 %v1012, %v1269
  %v1391 = vadd.f32 %v1013, %v1271
  %v1392 = vadd.f32 %v1014, %v1273
  %v1393 = vadd.f32 %v1015, %v1277
  %v1394 = vadd.f32 %v1016, %v1279
  %v1395 = vadd.f32 %v1017, %v1281
  %v1396 = vadd.f32 %v1018, %v1283
  %v1397 = vadd.f32 %v1019, %v1287
  %v1398 = vadd.f32 %v1020, %v1289
  %v1399 = vadd.f32 %v1021, %v1291
  %v1400 = vadd.f32 %v1022, %v1293
  %v1401 = vadd.f32 %v1023, %v1297
  %v1402 = vadd.f32 %v1024, %v1299
  %v1403 = vadd.f32 %v1025, %v1301
  %v1404 = vadd.f32 %v1026, %v1303
  %v1405 = vadd.f32 %v1027, %v1307
  %v1406 = vadd.f32 %v1028, %v1309
  %v1407 = vadd.f32 %v1029, %v1311
  %v1408 = vadd.f32 %v1030, %v1313
  %v1409 = vadd.f32 %v1031, %v1317
  %v1410 = vadd.f32 %v1032, %v1319
  %v1411 = vadd.f32 %v1033, %v1321
  %v1412 = vadd.f32 %v1034, %v1323
  %v1413 = vadd.f32 %v1035, %v1327
  %v1414 = vadd.f32 %v1036, %v1329
  %v1415 = vadd.f32 %v1037, %v1331
  %v1416 = vadd.f32 %v1038, %v1333
  %v1417 = vadd.f32 %v1039, %v1337
  %v1418 = vadd.f32 %v1040, %v1339
  %v1419 = vadd.f32 %v1041, %v1341
  %v1420 = vadd.f32 %v1042, %v1343
  %v1421 = vadd.f32 %v1043, %v1347
  %v1422 = vadd.f32 %v1044, %v1349
  %v1423 = vadd.f32 %v1045, %v1351
  %v1424 = vadd.f32 %v1046, %v1353
  %v1425 = vadd.f32 %v1047, %v1357
  %v1426 = vadd.f32 %v1048, %v1359
  %v1427 = vadd.f32 %v1049, %v1361
  %v1428 = vadd.f32 %v1050, %v1363
  %v1429 = vld [vmem:[%s0 + $0x4] sm:$0xff]
  %v1430 = vld [vmem:[%s0 + $0xc] sm:$0xff]
  %v1431 = vld [vmem:[%s0 + $0x14] sm:$0xff]
  %v1432 = vld [vmem:[%s0 + $0x1c] sm:$0xff]
  %v1433 = vld [vmem:[%s0 + $0x2c] sm:$0xff]
  %v1434 = vld [vmem:[%s0 + $0x34] sm:$0xff]
  %v1435 = vld [vmem:[%s0 + $0x3c] sm:$0xff]
  %v1436 = vld [vmem:[%s0 + $0x44] sm:$0xff]
  %v1437 = vld [vmem:[%s0 + $0x54] sm:$0xff]
  %v1438 = vld [vmem:[%s0 + $0x5c] sm:$0xff]
  %v1439 = vld [vmem:[%s0 + $0x64] sm:$0xff]
  %v1440 = vld [vmem:[%s0 + $0x6c] sm:$0xff]
  %v1441 = vld [vmem:[%s0 + $0x7c] sm:$0xff]
  %v1442 = vld [vmem:[%s0 + $0x84] sm:$0xff]
  %v1443 = vld [vmem:[%s0 + $0x8c] sm:$0xff]
  %v1444 = vld [vmem:[%s0 + $0x94] sm:$0xff]
  %v1445 = vld [vmem:[%s0 + $0xa4] sm:$0xff]
  %v1446 = vld [vmem:[%s0 + $0xac] sm:$0xff]
  %v1447 = vld [vmem:[%s0 + $0xb4] sm:$0xff]
  %v1448 = vld [vmem:[%s0 + $0xbc] sm:$0xff]
  %v1449 = vld [vmem:[%s0 + $0xcc] sm:$0xff]
  %v1450 = vld [vmem:[%s0 + $0xd4] sm:$0xff]
  %v1451 = vld [vmem:[%s0 + $0xdc] sm:$0xff]
  %v1452 = vld [vmem:[%s0 + $0xe4] sm:$0xff]
  %v1453 = vld [vmem:[%s0 + $0xf4] sm:$0xff]
  %v1454 = vld [vmem:[%s0 + $0xfc] sm:$0xff]
  %v1455 = vld [vmem:[%s0 + $0x104] sm:$0xff]
  %v1456 = vld [vmem:[%s0 + $0x10c] sm:$0xff]
  %v1457 = vld [vmem:[%s0 + $0x11c] sm:$0xff]
  %v1458 = vld [vmem:[%s0 + $0x124] sm:$0xff]
  %v1459 = vld [vmem:[%s0 + $0x12c] sm:$0xff]
  %v1460 = vld [vmem:[%s0 + $0x134] sm:$0xff]
  %v1461 = vpack.c.bf16 %v1430, %v1429
  %v1462 = vpack.c.bf16 %v1432, %v1431
  %v1463 = vpack.c.bf16 %v1434, %v1433
  %v1464 = vpack.c.bf16 %v1436, %v1435
  %v1465 = vpack.c.bf16 %v1438, %v1437
  %v1466 = vpack.c.bf16 %v1440, %v1439
  %v1467 = vpack.c.bf16 %v1442, %v1441
  %v1468 = vpack.c.bf16 %v1444, %v1443
  %v1469 = vpack.c.bf16 %v1446, %v1445
  %v1470 = vpack.c.bf16 %v1448, %v1447
  %v1471 = vpack.c.bf16 %v1450, %v1449
  %v1472 = vpack.c.bf16 %v1452, %v1451
  %v1473 = vpack.c.bf16 %v1454, %v1453
  %v1474 = vpack.c.bf16 %v1456, %v1455
  %v1475 = vpack.c.bf16 %v1458, %v1457
  %v1476 = vpack.c.bf16 %v1460, %v1459
  %s1477 = scalar_lea.vmem %s1, 128
  %v1478 = vld [vmem:[%s1477] sm:$0xff]
  %v1479 = vld [vmem:[%s1477 + $0x8] sm:$0xff]
  %v1480 = vld [vmem:[%s1477 + $0x10] sm:$0xff]
  %v1481 = vld [vmem:[%s1477 + $0x18] sm:$0xff]
  %v1486 = vunpack.c.l.b16 %v1478
  %v1487 = vunpack.c.h.b16 %v1478
  %v1488 = vunpack.c.l.b16 %v1479
  %v1489 = vunpack.c.h.b16 %v1479
  %v1490 = vunpack.c.l.b16 %v1480
  %v1491 = vunpack.c.h.b16 %v1480
  %v1492 = vunpack.c.l.b16 %v1481
  %v1493 = vunpack.c.h.b16 %v1481
  %v1494 = vpack.c.b16 %v1488, %v1486
  %v1495 = vpack.c.b16 %v1489, %v1487
  %v1496 = vpack.c.b16 %v1492, %v1490
  %v1497 = vpack.c.b16 %v1493, %v1491
  %v1503 = vsel %vm170, %v1461, 0
  %v1506 = vsel %vm170, %v1462, 0
  %v1509 = vsel %vm170, %v1463, 0
  %v1512 = vsel %vm170, %v1464, 0
  %v1515 = vsel %vm170, %v1465, 0
  %v1518 = vsel %vm170, %v1466, 0
  %v1521 = vsel %vm170, %v1467, 0
  %v1524 = vsel %vm170, %v1468, 0
  %v1527 = vsel %vm170, %v1469, 0
  %v1530 = vsel %vm170, %v1470, 0
  %v1533 = vsel %vm170, %v1471, 0
  %v1536 = vsel %vm170, %v1472, 0
  %v1539 = vsel %vm170, %v1473, 0
  %v1542 = vsel %vm170, %v1474, 0
  %v1545 = vsel %vm170, %v1475, 0
  %v1548 = vsel %vm170, %v1476, 0
  %1550 = vmatprep.subr.bf16.mxu0 %v1495
  %1551 = vmatpush1.bf16.msra.mxu0 %v1494
  %1552 = vmatprep.subr.bf16.mxu0 %v1497
  %1553 = vmatpush1.bf16.msra.mxu0 %v1496
  %1554 = vmatprep.subr.bf16.mxu0 0
  %1555 = vmatpush1.bf16.msra.mxu0 0
  %1556 = vmatprep.subr.bf16.mxu0 0
  %1557 = vmatpush1.bf16.msra.mxu0 0
  %1558 = vmatprep.subr.bf16.mxu0 0
  %1559 = vmatpush1.bf16.msra.mxu0 0
  %1560 = vmatprep.subr.bf16.mxu0 0
  %1561 = vmatpush1.bf16.msra.mxu0 0
  %1562 = vmatprep.subr.bf16.mxu0 0
  %1563 = vmatpush1.bf16.msra.mxu0 0
  %1564 = vmatprep.subr.bf16.mxu0 0
  %1565 = vmatpush1.bf16.msra.mxu0 0
  %1566 = vmatprep.subr.bf16.mxu0 0
  %1567 = vmatpush1.bf16.msra.mxu0 0
  %1568 = vmatprep.subr.bf16.mxu0 0
  %1569 = vmatpush1.bf16.msra.mxu0 0
  %1570 = vmatprep.subr.bf16.mxu0 0
  %1571 = vmatpush1.bf16.msra.mxu0 0
  %1572 = vmatprep.subr.bf16.mxu0 0
  %1573 = vmatpush1.bf16.msra.mxu0 0
  %1574 = vmatprep.subr.bf16.mxu0 0
  %1575 = vmatpush1.bf16.msra.mxu0 0
  %1576 = vmatprep.subr.bf16.mxu0 0
  %1577 = vmatpush1.bf16.msra.mxu0 0
  %1578 = vmatprep.subr.bf16.mxu0 0
  %1579 = vmatpush1.bf16.msra.mxu0 0
  %1580 = vmatprep.subr.bf16.mxu0 0
  %1581 = vmatpush1.bf16.msra.mxu0 0
  %1582 = vmatprep.mubr.bf16.mxu0 0
  %1583 = vmatmul.mubr.bf16.gmra.mrb[0].mxu0 %v1503
  %v1584 = vpop.f32.mrb[0].mxu0
  %v1585 = vadd.f32 0.0, %v1584
  %v1586 = vpop.f32.mrb[0].mxu0
  %v1587 = vadd.f32 0.0, %v1586
  %v1588 = vpop.f32.mrb[0].mxu0
  %v1589 = vadd.f32 0.0, %v1588
  %v1590 = vpop.f32.mrb[0].mxu0
  %v1591 = vadd.f32 0.0, %v1590
  %1592 = vmatprep.mubr.bf16.mxu0 0
  %1593 = vmatmul.mubr.bf16.gmra.mrb[0].mxu0 %v1506
  %v1594 = vpop.f32.mrb[0].mxu0
  %v1595 = vadd.f32 0.0, %v1594
  %v1596 = vpop.f32.mrb[0].mxu0
  %v1597 = vadd.f32 0.0, %v1596
  %v1598 = vpop.f32.mrb[0].mxu0
  %v1599 = vadd.f32 0.0, %v1598
  %v1600 = vpop.f32.mrb[0].mxu0
  %v1601 = vadd.f32 0.0, %v1600
  %1602 = vmatprep.mubr.bf16.mxu0 0
  %1603 = vmatmul.mubr.bf16.gmra.mrb[0].mxu0 %v1509
  %v1604 = vpop.f32.mrb[0].mxu0
  %v1605 = vadd.f32 0.0, %v1604
  %v1606 = vpop.f32.mrb[0].mxu0
  %v1607 = vadd.f32 0.0, %v1606
  %v1608 = vpop.f32.mrb[0].mxu0
  %v1609 = vadd.f32 0.0, %v1608
  %v1610 = vpop.f32.mrb[0].mxu0
  %v1611 = vadd.f32 0.0, %v1610
  %1612 = vmatprep.mubr.bf16.mxu0 0
  %1613 = vmatmul.mubr.bf16.gmra.mrb[0].mxu0 %v1512
  %v1614 = vpop.f32.mrb[0].mxu0
  %v1615 = vadd.f32 0.0, %v1614
  %v1616 = vpop.f32.mrb[0].mxu0
  %v1617 = vadd.f32 0.0, %v1616
  %v1618 = vpop.f32.mrb[0].mxu0
  %v1619 = vadd.f32 0.0, %v1618
  %v1620 = vpop.f32.mrb[0].mxu0
  %v1621 = vadd.f32 0.0, %v1620
  %1622 = vmatprep.mubr.bf16.mxu0 0
  %1623 = vmatmul.mubr.bf16.gmra.mrb[0].mxu0 %v1515
  %v1624 = vpop.f32.mrb[0].mxu0
  %v1625 = vadd.f32 0.0, %v1624
  %v1626 = vpop.f32.mrb[0].mxu0
  %v1627 = vadd.f32 0.0, %v1626
  %v1628 = vpop.f32.mrb[0].mxu0
  %v1629 = vadd.f32 0.0, %v1628
  %v1630 = vpop.f32.mrb[0].mxu0
  %v1631 = vadd.f32 0.0, %v1630
  %1632 = vmatprep.mubr.bf16.mxu0 0
  %1633 = vmatmul.mubr.bf16.gmra.mrb[0].mxu0 %v1518
  %v1634 = vpop.f32.mrb[0].mxu0
  %v1635 = vadd.f32 0.0, %v1634
  %v1636 = vpop.f32.mrb[0].mxu0
  %v1637 = vadd.f32 0.0, %v1636
  %v1638 = vpop.f32.mrb[0].mxu0
  %v1639 = vadd.f32 0.0, %v1638
  %v1640 = vpop.f32.mrb[0].mxu0
  %v1641 = vadd.f32 0.0, %v1640
  %1642 = vmatprep.mubr.bf16.mxu0 0
  %1643 = vmatmul.mubr.bf16.gmra.mrb[0].mxu0 %v1521
  %v1644 = vpop.f32.mrb[0].mxu0
  %v1645 = vadd.f32 0.0, %v1644
  %v1646 = vpop.f32.mrb[0].mxu0
  %v1647 = vadd.f32 0.0, %v1646
  %v1648 = vpop.f32.mrb[0].mxu0
  %v1649 = vadd.f32 0.0, %v1648
  %v1650 = vpop.f32.mrb[0].mxu0
  %v1651 = vadd.f32 0.0, %v1650
  %1652 = vmatprep.mubr.bf16.mxu0 0
  %1653 = vmatmul.mubr.bf16.gmra.mrb[0].mxu0 %v1524
  %v1654 = vpop.f32.mrb[0].mxu0
  %v1655 = vadd.f32 0.0, %v1654
  %v1656 = vpop.f32.mrb[0].mxu0
  %v1657 = vadd.f32 0.0, %v1656
  %v1658 = vpop.f32.mrb[0].mxu0
  %v1659 = vadd.f32 0.0, %v1658
  %v1660 = vpop.f32.mrb[0].mxu0
  %v1661 = vadd.f32 0.0, %v1660
  %1662 = vmatprep.mubr.bf16.mxu0 0
  %1663 = vmatmul.mubr.bf16.gmra.mrb[0].mxu0 %v1527
  %v1664 = vpop.f32.mrb[0].mxu0
  %v1665 = vadd.f32 0.0, %v1664
  %v1666 = vpop.f32.mrb[0].mxu0
  %v1667 = vadd.f32 0.0, %v1666
  %v1668 = vpop.f32.mrb[0].mxu0
  %v1669 = vadd.f32 0.0, %v1668
  %v1670 = vpop.f32.mrb[0].mxu0
  %v1671 = vadd.f32 0.0, %v1670
  %1672 = vmatprep.mubr.bf16.mxu0 0
  %1673 = vmatmul.mubr.bf16.gmra.mrb[0].mxu0 %v1530
  %v1674 = vpop.f32.mrb[0].mxu0
  %v1675 = vadd.f32 0.0, %v1674
  %v1676 = vpop.f32.mrb[0].mxu0
  %v1677 = vadd.f32 0.0, %v1676
  %v1678 = vpop.f32.mrb[0].mxu0
  %v1679 = vadd.f32 0.0, %v1678
  %v1680 = vpop.f32.mrb[0].mxu0
  %v1681 = vadd.f32 0.0, %v1680
  %1682 = vmatprep.mubr.bf16.mxu0 0
  %1683 = vmatmul.mubr.bf16.gmra.mrb[0].mxu0 %v1533
  %v1684 = vpop.f32.mrb[0].mxu0
  %v1685 = vadd.f32 0.0, %v1684
  %v1686 = vpop.f32.mrb[0].mxu0
  %v1687 = vadd.f32 0.0, %v1686
  %v1688 = vpop.f32.mrb[0].mxu0
  %v1689 = vadd.f32 0.0, %v1688
  %v1690 = vpop.f32.mrb[0].mxu0
  %v1691 = vadd.f32 0.0, %v1690
  %1692 = vmatprep.mubr.bf16.mxu0 0
  %1693 = vmatmul.mubr.bf16.gmra.mrb[0].mxu0 %v1536
  %v1694 = vpop.f32.mrb[0].mxu0
  %v1695 = vadd.f32 0.0, %v1694
  %v1696 = vpop.f32.mrb[0].mxu0
  %v1697 = vadd.f32 0.0, %v1696
  %v1698 = vpop.f32.mrb[0].mxu0
  %v1699 = vadd.f32 0.0, %v1698
  %v1700 = vpop.f32.mrb[0].mxu0
  %v1701 = vadd.f32 0.0, %v1700
  %1702 = vmatprep.mubr.bf16.mxu0 0
  %1703 = vmatmul.mubr.bf16.gmra.mrb[0].mxu0 %v1539
  %v1704 = vpop.f32.mrb[0].mxu0
  %v1705 = vadd.f32 0.0, %v1704
  %v1706 = vpop.f32.mrb[0].mxu0
  %v1707 = vadd.f32 0.0, %v1706
  %v1708 = vpop.f32.mrb[0].mxu0
  %v1709 = vadd.f32 0.0, %v1708
  %v1710 = vpop.f32.mrb[0].mxu0
  %v1711 = vadd.f32 0.0, %v1710
  %1712 = vmatprep.mubr.bf16.mxu0 0
  %1713 = vmatmul.mubr.bf16.gmra.mrb[0].mxu0 %v1542
  %v1714 = vpop.f32.mrb[0].mxu0
  %v1715 = vadd.f32 0.0, %v1714
  %v1716 = vpop.f32.mrb[0].mxu0
  %v1717 = vadd.f32 0.0, %v1716
  %v1718 = vpop.f32.mrb[0].mxu0
  %v1719 = vadd.f32 0.0, %v1718
  %v1720 = vpop.f32.mrb[0].mxu0
  %v1721 = vadd.f32 0.0, %v1720
  %1722 = vmatprep.mubr.bf16.mxu0 0
  %1723 = vmatmul.mubr.bf16.gmra.mrb[0].mxu0 %v1545
  %v1724 = vpop.f32.mrb[0].mxu0
  %v1725 = vadd.f32 0.0, %v1724
  %v1726 = vpop.f32.mrb[0].mxu0
  %v1727 = vadd.f32 0.0, %v1726
  %v1728 = vpop.f32.mrb[0].mxu0
  %v1729 = vadd.f32 0.0, %v1728
  %v1730 = vpop.f32.mrb[0].mxu0
  %v1731 = vadd.f32 0.0, %v1730
  %1732 = vmatprep.mubr.bf16.mxu0 0
  %1733 = vmatmul.mubr.bf16.gmra.mrb[0].mxu0 %v1548
  %v1734 = vpop.f32.mrb[0].mxu0
  %v1735 = vadd.f32 0.0, %v1734
  %v1736 = vpop.f32.mrb[0].mxu0
  %v1737 = vadd.f32 0.0, %v1736
  %v1738 = vpop.f32.mrb[0].mxu0
  %v1739 = vadd.f32 0.0, %v1738
  %v1740 = vpop.f32.mrb[0].mxu0
  %v1741 = vadd.f32 0.0, %v1740
  %1742 = vdwg.mxu0
  %v1743 = vadd.f32 %v1365, %v1585
  %v1744 = vadd.f32 %v1366, %v1587
  %v1745 = vadd.f32 %v1367, %v1589
  %v1746 = vadd.f32 %v1368, %v1591
  %v1747 = vadd.f32 %v1369, %v1595
  %v1748 = vadd.f32 %v1370, %v1597
  %v1749 = vadd.f32 %v1371, %v1599
  %v1750 = vadd.f32 %v1372, %v1601
  %v1751 = vadd.f32 %v1373, %v1605
  %v1752 = vadd.f32 %v1374, %v1607
  %v1753 = vadd.f32 %v1375, %v1609
  %v1754 = vadd.f32 %v1376, %v1611
  %v1755 = vadd.f32 %v1377, %v1615
  %v1756 = vadd.f32 %v1378, %v1617
  %v1757 = vadd.f32 %v1379, %v1619
  %v1758 = vadd.f32 %v1380, %v1621
  %v1759 = vadd.f32 %v1381, %v1625
  %v1760 = vadd.f32 %v1382, %v1627
  %v1761 = vadd.f32 %v1383, %v1629
  %v1762 = vadd.f32 %v1384, %v1631
  %v1763 = vadd.f32 %v1385, %v1635
  %v1764 = vadd.f32 %v1386, %v1637
  %v1765 = vadd.f32 %v1387, %v1639
  %v1766 = vadd.f32 %v1388, %v1641
  %v1767 = vadd.f32 %v1389, %v1645
  %v1768 = vadd.f32 %v1390, %v1647
  %v1769 = vadd.f32 %v1391, %v1649
  %v1770 = vadd.f32 %v1392, %v1651
  %v1771 = vadd.f32 %v1393, %v1655
  %v1772 = vadd.f32 %v1394, %v1657
  %v1773 = vadd.f32 %v1395, %v1659
  %v1774 = vadd.f32 %v1396, %v1661
  %v1775 = vadd.f32 %v1397, %v1665
  %v1776 = vadd.f32 %v1398, %v1667
  %v1777 = vadd.f32 %v1399, %v1669
  %v1778 = vadd.f32 %v1400, %v1671
  %v1779 = vadd.f32 %v1401, %v1675
  %v1780 = vadd.f32 %v1402, %v1677
  %v1781 = vadd.f32 %v1403, %v1679
  %v1782 = vadd.f32 %v1404, %v1681
  %v1783 = vadd.f32 %v1405, %v1685
  %v1784 = vadd.f32 %v1406, %v1687
  %v1785 = vadd.f32 %v1407, %v1689
  %v1786 = vadd.f32 %v1408, %v1691
  %v1787 = vadd.f32 %v1409, %v1695
  %v1788 = vadd.f32 %v1410, %v1697
  %v1789 = vadd.f32 %v1411, %v1699
  %v1790 = vadd.f32 %v1412, %v1701
  %v1791 = vadd.f32 %v1413, %v1705
  %v1792 = vadd.f32 %v1414, %v1707
  %v1793 = vadd.f32 %v1415, %v1709
  %v1794 = vadd.f32 %v1416, %v1711
  %v1795 = vadd.f32 %v1417, %v1715
  %v1796 = vadd.f32 %v1418, %v1717
  %v1797 = vadd.f32 %v1419, %v1719
  %v1798 = vadd.f32 %v1420, %v1721
  %v1799 = vadd.f32 %v1421, %v1725
  %v1800 = vadd.f32 %v1422, %v1727
  %v1801 = vadd.f32 %v1423, %v1729
  %v1802 = vadd.f32 %v1424, %v1731
  %v1803 = vadd.f32 %v1425, %v1735
  %v1804 = vadd.f32 %v1426, %v1737
  %v1805 = vadd.f32 %v1427, %v1739
  %v1806 = vadd.f32 %v1428, %v1741
  %v1807 = vld [vmem:[%s2] sm:$0x3]
  %v1809 = vlaneseq
  %v1810 = vshrl.u32 %v1809, 7
  %v1811 = vsub.s32 0, %v1810
  %v1812 = vrot.slane %v1807, %v1811
  %v1813 = vlaneseq
  %v1814 = vshrl.u32 %v1813, 7
  %v1815 = vsub.s32 1, %v1814
  %v1816 = vrot.slane %v1807, %v1815
  %v1819 = vadd.f32 %v1743, %v1812
  %v1820 = vadd.f32 %v1744, %v1816
  %v1821 = vadd.f32 %v1745, %v1812
  %v1822 = vadd.f32 %v1746, %v1816
  %v1823 = vadd.f32 %v1747, %v1812
  %v1824 = vadd.f32 %v1748, %v1816
  %v1825 = vadd.f32 %v1749, %v1812
  %v1826 = vadd.f32 %v1750, %v1816
  %v1827 = vadd.f32 %v1751, %v1812
  %v1828 = vadd.f32 %v1752, %v1816
  %v1829 = vadd.f32 %v1753, %v1812
  %v1830 = vadd.f32 %v1754, %v1816
  %v1831 = vadd.f32 %v1755, %v1812
  %v1832 = vadd.f32 %v1756, %v1816
  %v1833 = vadd.f32 %v1757, %v1812
  %v1834 = vadd.f32 %v1758, %v1816
  %v1835 = vadd.f32 %v1759, %v1812
  %v1836 = vadd.f32 %v1760, %v1816
  %v1837 = vadd.f32 %v1761, %v1812
  %v1838 = vadd.f32 %v1762, %v1816
  %v1839 = vadd.f32 %v1763, %v1812
  %v1840 = vadd.f32 %v1764, %v1816
  %v1841 = vadd.f32 %v1765, %v1812
  %v1842 = vadd.f32 %v1766, %v1816
  %v1843 = vadd.f32 %v1767, %v1812
  %v1844 = vadd.f32 %v1768, %v1816
  %v1845 = vadd.f32 %v1769, %v1812
  %v1846 = vadd.f32 %v1770, %v1816
  %v1847 = vadd.f32 %v1771, %v1812
  %v1848 = vadd.f32 %v1772, %v1816
  %v1849 = vadd.f32 %v1773, %v1812
  %v1850 = vadd.f32 %v1774, %v1816
  %v1851 = vadd.f32 %v1775, %v1812
  %v1852 = vadd.f32 %v1776, %v1816
  %v1853 = vadd.f32 %v1777, %v1812
  %v1854 = vadd.f32 %v1778, %v1816
  %v1855 = vadd.f32 %v1779, %v1812
  %v1856 = vadd.f32 %v1780, %v1816
  %v1857 = vadd.f32 %v1781, %v1812
  %v1858 = vadd.f32 %v1782, %v1816
  %v1859 = vadd.f32 %v1783, %v1812
  %v1860 = vadd.f32 %v1784, %v1816
  %v1861 = vadd.f32 %v1785, %v1812
  %v1862 = vadd.f32 %v1786, %v1816
  %v1863 = vadd.f32 %v1787, %v1812
  %v1864 = vadd.f32 %v1788, %v1816
  %v1865 = vadd.f32 %v1789, %v1812
  %v1866 = vadd.f32 %v1790, %v1816
  %v1867 = vadd.f32 %v1791, %v1812
  %v1868 = vadd.f32 %v1792, %v1816
  %v1869 = vadd.f32 %v1793, %v1812
  %v1870 = vadd.f32 %v1794, %v1816
  %v1871 = vadd.f32 %v1795, %v1812
  %v1872 = vadd.f32 %v1796, %v1816
  %v1873 = vadd.f32 %v1797, %v1812
  %v1874 = vadd.f32 %v1798, %v1816
  %v1875 = vadd.f32 %v1799, %v1812
  %v1876 = vadd.f32 %v1800, %v1816
  %v1877 = vadd.f32 %v1801, %v1812
  %v1878 = vadd.f32 %v1802, %v1816
  %v1879 = vadd.f32 %v1803, %v1812
  %v1880 = vadd.f32 %v1804, %v1816
  %v1881 = vadd.f32 %v1805, %v1812
  %v1882 = vadd.f32 %v1806, %v1816
  %v1883 = vmax.f32 %v1819, 0.0
  %v1884 = vmax.f32 %v1820, 0.0
  %v1885 = vmax.f32 %v1821, 0.0
  %v1886 = vmax.f32 %v1822, 0.0
  %v1887 = vmax.f32 %v1823, 0.0
  %v1888 = vmax.f32 %v1824, 0.0
  %v1889 = vmax.f32 %v1825, 0.0
  %v1890 = vmax.f32 %v1826, 0.0
  %v1891 = vmax.f32 %v1827, 0.0
  %v1892 = vmax.f32 %v1828, 0.0
  %v1893 = vmax.f32 %v1829, 0.0
  %v1894 = vmax.f32 %v1830, 0.0
  %v1895 = vmax.f32 %v1831, 0.0
  %v1896 = vmax.f32 %v1832, 0.0
  %v1897 = vmax.f32 %v1833, 0.0
  %v1898 = vmax.f32 %v1834, 0.0
  %v1899 = vmax.f32 %v1835, 0.0
  %v1900 = vmax.f32 %v1836, 0.0
  %v1901 = vmax.f32 %v1837, 0.0
  %v1902 = vmax.f32 %v1838, 0.0
  %v1903 = vmax.f32 %v1839, 0.0
  %v1904 = vmax.f32 %v1840, 0.0
  %v1905 = vmax.f32 %v1841, 0.0
  %v1906 = vmax.f32 %v1842, 0.0
  %v1907 = vmax.f32 %v1843, 0.0
  %v1908 = vmax.f32 %v1844, 0.0
  %v1909 = vmax.f32 %v1845, 0.0
  %v1910 = vmax.f32 %v1846, 0.0
  %v1911 = vmax.f32 %v1847, 0.0
  %v1912 = vmax.f32 %v1848, 0.0
  %v1913 = vmax.f32 %v1849, 0.0
  %v1914 = vmax.f32 %v1850, 0.0
  %v1915 = vmax.f32 %v1851, 0.0
  %v1916 = vmax.f32 %v1852, 0.0
  %v1917 = vmax.f32 %v1853, 0.0
  %v1918 = vmax.f32 %v1854, 0.0
  %v1919 = vmax.f32 %v1855, 0.0
  %v1920 = vmax.f32 %v1856, 0.0
  %v1921 = vmax.f32 %v1857, 0.0
  %v1922 = vmax.f32 %v1858, 0.0
  %v1923 = vmax.f32 %v1859, 0.0
  %v1924 = vmax.f32 %v1860, 0.0
  %v1925 = vmax.f32 %v1861, 0.0
  %v1926 = vmax.f32 %v1862, 0.0
  %v1927 = vmax.f32 %v1863, 0.0
  %v1928 = vmax.f32 %v1864, 0.0
  %v1929 = vmax.f32 %v1865, 0.0
  %v1930 = vmax.f32 %v1866, 0.0
  %v1931 = vmax.f32 %v1867, 0.0
  %v1932 = vmax.f32 %v1868, 0.0
  %v1933 = vmax.f32 %v1869, 0.0
  %v1934 = vmax.f32 %v1870, 0.0
  %v1935 = vmax.f32 %v1871, 0.0
  %v1936 = vmax.f32 %v1872, 0.0
  %v1937 = vmax.f32 %v1873, 0.0
  %v1938 = vmax.f32 %v1874, 0.0
  %v1939 = vmax.f32 %v1875, 0.0
  %v1940 = vmax.f32 %v1876, 0.0
  %v1941 = vmax.f32 %v1877, 0.0
  %v1942 = vmax.f32 %v1878, 0.0
  %v1943 = vmax.f32 %v1879, 0.0
  %v1944 = vmax.f32 %v1880, 0.0
  %v1945 = vmax.f32 %v1881, 0.0
  %v1946 = vmax.f32 %v1882, 0.0
  %v1947 = vpack.c.bf16 %v1885, %v1883
  %v1948 = vpack.c.bf16 %v1886, %v1884
  %v1949 = vpack.c.bf16 %v1889, %v1887
  %v1950 = vpack.c.bf16 %v1890, %v1888
  %v1951 = vpack.c.bf16 %v1893, %v1891
  %v1952 = vpack.c.bf16 %v1894, %v1892
  %v1953 = vpack.c.bf16 %v1897, %v1895
  %v1954 = vpack.c.bf16 %v1898, %v1896
  %v1955 = vpack.c.bf16 %v1901, %v1899
  %v1956 = vpack.c.bf16 %v1902, %v1900
  %v1957 = vpack.c.bf16 %v1905, %v1903
  %v1958 = vpack.c.bf16 %v1906, %v1904
  %v1959 = vpack.c.bf16 %v1909, %v1907
  %v1960 = vpack.c.bf16 %v1910, %v1908
  %v1961 = vpack.c.bf16 %v1913, %v1911
  %v1962 = vpack.c.bf16 %v1914, %v1912
  %v1963 = vpack.c.bf16 %v1917, %v1915
  %v1964 = vpack.c.bf16 %v1918, %v1916
  %v1965 = vpack.c.bf16 %v1921, %v1919
  %v1966 = vpack.c.bf16 %v1922, %v1920
  %v1967 = vpack.c.bf16 %v1925, %v1923
  %v1968 = vpack.c.bf16 %v1926, %v1924
  %v1969 = vpack.c.bf16 %v1929, %v1927
  %v1970 = vpack.c.bf16 %v1930, %v1928
  %v1971 = vpack.c.bf16 %v1933, %v1931
  %v1972 = vpack.c.bf16 %v1934, %v1932
  %v1973 = vpack.c.bf16 %v1937, %v1935
  %v1974 = vpack.c.bf16 %v1938, %v1936
  %v1975 = vpack.c.bf16 %v1941, %v1939
  %v1976 = vpack.c.bf16 %v1942, %v1940
  %v1977 = vpack.c.bf16 %v1945, %v1943
  %v1978 = vpack.c.bf16 %v1946, %v1944
  %v1979 = vld [vmem:[%s3] sm:$0xff]
  %v1980 = vld [vmem:[%s3 + $0x8] sm:$0xff]
  %v1981 = vld [vmem:[%s3 + $0x10] sm:$0xff]
  %v1982 = vld [vmem:[%s3 + $0x18] sm:$0xff]
  %v1983 = vld [vmem:[%s3 + $0x20] sm:$0xff]
  %v1984 = vld [vmem:[%s3 + $0x28] sm:$0xff]
  %v1985 = vld [vmem:[%s3 + $0x30] sm:$0xff]
  %v1986 = vld [vmem:[%s3 + $0x38] sm:$0xff]
  %v1987 = vld [vmem:[%s3 + $0x40] sm:$0xff]
  %v1988 = vld [vmem:[%s3 + $0x48] sm:$0xff]
  %v1989 = vld [vmem:[%s3 + $0x50] sm:$0xff]
  %v1990 = vld [vmem:[%s3 + $0x58] sm:$0xff]
  %v1991 = vld [vmem:[%s3 + $0x60] sm:$0xff]
  %v1992 = vld [vmem:[%s3 + $0x68] sm:$0xff]
  %v1993 = vld [vmem:[%s3 + $0x70] sm:$0xff]
  %v1994 = vld [vmem:[%s3 + $0x78] sm:$0xff]
  %v2011 = vunpack.c.l.b16 %v1979
  %v2012 = vunpack.c.h.b16 %v1979
  %v2013 = vunpack.c.l.b16 %v1980
  %v2014 = vunpack.c.h.b16 %v1980
  %v2015 = vunpack.c.l.b16 %v1981
  %v2016 = vunpack.c.h.b16 %v1981
  %v2017 = vunpack.c.l.b16 %v1982
  %v2018 = vunpack.c.h.b16 %v1982
  %v2019 = vunpack.c.l.b16 %v1983
  %v2020 = vunpack.c.h.b16 %v1983
  %v2021 = vunpack.c.l.b16 %v1984
  %v2022 = vunpack.c.h.b16 %v1984
  %v2023 = vunpack.c.l.b16 %v1985
  %v2024 = vunpack.c.h.b16 %v1985
  %v2025 = vunpack.c.l.b16 %v1986
  %v2026 = vunpack.c.h.b16 %v1986
  %v2027 = vunpack.c.l.b16 %v1987
  %v2028 = vunpack.c.h.b16 %v1987
  %v2029 = vunpack.c.l.b16 %v1988
  %v2030 = vunpack.c.h.b16 %v1988
  %v2031 = vunpack.c.l.b16 %v1989
  %v2032 = vunpack.c.h.b16 %v1989
  %v2033 = vunpack.c.l.b16 %v1990
  %v2034 = vunpack.c.h.b16 %v1990
  %v2035 = vunpack.c.l.b16 %v1991
  %v2036 = vunpack.c.h.b16 %v1991
  %v2037 = vunpack.c.l.b16 %v1992
  %v2038 = vunpack.c.h.b16 %v1992
  %v2039 = vunpack.c.l.b16 %v1993
  %v2040 = vunpack.c.h.b16 %v1993
  %v2041 = vunpack.c.l.b16 %v1994
  %v2042 = vunpack.c.h.b16 %v1994
  %v2043 = vpack.c.b16 %v2013, %v2011
  %v2044 = vpack.c.b16 %v2014, %v2012
  %v2045 = vpack.c.b16 %v2017, %v2015
  %v2046 = vpack.c.b16 %v2018, %v2016
  %v2047 = vpack.c.b16 %v2021, %v2019
  %v2048 = vpack.c.b16 %v2022, %v2020
  %v2049 = vpack.c.b16 %v2025, %v2023
  %v2050 = vpack.c.b16 %v2026, %v2024
  %v2051 = vpack.c.b16 %v2029, %v2027
  %v2052 = vpack.c.b16 %v2030, %v2028
  %v2053 = vpack.c.b16 %v2033, %v2031
  %v2054 = vpack.c.b16 %v2034, %v2032
  %v2055 = vpack.c.b16 %v2037, %v2035
  %v2056 = vpack.c.b16 %v2038, %v2036
  %v2057 = vpack.c.b16 %v2041, %v2039
  %v2058 = vpack.c.b16 %v2042, %v2040
  %2075 = vmatprep.subr.bf16.mxu0 %v1948
  %2076 = vmatpush1.bf16.msra.mxu0 %v1947
  %2077 = vmatprep.subr.bf16.mxu0 %v1950
  %2078 = vmatpush1.bf16.msra.mxu0 %v1949
  %2079 = vmatprep.subr.bf16.mxu0 %v1952
  %2080 = vmatpush1.bf16.msra.mxu0 %v1951
  %2081 = vmatprep.subr.bf16.mxu0 %v1954
  %2082 = vmatpush1.bf16.msra.mxu0 %v1953
  %2083 = vmatprep.subr.bf16.mxu0 %v1956
  %2084 = vmatpush1.bf16.msra.mxu0 %v1955
  %2085 = vmatprep.subr.bf16.mxu0 %v1958
  %2086 = vmatpush1.bf16.msra.mxu0 %v1957
  %2087 = vmatprep.subr.bf16.mxu0 %v1960
  %2088 = vmatpush1.bf16.msra.mxu0 %v1959
  %2089 = vmatprep.subr.bf16.mxu0 %v1962
  %2090 = vmatpush1.bf16.msra.mxu0 %v1961
  %2091 = vmatprep.subr.bf16.mxu0 %v1964
  %2092 = vmatpush1.bf16.msra.mxu0 %v1963
  %2093 = vmatprep.subr.bf16.mxu0 %v1966
  %2094 = vmatpush1.bf16.msra.mxu0 %v1965
  %2095 = vmatprep.subr.bf16.mxu0 %v1968
  %2096 = vmatpush1.bf16.msra.mxu0 %v1967
  %2097 = vmatprep.subr.bf16.mxu0 %v1970
  %2098 = vmatpush1.bf16.msra.mxu0 %v1969
  %2099 = vmatprep.subr.bf16.mxu0 %v1972
  %2100 = vmatpush1.bf16.msra.mxu0 %v1971
  %2101 = vmatprep.subr.bf16.mxu0 %v1974
  %2102 = vmatpush1.bf16.msra.mxu0 %v1973
  %2103 = vmatprep.subr.bf16.mxu0 %v1976
  %2104 = vmatpush1.bf16.msra.mxu0 %v1975
  %2105 = vmatprep.subr.bf16.mxu0 %v1978
  %2106 = vmatpush1.bf16.msra.mxu0 %v1977
  %2107 = vmatprep.mubr.bf16.mxu0 %v2044
  %2108 = vmatmul.mubr.bf16.gmra.mrb[0].mxu0 %v2043
  %v2109 = vpop.f32.mrb[0].mxu0
  %v2110 = vadd.f32 0.0, %v2109
  %v2111 = vpop.f32.mrb[0].mxu0
  %v2112 = vadd.f32 0.0, %v2111
  %v2113 = vpop.f32.mrb[0].mxu0
  %v2114 = vadd.f32 0.0, %v2113
  %v2115 = vpop.f32.mrb[0].mxu0
  %v2116 = vadd.f32 0.0, %v2115
  %2117 = vmatprep.mubr.bf16.mxu0 %v2046
  %2118 = vmatmul.mubr.bf16.gmra.mrb[0].mxu0 %v2045
  %v2119 = vpop.f32.mrb[0].mxu0
  %v2120 = vadd.f32 0.0, %v2119
  %v2121 = vpop.f32.mrb[0].mxu0
  %v2122 = vadd.f32 0.0, %v2121
  %v2123 = vpop.f32.mrb[0].mxu0
  %v2124 = vadd.f32 0.0, %v2123
  %v2125 = vpop.f32.mrb[0].mxu0
  %v2126 = vadd.f32 0.0, %v2125
  %2127 = vmatprep.mubr.bf16.mxu0 %v2048
  %2128 = vmatmul.mubr.bf16.gmra.mrb[0].mxu0 %v2047
  %v2129 = vpop.f32.mrb[0].mxu0
  %v2130 = vadd.f32 0.0, %v2129
  %v2131 = vpop.f32.mrb[0].mxu0
  %v2132 = vadd.f32 0.0, %v2131
  %v2133 = vpop.f32.mrb[0].mxu0
  %v2134 = vadd.f32 0.0, %v2133
  %v2135 = vpop.f32.mrb[0].mxu0
  %v2136 = vadd.f32 0.0, %v2135
  %2137 = vmatprep.mubr.bf16.mxu0 %v2050
  %2138 = vmatmul.mubr.bf16.gmra.mrb[0].mxu0 %v2049
  %v2139 = vpop.f32.mrb[0].mxu0
  %v2140 = vadd.f32 0.0, %v2139
  %v2141 = vpop.f32.mrb[0].mxu0
  %v2142 = vadd.f32 0.0, %v2141
  %v2143 = vpop.f32.mrb[0].mxu0
  %v2144 = vadd.f32 0.0, %v2143
  %v2145 = vpop.f32.mrb[0].mxu0
  %v2146 = vadd.f32 0.0, %v2145
  %2147 = vmatprep.mubr.bf16.mxu0 %v2052
  %2148 = vmatmul.mubr.bf16.gmra.mrb[0].mxu0 %v2051
  %v2149 = vpop.f32.mrb[0].mxu0
  %v2150 = vadd.f32 0.0, %v2149
  %v2151 = vpop.f32.mrb[0].mxu0
  %v2152 = vadd.f32 0.0, %v2151
  %v2153 = vpop.f32.mrb[0].mxu0
  %v2154 = vadd.f32 0.0, %v2153
  %v2155 = vpop.f32.mrb[0].mxu0
  %v2156 = vadd.f32 0.0, %v2155
  %2157 = vmatprep.mubr.bf16.mxu0 %v2054
  %2158 = vmatmul.mubr.bf16.gmra.mrb[0].mxu0 %v2053
  %v2159 = vpop.f32.mrb[0].mxu0
  %v2160 = vadd.f32 0.0, %v2159
  %v2161 = vpop.f32.mrb[0].mxu0
  %v2162 = vadd.f32 0.0, %v2161
  %v2163 = vpop.f32.mrb[0].mxu0
  %v2164 = vadd.f32 0.0, %v2163
  %v2165 = vpop.f32.mrb[0].mxu0
  %v2166 = vadd.f32 0.0, %v2165
  %2167 = vmatprep.mubr.bf16.mxu0 %v2056
  %2168 = vmatmul.mubr.bf16.gmra.mrb[0].mxu0 %v2055
  %v2169 = vpop.f32.mrb[0].mxu0
  %v2170 = vadd.f32 0.0, %v2169
  %v2171 = vpop.f32.mrb[0].mxu0
  %v2172 = vadd.f32 0.0, %v2171
  %v2173 = vpop.f32.mrb[0].mxu0
  %v2174 = vadd.f32 0.0, %v2173
  %v2175 = vpop.f32.mrb[0].mxu0
  %v2176 = vadd.f32 0.0, %v2175
  %2177 = vmatprep.mubr.bf16.mxu0 %v2058
  %2178 = vmatmul.mubr.bf16.gmra.mrb[0].mxu0 %v2057
  %v2179 = vpop.f32.mrb[0].mxu0
  %v2180 = vadd.f32 0.0, %v2179
  %v2181 = vpop.f32.mrb[0].mxu0
  %v2182 = vadd.f32 0.0, %v2181
  %v2183 = vpop.f32.mrb[0].mxu0
  %v2184 = vadd.f32 0.0, %v2183
  %v2185 = vpop.f32.mrb[0].mxu0
  %v2186 = vadd.f32 0.0, %v2185
  %2187 = vdwg.mxu0
  %v2188 = vpack.c.bf16 %v2114, %v2110
  %v2189 = vpack.c.bf16 %v2116, %v2112
  %v2190 = vpack.c.bf16 %v2124, %v2120
  %v2191 = vpack.c.bf16 %v2126, %v2122
  %v2192 = vpack.c.bf16 %v2134, %v2130
  %v2193 = vpack.c.bf16 %v2136, %v2132
  %v2194 = vpack.c.bf16 %v2144, %v2140
  %v2195 = vpack.c.bf16 %v2146, %v2142
  %v2196 = vpack.c.bf16 %v2154, %v2150
  %v2197 = vpack.c.bf16 %v2156, %v2152
  %v2198 = vpack.c.bf16 %v2164, %v2160
  %v2199 = vpack.c.bf16 %v2166, %v2162
  %v2200 = vpack.c.bf16 %v2174, %v2170
  %v2201 = vpack.c.bf16 %v2176, %v2172
  %v2202 = vpack.c.bf16 %v2184, %v2180
  %v2203 = vpack.c.bf16 %v2186, %v2182
  %v2204 = vld [vmem:[%s4] sm:$0xff]
  %v2205 = vld [vmem:[%s4 + $0x8] sm:$0xff]
  %v2206 = vld [vmem:[%s4 + $0x10] sm:$0xff]
  %v2207 = vld [vmem:[%s4 + $0x18] sm:$0xff]
  %v2208 = vld [vmem:[%s4 + $0x20] sm:$0xff]
  %v2209 = vld [vmem:[%s4 + $0x28] sm:$0xff]
  %v2210 = vld [vmem:[%s4 + $0x30] sm:$0xff]
  %v2211 = vld [vmem:[%s4 + $0x38] sm:$0xff]
  %v2212 = vld [vmem:[%s4 + $0x40] sm:$0xff]
  %v2213 = vld [vmem:[%s4 + $0x48] sm:$0xff]
  %v2214 = vld [vmem:[%s4 + $0x50] sm:$0xff]
  %v2215 = vld [vmem:[%s4 + $0x58] sm:$0xff]
  %v2216 = vld [vmem:[%s4 + $0x60] sm:$0xff]
  %v2217 = vld [vmem:[%s4 + $0x68] sm:$0xff]
  %v2218 = vld [vmem:[%s4 + $0x70] sm:$0xff]
  %v2219 = vld [vmem:[%s4 + $0x78] sm:$0xff]
  %v2220 = vld [vmem:[%s4 + $0x80] sm:$0xff]
  %v2221 = vld [vmem:[%s4 + $0x88] sm:$0xff]
  %v2222 = vld [vmem:[%s4 + $0x90] sm:$0xff]
  %v2223 = vld [vmem:[%s4 + $0x98] sm:$0xff]
  %v2224 = vld [vmem:[%s4 + $0xa0] sm:$0xff]
  %s2225 = scalar_lea.vmem %s3, 128
  %v2226 = vld [vmem:[%s2225] sm:$0xff]
  %v2227 = vld [vmem:[%s2225 + $0x8] sm:$0xff]
  %v2228 = vld [vmem:[%s2225 + $0x10] sm:$0xff]
  %v2229 = vld [vmem:[%s2225 + $0x18] sm:$0xff]
  %v2230 = vld [vmem:[%s2225 + $0x20] sm:$0xff]
  %v2231 = vld [vmem:[%s2225 + $0x28] sm:$0xff]
  %v2232 = vld [vmem:[%s2225 + $0x30] sm:$0xff]
  %v2233 = vld [vmem:[%s2225 + $0x38] sm:$0xff]
  %v2234 = vld [vmem:[%s2225 + $0x40] sm:$0xff]
  %v2235 = vld [vmem:[%s2225 + $0x48] sm:$0xff]
  %v2236 = vld [vmem:[%s2225 + $0x50] sm:$0xff]
  %v2237 = vld [vmem:[%s2225 + $0x58] sm:$0xff]
  %v2238 = vld [vmem:[%s2225 + $0x60] sm:$0xff]
  %v2239 = vld [vmem:[%s2225 + $0x68] sm:$0xff]
  %v2240 = vld [vmem:[%s2225 + $0x70] sm:$0xff]
  %v2241 = vld [vmem:[%s2225 + $0x78] sm:$0xff]
  %v2258 = vunpack.c.l.b16 %v2226
  %v2259 = vunpack.c.h.b16 %v2226
  %v2260 = vunpack.c.l.b16 %v2227
  %v2261 = vunpack.c.h.b16 %v2227
  %v2262 = vunpack.c.l.b16 %v2228
  %v2263 = vunpack.c.h.b16 %v2228
  %v2264 = vunpack.c.l.b16 %v2229
  %v2265 = vunpack.c.h.b16 %v2229
  %v2266 = vunpack.c.l.b16 %v2230
  %v2267 = vunpack.c.h.b16 %v2230
  %v2268 = vunpack.c.l.b16 %v2231
  %v2269 = vunpack.c.h.b16 %v2231
  %v2270 = vunpack.c.l.b16 %v2232
  %v2271 = vunpack.c.h.b16 %v2232
  %v2272 = vunpack.c.l.b16 %v2233
  %v2273 = vunpack.c.h.b16 %v2233
  %v2274 = vunpack.c.l.b16 %v2234
  %v2275 = vunpack.c.h.b16 %v2234
  %v2276 = vunpack.c.l.b16 %v2235
  %v2277 = vunpack.c.h.b16 %v2235
  %v2278 = vunpack.c.l.b16 %v2236
  %v2279 = vunpack.c.h.b16 %v2236
  %v2280 = vunpack.c.l.b16 %v2237
  %v2281 = vunpack.c.h.b16 %v2237
  %v2282 = vunpack.c.l.b16 %v2238
  %v2283 = vunpack.c.h.b16 %v2238
  %v2284 = vunpack.c.l.b16 %v2239
  %v2285 = vunpack.c.h.b16 %v2239
  %v2286 = vunpack.c.l.b16 %v2240
  %v2287 = vunpack.c.h.b16 %v2240
  %v2288 = vunpack.c.l.b16 %v2241
  %v2289 = vunpack.c.h.b16 %v2241
  %v2290 = vpack.c.b16 %v2260, %v2258
  %v2291 = vpack.c.b16 %v2261, %v2259
  %v2292 = vpack.c.b16 %v2264, %v2262
  %v2293 = vpack.c.b16 %v2265, %v2263
  %v2294 = vpack.c.b16 %v2268, %v2266
  %v2295 = vpack.c.b16 %v2269, %v2267
  %v2296 = vpack.c.b16 %v2272, %v2270
  %v2297 = vpack.c.b16 %v2273, %v2271
  %v2298 = vpack.c.b16 %v2276, %v2274
  %v2299 = vpack.c.b16 %v2277, %v2275
  %v2300 = vpack.c.b16 %v2280, %v2278
  %v2301 = vpack.c.b16 %v2281, %v2279
  %v2302 = vpack.c.b16 %v2284, %v2282
  %v2303 = vpack.c.b16 %v2285, %v2283
  %v2304 = vpack.c.b16 %v2288, %v2286
  %v2305 = vpack.c.b16 %v2289, %v2287
  %2322 = vmatprep.subr.bf16.mxu0 %v1948
  %2323 = vmatpush1.bf16.msra.mxu0 %v1947
  %2324 = vmatprep.subr.bf16.mxu0 %v1950
  %2325 = vmatpush1.bf16.msra.mxu0 %v1949
  %2326 = vmatprep.subr.bf16.mxu0 %v1952
  %2327 = vmatpush1.bf16.msra.mxu0 %v1951
  %2328 = vmatprep.subr.bf16.mxu0 %v1954
  %2329 = vmatpush1.bf16.msra.mxu0 %v1953
  %2330 = vmatprep.subr.bf16.mxu0 %v1956
  %2331 = vmatpush1.bf16.msra.mxu0 %v1955
  %2332 = vmatprep.subr.bf16.mxu0 %v1958
  %2333 = vmatpush1.bf16.msra.mxu0 %v1957
  %2334 = vmatprep.subr.bf16.mxu0 %v1960
  %2335 = vmatpush1.bf16.msra.mxu0 %v1959
  %2336 = vmatprep.subr.bf16.mxu0 %v1962
  %2337 = vmatpush1.bf16.msra.mxu0 %v1961
  %2338 = vmatprep.subr.bf16.mxu0 %v1964
  %2339 = vmatpush1.bf16.msra.mxu0 %v1963
  %2340 = vmatprep.subr.bf16.mxu0 %v1966
  %2341 = vmatpush1.bf16.msra.mxu0 %v1965
  %2342 = vmatprep.subr.bf16.mxu0 %v1968
  %2343 = vmatpush1.bf16.msra.mxu0 %v1967
  %2344 = vmatprep.subr.bf16.mxu0 %v1970
  %2345 = vmatpush1.bf16.msra.mxu0 %v1969
  %2346 = vmatprep.subr.bf16.mxu0 %v1972
  %2347 = vmatpush1.bf16.msra.mxu0 %v1971
  %2348 = vmatprep.subr.bf16.mxu0 %v1974
  %2349 = vmatpush1.bf16.msra.mxu0 %v1973
  %2350 = vmatprep.subr.bf16.mxu0 %v1976
  %2351 = vmatpush1.bf16.msra.mxu0 %v1975
  %2352 = vmatprep.subr.bf16.mxu0 %v1978
  %2353 = vmatpush1.bf16.msra.mxu0 %v1977
  %2354 = vmatprep.mubr.bf16.mxu0 %v2291
  %2355 = vmatmul.mubr.bf16.gmra.mrb[0].mxu0 %v2290
  %v2356 = vpop.f32.mrb[0].mxu0
  %v2357 = vadd.f32 0.0, %v2356
  %v2358 = vpop.f32.mrb[0].mxu0
  %v2359 = vadd.f32 0.0, %v2358
  %v2360 = vpop.f32.mrb[0].mxu0
  %v2361 = vadd.f32 0.0, %v2360
  %v2362 = vpop.f32.mrb[0].mxu0
  %v2363 = vadd.f32 0.0, %v2362
  %2364 = vmatprep.mubr.bf16.mxu0 %v2293
  %2365 = vmatmul.mubr.bf16.gmra.mrb[0].mxu0 %v2292
  %v2366 = vpop.f32.mrb[0].mxu0
  %v2367 = vadd.f32 0.0, %v2366
  %v2368 = vpop.f32.mrb[0].mxu0
  %v2369 = vadd.f32 0.0, %v2368
  %v2370 = vpop.f32.mrb[0].mxu0
  %v2371 = vadd.f32 0.0, %v2370
  %v2372 = vpop.f32.mrb[0].mxu0
  %v2373 = vadd.f32 0.0, %v2372
  %2374 = vmatprep.mubr.bf16.mxu0 %v2295
  %2375 = vmatmul.mubr.bf16.gmra.mrb[0].mxu0 %v2294
  %v2376 = vpop.f32.mrb[0].mxu0
  %v2377 = vadd.f32 0.0, %v2376
  %v2378 = vpop.f32.mrb[0].mxu0
  %v2379 = vadd.f32 0.0, %v2378
  %v2380 = vpop.f32.mrb[0].mxu0
  %v2381 = vadd.f32 0.0, %v2380
  %v2382 = vpop.f32.mrb[0].mxu0
  %v2383 = vadd.f32 0.0, %v2382
  %2384 = vmatprep.mubr.bf16.mxu0 %v2297
  %2385 = vmatmul.mubr.bf16.gmra.mrb[0].mxu0 %v2296
  %v2386 = vpop.f32.mrb[0].mxu0
  %v2387 = vadd.f32 0.0, %v2386
  %v2388 = vpop.f32.mrb[0].mxu0
  %v2389 = vadd.f32 0.0, %v2388
  %v2390 = vpop.f32.mrb[0].mxu0
  %v2391 = vadd.f32 0.0, %v2390
  %v2392 = vpop.f32.mrb[0].mxu0
  %v2393 = vadd.f32 0.0, %v2392
  %2394 = vmatprep.mubr.bf16.mxu0 %v2299
  %2395 = vmatmul.mubr.bf16.gmra.mrb[0].mxu0 %v2298
  %v2396 = vpop.f32.mrb[0].mxu0
  %v2397 = vadd.f32 0.0, %v2396
  %v2398 = vpop.f32.mrb[0].mxu0
  %v2399 = vadd.f32 0.0, %v2398
  %v2400 = vpop.f32.mrb[0].mxu0
  %v2401 = vadd.f32 0.0, %v2400
  %v2402 = vpop.f32.mrb[0].mxu0
  %v2403 = vadd.f32 0.0, %v2402
  %2404 = vmatprep.mubr.bf16.mxu0 %v2301
  %2405 = vmatmul.mubr.bf16.gmra.mrb[0].mxu0 %v2300
  %v2406 = vpop.f32.mrb[0].mxu0
  %v2407 = vadd.f32 0.0, %v2406
  %v2408 = vpop.f32.mrb[0].mxu0
  %v2409 = vadd.f32 0.0, %v2408
  %v2410 = vpop.f32.mrb[0].mxu0
  %v2411 = vadd.f32 0.0, %v2410
  %v2412 = vpop.f32.mrb[0].mxu0
  %v2413 = vadd.f32 0.0, %v2412
  %2414 = vmatprep.mubr.bf16.mxu0 %v2303
  %2415 = vmatmul.mubr.bf16.gmra.mrb[0].mxu0 %v2302
  %v2416 = vpop.f32.mrb[0].mxu0
  %v2417 = vadd.f32 0.0, %v2416
  %v2418 = vpop.f32.mrb[0].mxu0
  %v2419 = vadd.f32 0.0, %v2418
  %v2420 = vpop.f32.mrb[0].mxu0
  %v2421 = vadd.f32 0.0, %v2420
  %v2422 = vpop.f32.mrb[0].mxu0
  %v2423 = vadd.f32 0.0, %v2422
  %2424 = vmatprep.mubr.bf16.mxu0 %v2305
  %2425 = vmatmul.mubr.bf16.gmra.mrb[0].mxu0 %v2304
  %v2426 = vpop.f32.mrb[0].mxu0
  %v2427 = vadd.f32 0.0, %v2426
  %v2428 = vpop.f32.mrb[0].mxu0
  %v2429 = vadd.f32 0.0, %v2428
  %v2430 = vpop.f32.mrb[0].mxu0
  %v2431 = vadd.f32 0.0, %v2430
  %v2432 = vpop.f32.mrb[0].mxu0
  %v2433 = vadd.f32 0.0, %v2432
  %2434 = vdwg.mxu0
  %v2435 = vpack.c.bf16 %v2361, %v2357
  %v2436 = vpack.c.bf16 %v2363, %v2359
  %v2437 = vpack.c.bf16 %v2371, %v2367
  %v2438 = vpack.c.bf16 %v2373, %v2369
  %v2439 = vpack.c.bf16 %v2381, %v2377
  %v2440 = vpack.c.bf16 %v2383, %v2379
  %v2441 = vpack.c.bf16 %v2391, %v2387
  %v2442 = vpack.c.bf16 %v2393, %v2389
  %v2443 = vpack.c.bf16 %v2401, %v2397
  %v2444 = vpack.c.bf16 %v2403, %v2399
  %v2445 = vpack.c.bf16 %v2411, %v2407
  %v2446 = vpack.c.bf16 %v2413, %v2409
  %v2447 = vpack.c.bf16 %v2421, %v2417
  %v2448 = vpack.c.bf16 %v2423, %v2419
  %v2449 = vpack.c.bf16 %v2431, %v2427
  %v2450 = vpack.c.bf16 %v2433, %v2429
  %s2451 = scalar_lea.vmem %s4, 168
  %v2452 = vld [vmem:[%s2451] sm:$0xff]
  %v2453 = vld [vmem:[%s2451 + $0x8] sm:$0xff]
  %v2454 = vld [vmem:[%s2451 + $0x10] sm:$0xff]
  %v2455 = vld [vmem:[%s2451 + $0x18] sm:$0xff]
  %v2456 = vld [vmem:[%s2451 + $0x20] sm:$0xff]
  %v2457 = vld [vmem:[%s2451 + $0x28] sm:$0xff]
  %v2458 = vld [vmem:[%s2451 + $0x30] sm:$0xff]
  %v2459 = vld [vmem:[%s2451 + $0x38] sm:$0xff]
  %v2460 = vld [vmem:[%s2451 + $0x40] sm:$0xff]
  %v2461 = vld [vmem:[%s2451 + $0x48] sm:$0xff]
  %v2462 = vld [vmem:[%s2451 + $0x50] sm:$0xff]
  %v2463 = vld [vmem:[%s2451 + $0x58] sm:$0xff]
  %v2464 = vld [vmem:[%s2451 + $0x60] sm:$0xff]
  %v2465 = vld [vmem:[%s2451 + $0x68] sm:$0xff]
  %v2466 = vld [vmem:[%s2451 + $0x70] sm:$0xff]
  %v2467 = vld [vmem:[%s2451 + $0x78] sm:$0xff]
  %v2468 = vld [vmem:[%s2451 + $0x80] sm:$0xff]
  %v2469 = vld [vmem:[%s2451 + $0x88] sm:$0xff]
  %v2470 = vld [vmem:[%s2451 + $0x90] sm:$0xff]
  %v2471 = vld [vmem:[%s2451 + $0x98] sm:$0xff]
  %v2472 = vld [vmem:[%s2451 + $0xa0] sm:$0xff]
  %v2494 = vunpack.c.l.b16 %v2452
  %v2495 = vunpack.c.h.b16 %v2452
  %v2496 = vunpack.c.l.b16 %v2453
  %v2497 = vunpack.c.h.b16 %v2453
  %v2498 = vunpack.c.l.b16 %v2454
  %v2499 = vunpack.c.h.b16 %v2454
  %v2500 = vunpack.c.l.b16 %v2455
  %v2501 = vunpack.c.h.b16 %v2455
  %v2502 = vunpack.c.l.b16 %v2456
  %v2503 = vunpack.c.h.b16 %v2456
  %v2504 = vunpack.c.l.b16 %v2457
  %v2505 = vunpack.c.h.b16 %v2457
  %v2506 = vunpack.c.l.b16 %v2458
  %v2507 = vunpack.c.h.b16 %v2458
  %v2508 = vunpack.c.l.b16 %v2459
  %v2509 = vunpack.c.h.b16 %v2459
  %v2510 = vunpack.c.l.b16 %v2460
  %v2511 = vunpack.c.h.b16 %v2460
  %v2512 = vunpack.c.l.b16 %v2461
  %v2513 = vunpack.c.h.b16 %v2461
  %v2514 = vunpack.c.l.b16 %v2462
  %v2515 = vunpack.c.h.b16 %v2462
  %v2516 = vunpack.c.l.b16 %v2463
  %v2517 = vunpack.c.h.b16 %v2463
  %v2518 = vunpack.c.l.b16 %v2464
  %v2519 = vunpack.c.h.b16 %v2464
  %v2520 = vunpack.c.l.b16 %v2465
  %v2521 = vunpack.c.h.b16 %v2465
  %v2522 = vunpack.c.l.b16 %v2466
  %v2523 = vunpack.c.h.b16 %v2466
  %v2524 = vunpack.c.l.b16 %v2467
  %v2525 = vunpack.c.h.b16 %v2467
  %v2526 = vunpack.c.l.b16 %v2468
  %v2527 = vunpack.c.h.b16 %v2468
  %v2528 = vunpack.c.l.b16 %v2469
  %v2529 = vunpack.c.h.b16 %v2469
  %v2530 = vunpack.c.l.b16 %v2470
  %v2531 = vunpack.c.h.b16 %v2470
  %v2532 = vunpack.c.l.b16 %v2471
  %v2533 = vunpack.c.h.b16 %v2471
  %v2534 = vunpack.c.l.b16 %v2472
  %v2535 = vunpack.c.h.b16 %v2472
  %v2536 = vpack.c.b16 %v2496, %v2494
  %v2537 = vpack.c.b16 %v2497, %v2495
  %v2538 = vpack.c.b16 %v2500, %v2498
  %v2539 = vpack.c.b16 %v2501, %v2499
  %v2540 = vpack.c.b16 %v2504, %v2502
  %v2541 = vpack.c.b16 %v2505, %v2503
  %v2542 = vpack.c.b16 %v2508, %v2506
  %v2543 = vpack.c.b16 %v2509, %v2507
  %v2544 = vpack.c.b16 %v2512, %v2510
  %v2545 = vpack.c.b16 %v2513, %v2511
  %v2546 = vpack.c.b16 %v2516, %v2514
  %v2547 = vpack.c.b16 %v2517, %v2515
  %v2548 = vpack.c.b16 %v2520, %v2518
  %v2549 = vpack.c.b16 %v2521, %v2519
  %v2550 = vpack.c.b16 %v2524, %v2522
  %v2551 = vpack.c.b16 %v2525, %v2523
  %v2552 = vpack.c.b16 %v2528, %v2526
  %v2553 = vpack.c.b16 %v2529, %v2527
  %v2554 = vpack.c.b16 %v2532, %v2530
  %v2555 = vpack.c.b16 %v2533, %v2531
  %v2556 = vpack.c.b16 %v2534, %v2534
  %v2557 = vpack.c.b16 %v2535, %v2535
  %vm2578 = vcmask 326656
  %v2580 = vsel %vm2578, %v2436, 0
  %v2583 = vsel %vm2578, %v2438, 0
  %v2586 = vsel %vm2578, %v2440, 0
  %v2589 = vsel %vm2578, %v2442, 0
  %v2592 = vsel %vm2578, %v2444, 0
  %v2595 = vsel %vm2578, %v2446, 0
  %v2598 = vsel %vm2578, %v2448, 0
  %v2601 = vsel %vm2578, %v2450, 0
  %vm2603 = vcmask 1043456
  %v2605 = vsel %vm2603, %v2556, 0
  %v2608 = vsel %vm2603, %v2557, 0
  %2610 = vmatprep.subr.bf16.mxu0 %v2537
  %2611 = vmatpush1.bf16.msra.mxu0 %v2536
  %2612 = vmatprep.subr.bf16.mxu0 %v2539
  %2613 = vmatpush1.bf16.msra.mxu0 %v2538
  %2614 = vmatprep.subr.bf16.mxu0 %v2541
  %2615 = vmatpush1.bf16.msra.mxu0 %v2540
  %2616 = vmatprep.subr.bf16.mxu0 %v2543
  %2617 = vmatpush1.bf16.msra.mxu0 %v2542
  %2618 = vmatprep.subr.bf16.mxu0 %v2545
  %2619 = vmatpush1.bf16.msra.mxu0 %v2544
  %2620 = vmatprep.subr.bf16.mxu0 %v2547
  %2621 = vmatpush1.bf16.msra.mxu0 %v2546
  %2622 = vmatprep.subr.bf16.mxu0 %v2549
  %2623 = vmatpush1.bf16.msra.mxu0 %v2548
  %2624 = vmatprep.subr.bf16.mxu0 %v2551
  %2625 = vmatpush1.bf16.msra.mxu0 %v2550
  %2626 = vmatprep.subr.bf16.mxu0 %v2553
  %2627 = vmatpush1.bf16.msra.mxu0 %v2552
  %2628 = vmatprep.subr.bf16.mxu0 %v2555
  %2629 = vmatpush1.bf16.msra.mxu0 %v2554
  %2630 = vmatprep.subr.bf16.mxu0 %v2608
  %2631 = vmatpush1.bf16.msra.mxu0 %v2605
  %2632 = vmatprep.subr.bf16.mxu0 0
  %2633 = vmatpush1.bf16.msra.mxu0 0
  %2634 = vmatprep.subr.bf16.mxu0 0
  %2635 = vmatpush1.bf16.msra.mxu0 0
  %2636 = vmatprep.subr.bf16.mxu0 0
  %2637 = vmatpush1.bf16.msra.mxu0 0
  %2638 = vmatprep.subr.bf16.mxu0 0
  %2639 = vmatpush1.bf16.msra.mxu0 0
  %2640 = vmatprep.subr.bf16.mxu0 0
  %2641 = vmatpush1.bf16.msra.mxu0 0
  %2642 = vmatprep.mubr.bf16.mxu0 %v2580
  %2643 = vmatmul.mubr.bf16.gmra.mrb[0].mxu0 %v2435
  %v2644 = vpop.f32.mrb[0].mxu0
  %v2645 = vadd.f32 0.0, %v2644
  %v2646 = vpop.f32.mrb[0].mxu0
  %v2647 = vadd.f32 0.0, %v2646
  %v2648 = vpop.f32.mrb[0].mxu0
  %v2649 = vadd.f32 0.0, %v2648
  %v2650 = vpop.f32.mrb[0].mxu0
  %v2651 = vadd.f32 0.0, %v2650
  %2652 = vmatprep.mubr.bf16.mxu0 %v2583
  %2653 = vmatmul.mubr.bf16.gmra.mrb[0].mxu0 %v2437
  %v2654 = vpop.f32.mrb[0].mxu0
  %v2655 = vadd.f32 0.0, %v2654
  %v2656 = vpop.f32.mrb[0].mxu0
  %v2657 = vadd.f32 0.0, %v2656
  %v2658 = vpop.f32.mrb[0].mxu0
  %v2659 = vadd.f32 0.0, %v2658
  %v2660 = vpop.f32.mrb[0].mxu0
  %v2661 = vadd.f32 0.0, %v2660
  %2662 = vmatprep.mubr.bf16.mxu0 %v2586
  %2663 = vmatmul.mubr.bf16.gmra.mrb[0].mxu0 %v2439
  %v2664 = vpop.f32.mrb[0].mxu0
  %v2665 = vadd.f32 0.0, %v2664
  %v2666 = vpop.f32.mrb[0].mxu0
  %v2667 = vadd.f32 0.0, %v2666
  %v2668 = vpop.f32.mrb[0].mxu0
  %v2669 = vadd.f32 0.0, %v2668
  %v2670 = vpop.f32.mrb[0].mxu0
  %v2671 = vadd.f32 0.0, %v2670
  %2672 = vmatprep.mubr.bf16.mxu0 %v2589
  %2673 = vmatmul.mubr.bf16.gmra.mrb[0].mxu0 %v2441
  %v2674 = vpop.f32.mrb[0].mxu0
  %v2675 = vadd.f32 0.0, %v2674
  %v2676 = vpop.f32.mrb[0].mxu0
  %v2677 = vadd.f32 0.0, %v2676
  %v2678 = vpop.f32.mrb[0].mxu0
  %v2679 = vadd.f32 0.0, %v2678
  %v2680 = vpop.f32.mrb[0].mxu0
  %v2681 = vadd.f32 0.0, %v2680
  %2682 = vmatprep.mubr.bf16.mxu0 %v2592
  %2683 = vmatmul.mubr.bf16.gmra.mrb[0].mxu0 %v2443
  %v2684 = vpop.f32.mrb[0].mxu0
  %v2685 = vadd.f32 0.0, %v2684
  %v2686 = vpop.f32.mrb[0].mxu0
  %v2687 = vadd.f32 0.0, %v2686
  %v2688 = vpop.f32.mrb[0].mxu0
  %v2689 = vadd.f32 0.0, %v2688
  %v2690 = vpop.f32.mrb[0].mxu0
  %v2691 = vadd.f32 0.0, %v2690
  %2692 = vmatprep.mubr.bf16.mxu0 %v2595
  %2693 = vmatmul.mubr.bf16.gmra.mrb[0].mxu0 %v2445
  %v2694 = vpop.f32.mrb[0].mxu0
  %v2695 = vadd.f32 0.0, %v2694
  %v2696 = vpop.f32.mrb[0].mxu0
  %v2697 = vadd.f32 0.0, %v2696
  %v2698 = vpop.f32.mrb[0].mxu0
  %v2699 = vadd.f32 0.0, %v2698
  %v2700 = vpop.f32.mrb[0].mxu0
  %v2701 = vadd.f32 0.0, %v2700
  %2702 = vmatprep.mubr.bf16.mxu0 %v2598
  %2703 = vmatmul.mubr.bf16.gmra.mrb[0].mxu0 %v2447
  %v2704 = vpop.f32.mrb[0].mxu0
  %v2705 = vadd.f32 0.0, %v2704
  %v2706 = vpop.f32.mrb[0].mxu0
  %v2707 = vadd.f32 0.0, %v2706
  %v2708 = vpop.f32.mrb[0].mxu0
  %v2709 = vadd.f32 0.0, %v2708
  %v2710 = vpop.f32.mrb[0].mxu0
  %v2711 = vadd.f32 0.0, %v2710
  %2712 = vmatprep.mubr.bf16.mxu0 %v2601
  %2713 = vmatmul.mubr.bf16.gmra.mrb[0].mxu0 %v2449
  %v2714 = vpop.f32.mrb[0].mxu0
  %v2715 = vadd.f32 0.0, %v2714
  %v2716 = vpop.f32.mrb[0].mxu0
  %v2717 = vadd.f32 0.0, %v2716
  %v2718 = vpop.f32.mrb[0].mxu0
  %v2719 = vadd.f32 0.0, %v2718
  %v2720 = vpop.f32.mrb[0].mxu0
  %v2721 = vadd.f32 0.0, %v2720
  %2722 = vdwg.mxu0
  %v2744 = vunpack.c.l.b16 %v2204
  %v2745 = vunpack.c.h.b16 %v2204
  %v2746 = vunpack.c.l.b16 %v2205
  %v2747 = vunpack.c.h.b16 %v2205
  %v2748 = vunpack.c.l.b16 %v2206
  %v2749 = vunpack.c.h.b16 %v2206
  %v2750 = vunpack.c.l.b16 %v2207
  %v2751 = vunpack.c.h.b16 %v2207
  %v2752 = vunpack.c.l.b16 %v2208
  %v2753 = vunpack.c.h.b16 %v2208
  %v2754 = vunpack.c.l.b16 %v2209
  %v2755 = vunpack.c.h.b16 %v2209
  %v2756 = vunpack.c.l.b16 %v2210
  %v2757 = vunpack.c.h.b16 %v2210
  %v2758 = vunpack.c.l.b16 %v2211
  %v2759 = vunpack.c.h.b16 %v2211
  %v2760 = vunpack.c.l.b16 %v2212
  %v2761 = vunpack.c.h.b16 %v2212
  %v2762 = vunpack.c.l.b16 %v2213
  %v2763 = vunpack.c.h.b16 %v2213
  %v2764 = vunpack.c.l.b16 %v2214
  %v2765 = vunpack.c.h.b16 %v2214
  %v2766 = vunpack.c.l.b16 %v2215
  %v2767 = vunpack.c.h.b16 %v2215
  %v2768 = vunpack.c.l.b16 %v2216
  %v2769 = vunpack.c.h.b16 %v2216
  %v2770 = vunpack.c.l.b16 %v2217
  %v2771 = vunpack.c.h.b16 %v2217
  %v2772 = vunpack.c.l.b16 %v2218
  %v2773 = vunpack.c.h.b16 %v2218
  %v2774 = vunpack.c.l.b16 %v2219
  %v2775 = vunpack.c.h.b16 %v2219
  %v2776 = vunpack.c.l.b16 %v2220
  %v2777 = vunpack.c.h.b16 %v2220
  %v2778 = vunpack.c.l.b16 %v2221
  %v2779 = vunpack.c.h.b16 %v2221
  %v2780 = vunpack.c.l.b16 %v2222
  %v2781 = vunpack.c.h.b16 %v2222
  %v2782 = vunpack.c.l.b16 %v2223
  %v2783 = vunpack.c.h.b16 %v2223
  %v2784 = vunpack.c.l.b16 %v2224
  %v2785 = vunpack.c.h.b16 %v2224
  %v2786 = vpack.c.b16 %v2746, %v2744
  %v2787 = vpack.c.b16 %v2747, %v2745
  %v2788 = vpack.c.b16 %v2750, %v2748
  %v2789 = vpack.c.b16 %v2751, %v2749
  %v2790 = vpack.c.b16 %v2754, %v2752
  %v2791 = vpack.c.b16 %v2755, %v2753
  %v2792 = vpack.c.b16 %v2758, %v2756
  %v2793 = vpack.c.b16 %v2759, %v2757
  %v2794 = vpack.c.b16 %v2762, %v2760
  %v2795 = vpack.c.b16 %v2763, %v2761
  %v2796 = vpack.c.b16 %v2766, %v2764
  %v2797 = vpack.c.b16 %v2767, %v2765
  %v2798 = vpack.c.b16 %v2770, %v2768
  %v2799 = vpack.c.b16 %v2771, %v2769
  %v2800 = vpack.c.b16 %v2774, %v2772
  %v2801 = vpack.c.b16 %v2775, %v2773
  %v2802 = vpack.c.b16 %v2778, %v2776
  %v2803 = vpack.c.b16 %v2779, %v2777
  %v2804 = vpack.c.b16 %v2782, %v2780
  %v2805 = vpack.c.b16 %v2783, %v2781
  %v2806 = vpack.c.b16 %v2784, %v2784
  %v2807 = vpack.c.b16 %v2785, %v2785
  %v2829 = vsel %vm2578, %v2189, 0
  %v2832 = vsel %vm2578, %v2191, 0
  %v2835 = vsel %vm2578, %v2193, 0
  %v2838 = vsel %vm2578, %v2195, 0
  %v2841 = vsel %vm2578, %v2197, 0
  %v2844 = vsel %vm2578, %v2199, 0
  %v2847 = vsel %vm2578, %v2201, 0
  %v2850 = vsel %vm2578, %v2203, 0
  %v2853 = vsel %vm2603, %v2806, 0
  %v2856 = vsel %vm2603, %v2807, 0
  %2858 = vmatprep.subr.bf16.mxu0 %v2787
  %2859 = vmatpush1.bf16.msra.mxu0 %v2786
  %2860 = vmatprep.subr.bf16.mxu0 %v2789
  %2861 = vmatpush1.bf16.msra.mxu0 %v2788
  %2862 = vmatprep.subr.bf16.mxu0 %v2791
  %2863 = vmatpush1.bf16.msra.mxu0 %v2790
  %2864 = vmatprep.subr.bf16.mxu0 %v2793
  %2865 = vmatpush1.bf16.msra.mxu0 %v2792
  %2866 = vmatprep.subr.bf16.mxu0 %v2795
  %2867 = vmatpush1.bf16.msra.mxu0 %v2794
  %2868 = vmatprep.subr.bf16.mxu0 %v2797
  %2869 = vmatpush1.bf16.msra.mxu0 %v2796
  %2870 = vmatprep.subr.bf16.mxu0 %v2799
  %2871 = vmatpush1.bf16.msra.mxu0 %v2798
  %2872 = vmatprep.subr.bf16.mxu0 %v2801
  %2873 = vmatpush1.bf16.msra.mxu0 %v2800
  %2874 = vmatprep.subr.bf16.mxu0 %v2803
  %2875 = vmatpush1.bf16.msra.mxu0 %v2802
  %2876 = vmatprep.subr.bf16.mxu0 %v2805
  %2877 = vmatpush1.bf16.msra.mxu0 %v2804
  %2878 = vmatprep.subr.bf16.mxu0 %v2856
  %2879 = vmatpush1.bf16.msra.mxu0 %v2853
  %2880 = vmatprep.subr.bf16.mxu0 0
  %2881 = vmatpush1.bf16.msra.mxu0 0
  %2882 = vmatprep.subr.bf16.mxu0 0
  %2883 = vmatpush1.bf16.msra.mxu0 0
  %2884 = vmatprep.subr.bf16.mxu0 0
  %2885 = vmatpush1.bf16.msra.mxu0 0
  %2886 = vmatprep.subr.bf16.mxu0 0
  %2887 = vmatpush1.bf16.msra.mxu0 0
  %2888 = vmatprep.subr.bf16.mxu0 0
  %2889 = vmatpush1.bf16.msra.mxu0 0
  %2890 = vmatprep.mubr.bf16.mxu0 %v2829
  %2891 = vmatmul.mubr.bf16.gmra.mrb[0].mxu0 %v2188
  %v2892 = vpop.f32.mrb[0].mxu0
  %v2893 = vadd.f32 %v2645, %v2892
  %v2894 = vpop.f32.mrb[0].mxu0
  %v2895 = vadd.f32 %v2647, %v2894
  %v2896 = vpop.f32.mrb[0].mxu0
  %v2897 = vadd.f32 %v2649, %v2896
  %v2898 = vpop.f32.mrb[0].mxu0
  %v2899 = vadd.f32 %v2651, %v2898
  %2900 = vmatprep.mubr.bf16.mxu0 %v2832
  %2901 = vmatmul.mubr.bf16.gmra.mrb[0].mxu0 %v2190
  %v2902 = vpop.f32.mrb[0].mxu0
  %v2903 = vadd.f32 %v2655, %v2902
  %v2904 = vpop.f32.mrb[0].mxu0
  %v2905 = vadd.f32 %v2657, %v2904
  %v2906 = vpop.f32.mrb[0].mxu0
  %v2907 = vadd.f32 %v2659, %v2906
  %v2908 = vpop.f32.mrb[0].mxu0
  %v2909 = vadd.f32 %v2661, %v2908
  %2910 = vmatprep.mubr.bf16.mxu0 %v2835
  %2911 = vmatmul.mubr.bf16.gmra.mrb[0].mxu0 %v2192
  %v2912 = vpop.f32.mrb[0].mxu0
  %v2913 = vadd.f32 %v2665, %v2912
  %v2914 = vpop.f32.mrb[0].mxu0
  %v2915 = vadd.f32 %v2667, %v2914
  %v2916 = vpop.f32.mrb[0].mxu0
  %v2917 = vadd.f32 %v2669, %v2916
  %v2918 = vpop.f32.mrb[0].mxu0
  %v2919 = vadd.f32 %v2671, %v2918
  %2920 = vmatprep.mubr.bf16.mxu0 %v2838
  %2921 = vmatmul.mubr.bf16.gmra.mrb[0].mxu0 %v2194
  %v2922 = vpop.f32.mrb[0].mxu0
  %v2923 = vadd.f32 %v2675, %v2922
  %v2924 = vpop.f32.mrb[0].mxu0
  %v2925 = vadd.f32 %v2677, %v2924
  %v2926 = vpop.f32.mrb[0].mxu0
  %v2927 = vadd.f32 %v2679, %v2926
  %v2928 = vpop.f32.mrb[0].mxu0
  %v2929 = vadd.f32 %v2681, %v2928
  %2930 = vmatprep.mubr.bf16.mxu0 %v2841
  %2931 = vmatmul.mubr.bf16.gmra.mrb[0].mxu0 %v2196
  %v2932 = vpop.f32.mrb[0].mxu0
  %v2933 = vadd.f32 %v2685, %v2932
  %v2934 = vpop.f32.mrb[0].mxu0
  %v2935 = vadd.f32 %v2687, %v2934
  %v2936 = vpop.f32.mrb[0].mxu0
  %v2937 = vadd.f32 %v2689, %v2936
  %v2938 = vpop.f32.mrb[0].mxu0
  %v2939 = vadd.f32 %v2691, %v2938
  %2940 = vmatprep.mubr.bf16.mxu0 %v2844
  %2941 = vmatmul.mubr.bf16.gmra.mrb[0].mxu0 %v2198
  %v2942 = vpop.f32.mrb[0].mxu0
  %v2943 = vadd.f32 %v2695, %v2942
  %v2944 = vpop.f32.mrb[0].mxu0
  %v2945 = vadd.f32 %v2697, %v2944
  %v2946 = vpop.f32.mrb[0].mxu0
  %v2947 = vadd.f32 %v2699, %v2946
  %v2948 = vpop.f32.mrb[0].mxu0
  %v2949 = vadd.f32 %v2701, %v2948
  %2950 = vmatprep.mubr.bf16.mxu0 %v2847
  %2951 = vmatmul.mubr.bf16.gmra.mrb[0].mxu0 %v2200
  %v2952 = vpop.f32.mrb[0].mxu0
  %v2953 = vadd.f32 %v2705, %v2952
  %v2954 = vpop.f32.mrb[0].mxu0
  %v2955 = vadd.f32 %v2707, %v2954
  %v2956 = vpop.f32.mrb[0].mxu0
  %v2957 = vadd.f32 %v2709, %v2956
  %v2958 = vpop.f32.mrb[0].mxu0
  %v2959 = vadd.f32 %v2711, %v2958
  %2960 = vmatprep.mubr.bf16.mxu0 %v2850
  %2961 = vmatmul.mubr.bf16.gmra.mrb[0].mxu0 %v2202
  %v2962 = vpop.f32.mrb[0].mxu0
  %v2963 = vadd.f32 %v2715, %v2962
  %v2964 = vpop.f32.mrb[0].mxu0
  %v2965 = vadd.f32 %v2717, %v2964
  %v2966 = vpop.f32.mrb[0].mxu0
  %v2967 = vadd.f32 %v2719, %v2966
  %v2968 = vpop.f32.mrb[0].mxu0
  %v2969 = vadd.f32 %v2721, %v2968
  %2970 = vdwg.mxu0
  %s2971 = scalar_lea.vmem %s3, 256
  %v2972 = vld [vmem:[%s2971] sm:$0xff]
  %v2973 = vld [vmem:[%s2971 + $0x8] sm:$0xff]
  %v2974 = vld [vmem:[%s2971 + $0x10] sm:$0xff]
  %v2975 = vld [vmem:[%s2971 + $0x18] sm:$0xff]
  %v2976 = vld [vmem:[%s2971 + $0x20] sm:$0xff]
  %v2977 = vld [vmem:[%s2971 + $0x28] sm:$0xff]
  %v2978 = vld [vmem:[%s2971 + $0x30] sm:$0xff]
  %v2979 = vld [vmem:[%s2971 + $0x38] sm:$0xff]
  %v2980 = vld [vmem:[%s2971 + $0x40] sm:$0xff]
  %v2981 = vld [vmem:[%s2971 + $0x48] sm:$0xff]
  %v2982 = vld [vmem:[%s2971 + $0x50] sm:$0xff]
  %v2983 = vld [vmem:[%s2971 + $0x58] sm:$0xff]
  %v2984 = vld [vmem:[%s2971 + $0x60] sm:$0xff]
  %v2985 = vld [vmem:[%s2971 + $0x68] sm:$0xff]
  %v2986 = vld [vmem:[%s2971 + $0x70] sm:$0xff]
  %v2987 = vld [vmem:[%s2971 + $0x78] sm:$0xff]
  %v3004 = vunpack.c.l.b16 %v2972
  %v3005 = vunpack.c.h.b16 %v2972
  %v3006 = vunpack.c.l.b16 %v2973
  %v3007 = vunpack.c.h.b16 %v2973
  %v3008 = vunpack.c.l.b16 %v2974
  %v3009 = vunpack.c.h.b16 %v2974
  %v3010 = vunpack.c.l.b16 %v2975
  %v3011 = vunpack.c.h.b16 %v2975
  %v3012 = vunpack.c.l.b16 %v2976
  %v3013 = vunpack.c.h.b16 %v2976
  %v3014 = vunpack.c.l.b16 %v2977
  %v3015 = vunpack.c.h.b16 %v2977
  %v3016 = vunpack.c.l.b16 %v2978
  %v3017 = vunpack.c.h.b16 %v2978
  %v3018 = vunpack.c.l.b16 %v2979
  %v3019 = vunpack.c.h.b16 %v2979
  %v3020 = vunpack.c.l.b16 %v2980
  %v3021 = vunpack.c.h.b16 %v2980
  %v3022 = vunpack.c.l.b16 %v2981
  %v3023 = vunpack.c.h.b16 %v2981
  %v3024 = vunpack.c.l.b16 %v2982
  %v3025 = vunpack.c.h.b16 %v2982
  %v3026 = vunpack.c.l.b16 %v2983
  %v3027 = vunpack.c.h.b16 %v2983
  %v3028 = vunpack.c.l.b16 %v2984
  %v3029 = vunpack.c.h.b16 %v2984
  %v3030 = vunpack.c.l.b16 %v2985
  %v3031 = vunpack.c.h.b16 %v2985
  %v3032 = vunpack.c.l.b16 %v2986
  %v3033 = vunpack.c.h.b16 %v2986
  %v3034 = vunpack.c.l.b16 %v2987
  %v3035 = vunpack.c.h.b16 %v2987
  %v3036 = vpack.c.b16 %v3006, %v3004
  %v3037 = vpack.c.b16 %v3007, %v3005
  %v3038 = vpack.c.b16 %v3010, %v3008
  %v3039 = vpack.c.b16 %v3011, %v3009
  %v3040 = vpack.c.b16 %v3014, %v3012
  %v3041 = vpack.c.b16 %v3015, %v3013
  %v3042 = vpack.c.b16 %v3018, %v3016
  %v3043 = vpack.c.b16 %v3019, %v3017
  %v3044 = vpack.c.b16 %v3022, %v3020
  %v3045 = vpack.c.b16 %v3023, %v3021
  %v3046 = vpack.c.b16 %v3026, %v3024
  %v3047 = vpack.c.b16 %v3027, %v3025
  %v3048 = vpack.c.b16 %v3030, %v3028
  %v3049 = vpack.c.b16 %v3031, %v3029
  %v3050 = vpack.c.b16 %v3034, %v3032
  %v3051 = vpack.c.b16 %v3035, %v3033
  %3068 = vmatprep.subr.bf16.mxu0 %v1948
  %3069 = vmatpush1.bf16.msra.mxu0 %v1947
  %3070 = vmatprep.subr.bf16.mxu0 %v1950
  %3071 = vmatpush1.bf16.msra.mxu0 %v1949
  %3072 = vmatprep.subr.bf16.mxu0 %v1952
  %3073 = vmatpush1.bf16.msra.mxu0 %v1951
  %3074 = vmatprep.subr.bf16.mxu0 %v1954
  %3075 = vmatpush1.bf16.msra.mxu0 %v1953
  %3076 = vmatprep.subr.bf16.mxu0 %v1956
  %3077 = vmatpush1.bf16.msra.mxu0 %v1955
  %3078 = vmatprep.subr.bf16.mxu0 %v1958
  %3079 = vmatpush1.bf16.msra.mxu0 %v1957
  %3080 = vmatprep.subr.bf16.mxu0 %v1960
  %3081 = vmatpush1.bf16.msra.mxu0 %v1959
  %3082 = vmatprep.subr.bf16.mxu0 %v1962
  %3083 = vmatpush1.bf16.msra.mxu0 %v1961
  %3084 = vmatprep.subr.bf16.mxu0 %v1964
  %3085 = vmatpush1.bf16.msra.mxu0 %v1963
  %3086 = vmatprep.subr.bf16.mxu0 %v1966
  %3087 = vmatpush1.bf16.msra.mxu0 %v1965
  %3088 = vmatprep.subr.bf16.mxu0 %v1968
  %3089 = vmatpush1.bf16.msra.mxu0 %v1967
  %3090 = vmatprep.subr.bf16.mxu0 %v1970
  %3091 = vmatpush1.bf16.msra.mxu0 %v1969
  %3092 = vmatprep.subr.bf16.mxu0 %v1972
  %3093 = vmatpush1.bf16.msra.mxu0 %v1971
  %3094 = vmatprep.subr.bf16.mxu0 %v1974
  %3095 = vmatpush1.bf16.msra.mxu0 %v1973
  %3096 = vmatprep.subr.bf16.mxu0 %v1976
  %3097 = vmatpush1.bf16.msra.mxu0 %v1975
  %3098 = vmatprep.subr.bf16.mxu0 %v1978
  %3099 = vmatpush1.bf16.msra.mxu0 %v1977
  %3100 = vmatprep.mubr.bf16.mxu0 %v3037
  %3101 = vmatmul.mubr.bf16.gmra.mrb[0].mxu0 %v3036
  %v3102 = vpop.f32.mrb[0].mxu0
  %v3103 = vadd.f32 0.0, %v3102
  %v3104 = vpop.f32.mrb[0].mxu0
  %v3105 = vadd.f32 0.0, %v3104
  %v3106 = vpop.f32.mrb[0].mxu0
  %v3107 = vadd.f32 0.0, %v3106
  %v3108 = vpop.f32.mrb[0].mxu0
  %v3109 = vadd.f32 0.0, %v3108
  %3110 = vmatprep.mubr.bf16.mxu0 %v3039
  %3111 = vmatmul.mubr.bf16.gmra.mrb[0].mxu0 %v3038
  %v3112 = vpop.f32.mrb[0].mxu0
  %v3113 = vadd.f32 0.0, %v3112
  %v3114 = vpop.f32.mrb[0].mxu0
  %v3115 = vadd.f32 0.0, %v3114
  %v3116 = vpop.f32.mrb[0].mxu0
  %v3117 = vadd.f32 0.0, %v3116
  %v3118 = vpop.f32.mrb[0].mxu0
  %v3119 = vadd.f32 0.0, %v3118
  %3120 = vmatprep.mubr.bf16.mxu0 %v3041
  %3121 = vmatmul.mubr.bf16.gmra.mrb[0].mxu0 %v3040
  %v3122 = vpop.f32.mrb[0].mxu0
  %v3123 = vadd.f32 0.0, %v3122
  %v3124 = vpop.f32.mrb[0].mxu0
  %v3125 = vadd.f32 0.0, %v3124
  %v3126 = vpop.f32.mrb[0].mxu0
  %v3127 = vadd.f32 0.0, %v3126
  %v3128 = vpop.f32.mrb[0].mxu0
  %v3129 = vadd.f32 0.0, %v3128
  %3130 = vmatprep.mubr.bf16.mxu0 %v3043
  %3131 = vmatmul.mubr.bf16.gmra.mrb[0].mxu0 %v3042
  %v3132 = vpop.f32.mrb[0].mxu0
  %v3133 = vadd.f32 0.0, %v3132
  %v3134 = vpop.f32.mrb[0].mxu0
  %v3135 = vadd.f32 0.0, %v3134
  %v3136 = vpop.f32.mrb[0].mxu0
  %v3137 = vadd.f32 0.0, %v3136
  %v3138 = vpop.f32.mrb[0].mxu0
  %v3139 = vadd.f32 0.0, %v3138
  %3140 = vmatprep.mubr.bf16.mxu0 %v3045
  %3141 = vmatmul.mubr.bf16.gmra.mrb[0].mxu0 %v3044
  %v3142 = vpop.f32.mrb[0].mxu0
  %v3143 = vadd.f32 0.0, %v3142
  %v3144 = vpop.f32.mrb[0].mxu0
  %v3145 = vadd.f32 0.0, %v3144
  %v3146 = vpop.f32.mrb[0].mxu0
  %v3147 = vadd.f32 0.0, %v3146
  %v3148 = vpop.f32.mrb[0].mxu0
  %v3149 = vadd.f32 0.0, %v3148
  %3150 = vmatprep.mubr.bf16.mxu0 %v3047
  %3151 = vmatmul.mubr.bf16.gmra.mrb[0].mxu0 %v3046
  %v3152 = vpop.f32.mrb[0].mxu0
  %v3153 = vadd.f32 0.0, %v3152
  %v3154 = vpop.f32.mrb[0].mxu0
  %v3155 = vadd.f32 0.0, %v3154
  %v3156 = vpop.f32.mrb[0].mxu0
  %v3157 = vadd.f32 0.0, %v3156
  %v3158 = vpop.f32.mrb[0].mxu0
  %v3159 = vadd.f32 0.0, %v3158
  %3160 = vmatprep.mubr.bf16.mxu0 %v3049
  %3161 = vmatmul.mubr.bf16.gmra.mrb[0].mxu0 %v3048
  %v3162 = vpop.f32.mrb[0].mxu0
  %v3163 = vadd.f32 0.0, %v3162
  %v3164 = vpop.f32.mrb[0].mxu0
  %v3165 = vadd.f32 0.0, %v3164
  %v3166 = vpop.f32.mrb[0].mxu0
  %v3167 = vadd.f32 0.0, %v3166
  %v3168 = vpop.f32.mrb[0].mxu0
  %v3169 = vadd.f32 0.0, %v3168
  %3170 = vmatprep.mubr.bf16.mxu0 %v3051
  %3171 = vmatmul.mubr.bf16.gmra.mrb[0].mxu0 %v3050
  %v3172 = vpop.f32.mrb[0].mxu0
  %v3173 = vadd.f32 0.0, %v3172
  %v3174 = vpop.f32.mrb[0].mxu0
  %v3175 = vadd.f32 0.0, %v3174
  %v3176 = vpop.f32.mrb[0].mxu0
  %v3177 = vadd.f32 0.0, %v3176
  %v3178 = vpop.f32.mrb[0].mxu0
  %v3179 = vadd.f32 0.0, %v3178
  %3180 = vdwg.mxu0
  %v3181 = vpack.c.bf16 %v3107, %v3103
  %v3182 = vpack.c.bf16 %v3109, %v3105
  %v3183 = vpack.c.bf16 %v3117, %v3113
  %v3184 = vpack.c.bf16 %v3119, %v3115
  %v3185 = vpack.c.bf16 %v3127, %v3123
  %v3186 = vpack.c.bf16 %v3129, %v3125
  %v3187 = vpack.c.bf16 %v3137, %v3133
  %v3188 = vpack.c.bf16 %v3139, %v3135
  %v3189 = vpack.c.bf16 %v3147, %v3143
  %v3190 = vpack.c.bf16 %v3149, %v3145
  %v3191 = vpack.c.bf16 %v3157, %v3153
  %v3192 = vpack.c.bf16 %v3159, %v3155
  %v3193 = vpack.c.bf16 %v3167, %v3163
  %v3194 = vpack.c.bf16 %v3169, %v3165
  %v3195 = vpack.c.bf16 %v3177, %v3173
  %v3196 = vpack.c.bf16 %v3179, %v3175
  %s3197 = scalar_lea.vmem %s4, 336
  %v3198 = vld [vmem:[%s3197] sm:$0xff]
  %v3199 = vld [vmem:[%s3197 + $0x8] sm:$0xff]
  %v3200 = vld [vmem:[%s3197 + $0x10] sm:$0xff]
  %v3201 = vld [vmem:[%s3197 + $0x18] sm:$0xff]
  %v3202 = vld [vmem:[%s3197 + $0x20] sm:$0xff]
  %v3203 = vld [vmem:[%s3197 + $0x28] sm:$0xff]
  %v3204 = vld [vmem:[%s3197 + $0x30] sm:$0xff]
  %v3205 = vld [vmem:[%s3197 + $0x38] sm:$0xff]
  %v3206 = vld [vmem:[%s3197 + $0x40] sm:$0xff]
  %v3207 = vld [vmem:[%s3197 + $0x48] sm:$0xff]
  %v3208 = vld [vmem:[%s3197 + $0x50] sm:$0xff]
  %v3209 = vld [vmem:[%s3197 + $0x58] sm:$0xff]
  %v3210 = vld [vmem:[%s3197 + $0x60] sm:$0xff]
  %v3211 = vld [vmem:[%s3197 + $0x68] sm:$0xff]
  %v3212 = vld [vmem:[%s3197 + $0x70] sm:$0xff]
  %v3213 = vld [vmem:[%s3197 + $0x78] sm:$0xff]
  %v3214 = vld [vmem:[%s3197 + $0x80] sm:$0xff]
  %v3215 = vld [vmem:[%s3197 + $0x88] sm:$0xff]
  %v3216 = vld [vmem:[%s3197 + $0x90] sm:$0xff]
  %v3217 = vld [vmem:[%s3197 + $0x98] sm:$0xff]
  %v3218 = vld [vmem:[%s3197 + $0xa0] sm:$0xff]
  %v3240 = vunpack.c.l.b16 %v3198
  %v3241 = vunpack.c.h.b16 %v3198
  %v3242 = vunpack.c.l.b16 %v3199
  %v3243 = vunpack.c.h.b16 %v3199
  %v3244 = vunpack.c.l.b16 %v3200
  %v3245 = vunpack.c.h.b16 %v3200
  %v3246 = vunpack.c.l.b16 %v3201
  %v3247 = vunpack.c.h.b16 %v3201
  %v3248 = vunpack.c.l.b16 %v3202
  %v3249 = vunpack.c.h.b16 %v3202
  %v3250 = vunpack.c.l.b16 %v3203
  %v3251 = vunpack.c.h.b16 %v3203
  %v3252 = vunpack.c.l.b16 %v3204
  %v3253 = vunpack.c.h.b16 %v3204
  %v3254 = vunpack.c.l.b16 %v3205
  %v3255 = vunpack.c.h.b16 %v3205
  %v3256 = vunpack.c.l.b16 %v3206
  %v3257 = vunpack.c.h.b16 %v3206
  %v3258 = vunpack.c.l.b16 %v3207
  %v3259 = vunpack.c.h.b16 %v3207
  %v3260 = vunpack.c.l.b16 %v3208
  %v3261 = vunpack.c.h.b16 %v3208
  %v3262 = vunpack.c.l.b16 %v3209
  %v3263 = vunpack.c.h.b16 %v3209
  %v3264 = vunpack.c.l.b16 %v3210
  %v3265 = vunpack.c.h.b16 %v3210
  %v3266 = vunpack.c.l.b16 %v3211
  %v3267 = vunpack.c.h.b16 %v3211
  %v3268 = vunpack.c.l.b16 %v3212
  %v3269 = vunpack.c.h.b16 %v3212
  %v3270 = vunpack.c.l.b16 %v3213
  %v3271 = vunpack.c.h.b16 %v3213
  %v3272 = vunpack.c.l.b16 %v3214
  %v3273 = vunpack.c.h.b16 %v3214
  %v3274 = vunpack.c.l.b16 %v3215
  %v3275 = vunpack.c.h.b16 %v3215
  %v3276 = vunpack.c.l.b16 %v3216
  %v3277 = vunpack.c.h.b16 %v3216
  %v3278 = vunpack.c.l.b16 %v3217
  %v3279 = vunpack.c.h.b16 %v3217
  %v3280 = vunpack.c.l.b16 %v3218
  %v3281 = vunpack.c.h.b16 %v3218
  %v3282 = vpack.c.b16 %v3242, %v3240
  %v3283 = vpack.c.b16 %v3243, %v3241
  %v3284 = vpack.c.b16 %v3246, %v3244
  %v3285 = vpack.c.b16 %v3247, %v3245
  %v3286 = vpack.c.b16 %v3250, %v3248
  %v3287 = vpack.c.b16 %v3251, %v3249
  %v3288 = vpack.c.b16 %v3254, %v3252
  %v3289 = vpack.c.b16 %v3255, %v3253
  %v3290 = vpack.c.b16 %v3258, %v3256
  %v3291 = vpack.c.b16 %v3259, %v3257
  %v3292 = vpack.c.b16 %v3262, %v3260
  %v3293 = vpack.c.b16 %v3263, %v3261
  %v3294 = vpack.c.b16 %v3266, %v3264
  %v3295 = vpack.c.b16 %v3267, %v3265
  %v3296 = vpack.c.b16 %v3270, %v3268
  %v3297 = vpack.c.b16 %v3271, %v3269
  %v3298 = vpack.c.b16 %v3274, %v3272
  %v3299 = vpack.c.b16 %v3275, %v3273
  %v3300 = vpack.c.b16 %v3278, %v3276
  %v3301 = vpack.c.b16 %v3279, %v3277
  %v3302 = vpack.c.b16 %v3280, %v3280
  %v3303 = vpack.c.b16 %v3281, %v3281
  %v3325 = vsel %vm2578, %v3182, 0
  %v3328 = vsel %vm2578, %v3184, 0
  %v3331 = vsel %vm2578, %v3186, 0
  %v3334 = vsel %vm2578, %v3188, 0
  %v3337 = vsel %vm2578, %v3190, 0
  %v3340 = vsel %vm2578, %v3192, 0
  %v3343 = vsel %vm2578, %v3194, 0
  %v3346 = vsel %vm2578, %v3196, 0
  %v3349 = vsel %vm2603, %v3302, 0
  %v3352 = vsel %vm2603, %v3303, 0
  %3354 = vmatprep.subr.bf16.mxu0 %v3283
  %3355 = vmatpush1.bf16.msra.mxu0 %v3282
  %3356 = vmatprep.subr.bf16.mxu0 %v3285
  %3357 = vmatpush1.bf16.msra.mxu0 %v3284
  %3358 = vmatprep.subr.bf16.mxu0 %v3287
  %3359 = vmatpush1.bf16.msra.mxu0 %v3286
  %3360 = vmatprep.subr.bf16.mxu0 %v3289
  %3361 = vmatpush1.bf16.msra.mxu0 %v3288
  %3362 = vmatprep.subr.bf16.mxu0 %v3291
  %3363 = vmatpush1.bf16.msra.mxu0 %v3290
  %3364 = vmatprep.subr.bf16.mxu0 %v3293
  %3365 = vmatpush1.bf16.msra.mxu0 %v3292
  %3366 = vmatprep.subr.bf16.mxu0 %v3295
  %3367 = vmatpush1.bf16.msra.mxu0 %v3294
  %3368 = vmatprep.subr.bf16.mxu0 %v3297
  %3369 = vmatpush1.bf16.msra.mxu0 %v3296
  %3370 = vmatprep.subr.bf16.mxu0 %v3299
  %3371 = vmatpush1.bf16.msra.mxu0 %v3298
  %3372 = vmatprep.subr.bf16.mxu0 %v3301
  %3373 = vmatpush1.bf16.msra.mxu0 %v3300
  %3374 = vmatprep.subr.bf16.mxu0 %v3352
  %3375 = vmatpush1.bf16.msra.mxu0 %v3349
  %3376 = vmatprep.subr.bf16.mxu0 0
  %3377 = vmatpush1.bf16.msra.mxu0 0
  %3378 = vmatprep.subr.bf16.mxu0 0
  %3379 = vmatpush1.bf16.msra.mxu0 0
  %3380 = vmatprep.subr.bf16.mxu0 0
  %3381 = vmatpush1.bf16.msra.mxu0 0
  %3382 = vmatprep.subr.bf16.mxu0 0
  %3383 = vmatpush1.bf16.msra.mxu0 0
  %3384 = vmatprep.subr.bf16.mxu0 0
  %3385 = vmatpush1.bf16.msra.mxu0 0
  %3386 = vmatprep.mubr.bf16.mxu0 %v3325
  %3387 = vmatmul.mubr.bf16.gmra.mrb[0].mxu0 %v3181
  %v3388 = vpop.f32.mrb[0].mxu0
  %v3389 = vadd.f32 0.0, %v3388
  %v3390 = vpop.f32.mrb[0].mxu0
  %v3391 = vadd.f32 0.0, %v3390
  %v3392 = vpop.f32.mrb[0].mxu0
  %v3393 = vadd.f32 0.0, %v3392
  %v3394 = vpop.f32.mrb[0].mxu0
  %v3395 = vadd.f32 0.0, %v3394
  %3396 = vmatprep.mubr.bf16.mxu0 %v3328
  %3397 = vmatmul.mubr.bf16.gmra.mrb[0].mxu0 %v3183
  %v3398 = vpop.f32.mrb[0].mxu0
  %v3399 = vadd.f32 0.0, %v3398
  %v3400 = vpop.f32.mrb[0].mxu0
  %v3401 = vadd.f32 0.0, %v3400
  %v3402 = vpop.f32.mrb[0].mxu0
  %v3403 = vadd.f32 0.0, %v3402
  %v3404 = vpop.f32.mrb[0].mxu0
  %v3405 = vadd.f32 0.0, %v3404
  %3406 = vmatprep.mubr.bf16.mxu0 %v3331
  %3407 = vmatmul.mubr.bf16.gmra.mrb[0].mxu0 %v3185
  %v3408 = vpop.f32.mrb[0].mxu0
  %v3409 = vadd.f32 0.0, %v3408
  %v3410 = vpop.f32.mrb[0].mxu0
  %v3411 = vadd.f32 0.0, %v3410
  %v3412 = vpop.f32.mrb[0].mxu0
  %v3413 = vadd.f32 0.0, %v3412
  %v3414 = vpop.f32.mrb[0].mxu0
  %v3415 = vadd.f32 0.0, %v3414
  %3416 = vmatprep.mubr.bf16.mxu0 %v3334
  %3417 = vmatmul.mubr.bf16.gmra.mrb[0].mxu0 %v3187
  %v3418 = vpop.f32.mrb[0].mxu0
  %v3419 = vadd.f32 0.0, %v3418
  %v3420 = vpop.f32.mrb[0].mxu0
  %v3421 = vadd.f32 0.0, %v3420
  %v3422 = vpop.f32.mrb[0].mxu0
  %v3423 = vadd.f32 0.0, %v3422
  %v3424 = vpop.f32.mrb[0].mxu0
  %v3425 = vadd.f32 0.0, %v3424
  %3426 = vmatprep.mubr.bf16.mxu0 %v3337
  %3427 = vmatmul.mubr.bf16.gmra.mrb[0].mxu0 %v3189
  %v3428 = vpop.f32.mrb[0].mxu0
  %v3429 = vadd.f32 0.0, %v3428
  %v3430 = vpop.f32.mrb[0].mxu0
  %v3431 = vadd.f32 0.0, %v3430
  %v3432 = vpop.f32.mrb[0].mxu0
  %v3433 = vadd.f32 0.0, %v3432
  %v3434 = vpop.f32.mrb[0].mxu0
  %v3435 = vadd.f32 0.0, %v3434
  %3436 = vmatprep.mubr.bf16.mxu0 %v3340
  %3437 = vmatmul.mubr.bf16.gmra.mrb[0].mxu0 %v3191
  %v3438 = vpop.f32.mrb[0].mxu0
  %v3439 = vadd.f32 0.0, %v3438
  %v3440 = vpop.f32.mrb[0].mxu0
  %v3441 = vadd.f32 0.0, %v3440
  %v3442 = vpop.f32.mrb[0].mxu0
  %v3443 = vadd.f32 0.0, %v3442
  %v3444 = vpop.f32.mrb[0].mxu0
  %v3445 = vadd.f32 0.0, %v3444
  %3446 = vmatprep.mubr.bf16.mxu0 %v3343
  %3447 = vmatmul.mubr.bf16.gmra.mrb[0].mxu0 %v3193
  %v3448 = vpop.f32.mrb[0].mxu0
  %v3449 = vadd.f32 0.0, %v3448
  %v3450 = vpop.f32.mrb[0].mxu0
  %v3451 = vadd.f32 0.0, %v3450
  %v3452 = vpop.f32.mrb[0].mxu0
  %v3453 = vadd.f32 0.0, %v3452
  %v3454 = vpop.f32.mrb[0].mxu0
  %v3455 = vadd.f32 0.0, %v3454
  %3456 = vmatprep.mubr.bf16.mxu0 %v3346
  %3457 = vmatmul.mubr.bf16.gmra.mrb[0].mxu0 %v3195
  %v3458 = vpop.f32.mrb[0].mxu0
  %v3459 = vadd.f32 0.0, %v3458
  %v3460 = vpop.f32.mrb[0].mxu0
  %v3461 = vadd.f32 0.0, %v3460
  %v3462 = vpop.f32.mrb[0].mxu0
  %v3463 = vadd.f32 0.0, %v3462
  %v3464 = vpop.f32.mrb[0].mxu0
  %v3465 = vadd.f32 0.0, %v3464
  %3466 = vdwg.mxu0
  %v3467 = vadd.f32 %v2893, %v3389
  %v3468 = vadd.f32 %v2895, %v3391
  %v3469 = vadd.f32 %v2897, %v3393
  %v3470 = vadd.f32 %v2899, %v3395
  %v3471 = vadd.f32 %v2903, %v3399
  %v3472 = vadd.f32 %v2905, %v3401
  %v3473 = vadd.f32 %v2907, %v3403
  %v3474 = vadd.f32 %v2909, %v3405
  %v3475 = vadd.f32 %v2913, %v3409
  %v3476 = vadd.f32 %v2915, %v3411
  %v3477 = vadd.f32 %v2917, %v3413
  %v3478 = vadd.f32 %v2919, %v3415
  %v3479 = vadd.f32 %v2923, %v3419
  %v3480 = vadd.f32 %v2925, %v3421
  %v3481 = vadd.f32 %v2927, %v3423
  %v3482 = vadd.f32 %v2929, %v3425
  %v3483 = vadd.f32 %v2933, %v3429
  %v3484 = vadd.f32 %v2935, %v3431
  %v3485 = vadd.f32 %v2937, %v3433
  %v3486 = vadd.f32 %v2939, %v3435
  %v3487 = vadd.f32 %v2943, %v3439
  %v3488 = vadd.f32 %v2945, %v3441
  %v3489 = vadd.f32 %v2947, %v3443
  %v3490 = vadd.f32 %v2949, %v3445
  %v3491 = vadd.f32 %v2953, %v3449
  %v3492 = vadd.f32 %v2955, %v3451
  %v3493 = vadd.f32 %v2957, %v3453
  %v3494 = vadd.f32 %v2959, %v3455
  %v3495 = vadd.f32 %v2963, %v3459
  %v3496 = vadd.f32 %v2965, %v3461
  %v3497 = vadd.f32 %v2967, %v3463
  %v3498 = vadd.f32 %v2969, %v3465
  %s3499 = scalar_lea.vmem %s3, 384
  %v3500 = vld [vmem:[%s3499] sm:$0xff]
  %v3501 = vld [vmem:[%s3499 + $0x8] sm:$0xff]
  %v3502 = vld [vmem:[%s3499 + $0x10] sm:$0xff]
  %v3503 = vld [vmem:[%s3499 + $0x18] sm:$0xff]
  %v3504 = vld [vmem:[%s3499 + $0x20] sm:$0xff]
  %v3505 = vld [vmem:[%s3499 + $0x28] sm:$0xff]
  %v3506 = vld [vmem:[%s3499 + $0x30] sm:$0xff]
  %v3507 = vld [vmem:[%s3499 + $0x38] sm:$0xff]
  %v3508 = vld [vmem:[%s3499 + $0x40] sm:$0xff]
  %v3509 = vld [vmem:[%s3499 + $0x48] sm:$0xff]
  %v3510 = vld [vmem:[%s3499 + $0x50] sm:$0xff]
  %v3511 = vld [vmem:[%s3499 + $0x58] sm:$0xff]
  %v3512 = vld [vmem:[%s3499 + $0x60] sm:$0xff]
  %v3513 = vld [vmem:[%s3499 + $0x68] sm:$0xff]
  %v3514 = vld [vmem:[%s3499 + $0x70] sm:$0xff]
  %v3515 = vld [vmem:[%s3499 + $0x78] sm:$0xff]
  %v3532 = vunpack.c.l.b16 %v3500
  %v3533 = vunpack.c.h.b16 %v3500
  %v3534 = vunpack.c.l.b16 %v3501
  %v3535 = vunpack.c.h.b16 %v3501
  %v3536 = vunpack.c.l.b16 %v3502
  %v3537 = vunpack.c.h.b16 %v3502
  %v3538 = vunpack.c.l.b16 %v3503
  %v3539 = vunpack.c.h.b16 %v3503
  %v3540 = vunpack.c.l.b16 %v3504
  %v3541 = vunpack.c.h.b16 %v3504
  %v3542 = vunpack.c.l.b16 %v3505
  %v3543 = vunpack.c.h.b16 %v3505
  %v3544 = vunpack.c.l.b16 %v3506
  %v3545 = vunpack.c.h.b16 %v3506
  %v3546 = vunpack.c.l.b16 %v3507
  %v3547 = vunpack.c.h.b16 %v3507
  %v3548 = vunpack.c.l.b16 %v3508
  %v3549 = vunpack.c.h.b16 %v3508
  %v3550 = vunpack.c.l.b16 %v3509
  %v3551 = vunpack.c.h.b16 %v3509
  %v3552 = vunpack.c.l.b16 %v3510
  %v3553 = vunpack.c.h.b16 %v3510
  %v3554 = vunpack.c.l.b16 %v3511
  %v3555 = vunpack.c.h.b16 %v3511
  %v3556 = vunpack.c.l.b16 %v3512
  %v3557 = vunpack.c.h.b16 %v3512
  %v3558 = vunpack.c.l.b16 %v3513
  %v3559 = vunpack.c.h.b16 %v3513
  %v3560 = vunpack.c.l.b16 %v3514
  %v3561 = vunpack.c.h.b16 %v3514
  %v3562 = vunpack.c.l.b16 %v3515
  %v3563 = vunpack.c.h.b16 %v3515
  %v3564 = vpack.c.b16 %v3534, %v3532
  %v3565 = vpack.c.b16 %v3535, %v3533
  %v3566 = vpack.c.b16 %v3538, %v3536
  %v3567 = vpack.c.b16 %v3539, %v3537
  %v3568 = vpack.c.b16 %v3542, %v3540
  %v3569 = vpack.c.b16 %v3543, %v3541
  %v3570 = vpack.c.b16 %v3546, %v3544
  %v3571 = vpack.c.b16 %v3547, %v3545
  %v3572 = vpack.c.b16 %v3550, %v3548
  %v3573 = vpack.c.b16 %v3551, %v3549
  %v3574 = vpack.c.b16 %v3554, %v3552
  %v3575 = vpack.c.b16 %v3555, %v3553
  %v3576 = vpack.c.b16 %v3558, %v3556
  %v3577 = vpack.c.b16 %v3559, %v3557
  %v3578 = vpack.c.b16 %v3562, %v3560
  %v3579 = vpack.c.b16 %v3563, %v3561
  %3596 = vmatprep.subr.bf16.mxu0 %v1948
  %3597 = vmatpush1.bf16.msra.mxu0 %v1947
  %3598 = vmatprep.subr.bf16.mxu0 %v1950
  %3599 = vmatpush1.bf16.msra.mxu0 %v1949
  %3600 = vmatprep.subr.bf16.mxu0 %v1952
  %3601 = vmatpush1.bf16.msra.mxu0 %v1951
  %3602 = vmatprep.subr.bf16.mxu0 %v1954
  %3603 = vmatpush1.bf16.msra.mxu0 %v1953
  %3604 = vmatprep.subr.bf16.mxu0 %v1956
  %3605 = vmatpush1.bf16.msra.mxu0 %v1955
  %3606 = vmatprep.subr.bf16.mxu0 %v1958
  %3607 = vmatpush1.bf16.msra.mxu0 %v1957
  %3608 = vmatprep.subr.bf16.mxu0 %v1960
  %3609 = vmatpush1.bf16.msra.mxu0 %v1959
  %3610 = vmatprep.subr.bf16.mxu0 %v1962
  %3611 = vmatpush1.bf16.msra.mxu0 %v1961
  %3612 = vmatprep.subr.bf16.mxu0 %v1964
  %3613 = vmatpush1.bf16.msra.mxu0 %v1963
  %3614 = vmatprep.subr.bf16.mxu0 %v1966
  %3615 = vmatpush1.bf16.msra.mxu0 %v1965
  %3616 = vmatprep.subr.bf16.mxu0 %v1968
  %3617 = vmatpush1.bf16.msra.mxu0 %v1967
  %3618 = vmatprep.subr.bf16.mxu0 %v1970
  %3619 = vmatpush1.bf16.msra.mxu0 %v1969
  %3620 = vmatprep.subr.bf16.mxu0 %v1972
  %3621 = vmatpush1.bf16.msra.mxu0 %v1971
  %3622 = vmatprep.subr.bf16.mxu0 %v1974
  %3623 = vmatpush1.bf16.msra.mxu0 %v1973
  %3624 = vmatprep.subr.bf16.mxu0 %v1976
  %3625 = vmatpush1.bf16.msra.mxu0 %v1975
  %3626 = vmatprep.subr.bf16.mxu0 %v1978
  %3627 = vmatpush1.bf16.msra.mxu0 %v1977
  %3628 = vmatprep.mubr.bf16.mxu0 %v3565
  %3629 = vmatmul.mubr.bf16.gmra.mrb[0].mxu0 %v3564
  %v3630 = vpop.f32.mrb[0].mxu0
  %v3631 = vadd.f32 0.0, %v3630
  %v3632 = vpop.f32.mrb[0].mxu0
  %v3633 = vadd.f32 0.0, %v3632
  %v3634 = vpop.f32.mrb[0].mxu0
  %v3635 = vadd.f32 0.0, %v3634
  %v3636 = vpop.f32.mrb[0].mxu0
  %v3637 = vadd.f32 0.0, %v3636
  %3638 = vmatprep.mubr.bf16.mxu0 %v3567
  %3639 = vmatmul.mubr.bf16.gmra.mrb[0].mxu0 %v3566
  %v3640 = vpop.f32.mrb[0].mxu0
  %v3641 = vadd.f32 0.0, %v3640
  %v3642 = vpop.f32.mrb[0].mxu0
  %v3643 = vadd.f32 0.0, %v3642
  %v3644 = vpop.f32.mrb[0].mxu0
  %v3645 = vadd.f32 0.0, %v3644
  %v3646 = vpop.f32.mrb[0].mxu0
  %v3647 = vadd.f32 0.0, %v3646
  %3648 = vmatprep.mubr.bf16.mxu0 %v3569
  %3649 = vmatmul.mubr.bf16.gmra.mrb[0].mxu0 %v3568
  %v3650 = vpop.f32.mrb[0].mxu0
  %v3651 = vadd.f32 0.0, %v3650
  %v3652 = vpop.f32.mrb[0].mxu0
  %v3653 = vadd.f32 0.0, %v3652
  %v3654 = vpop.f32.mrb[0].mxu0
  %v3655 = vadd.f32 0.0, %v3654
  %v3656 = vpop.f32.mrb[0].mxu0
  %v3657 = vadd.f32 0.0, %v3656
  %3658 = vmatprep.mubr.bf16.mxu0 %v3571
  %3659 = vmatmul.mubr.bf16.gmra.mrb[0].mxu0 %v3570
  %v3660 = vpop.f32.mrb[0].mxu0
  %v3661 = vadd.f32 0.0, %v3660
  %v3662 = vpop.f32.mrb[0].mxu0
  %v3663 = vadd.f32 0.0, %v3662
  %v3664 = vpop.f32.mrb[0].mxu0
  %v3665 = vadd.f32 0.0, %v3664
  %v3666 = vpop.f32.mrb[0].mxu0
  %v3667 = vadd.f32 0.0, %v3666
  %3668 = vmatprep.mubr.bf16.mxu0 %v3573
  %3669 = vmatmul.mubr.bf16.gmra.mrb[0].mxu0 %v3572
  %v3670 = vpop.f32.mrb[0].mxu0
  %v3671 = vadd.f32 0.0, %v3670
  %v3672 = vpop.f32.mrb[0].mxu0
  %v3673 = vadd.f32 0.0, %v3672
  %v3674 = vpop.f32.mrb[0].mxu0
  %v3675 = vadd.f32 0.0, %v3674
  %v3676 = vpop.f32.mrb[0].mxu0
  %v3677 = vadd.f32 0.0, %v3676
  %3678 = vmatprep.mubr.bf16.mxu0 %v3575
  %3679 = vmatmul.mubr.bf16.gmra.mrb[0].mxu0 %v3574
  %v3680 = vpop.f32.mrb[0].mxu0
  %v3681 = vadd.f32 0.0, %v3680
  %v3682 = vpop.f32.mrb[0].mxu0
  %v3683 = vadd.f32 0.0, %v3682
  %v3684 = vpop.f32.mrb[0].mxu0
  %v3685 = vadd.f32 0.0, %v3684
  %v3686 = vpop.f32.mrb[0].mxu0
  %v3687 = vadd.f32 0.0, %v3686
  %3688 = vmatprep.mubr.bf16.mxu0 %v3577
  %3689 = vmatmul.mubr.bf16.gmra.mrb[0].mxu0 %v3576
  %v3690 = vpop.f32.mrb[0].mxu0
  %v3691 = vadd.f32 0.0, %v3690
  %v3692 = vpop.f32.mrb[0].mxu0
  %v3693 = vadd.f32 0.0, %v3692
  %v3694 = vpop.f32.mrb[0].mxu0
  %v3695 = vadd.f32 0.0, %v3694
  %v3696 = vpop.f32.mrb[0].mxu0
  %v3697 = vadd.f32 0.0, %v3696
  %3698 = vmatprep.mubr.bf16.mxu0 %v3579
  %3699 = vmatmul.mubr.bf16.gmra.mrb[0].mxu0 %v3578
  %v3700 = vpop.f32.mrb[0].mxu0
  %v3701 = vadd.f32 0.0, %v3700
  %v3702 = vpop.f32.mrb[0].mxu0
  %v3703 = vadd.f32 0.0, %v3702
  %v3704 = vpop.f32.mrb[0].mxu0
  %v3705 = vadd.f32 0.0, %v3704
  %v3706 = vpop.f32.mrb[0].mxu0
  %v3707 = vadd.f32 0.0, %v3706
  %3708 = vdwg.mxu0
  %v3709 = vpack.c.bf16 %v3635, %v3631
  %v3710 = vpack.c.bf16 %v3637, %v3633
  %v3711 = vpack.c.bf16 %v3645, %v3641
  %v3712 = vpack.c.bf16 %v3647, %v3643
  %v3713 = vpack.c.bf16 %v3655, %v3651
  %v3714 = vpack.c.bf16 %v3657, %v3653
  %v3715 = vpack.c.bf16 %v3665, %v3661
  %v3716 = vpack.c.bf16 %v3667, %v3663
  %v3717 = vpack.c.bf16 %v3675, %v3671
  %v3718 = vpack.c.bf16 %v3677, %v3673
  %v3719 = vpack.c.bf16 %v3685, %v3681
  %v3720 = vpack.c.bf16 %v3687, %v3683
  %v3721 = vpack.c.bf16 %v3695, %v3691
  %v3722 = vpack.c.bf16 %v3697, %v3693
  %v3723 = vpack.c.bf16 %v3705, %v3701
  %v3724 = vpack.c.bf16 %v3707, %v3703
  %s3725 = scalar_lea.vmem %s4, 504
  %v3726 = vld [vmem:[%s3725] sm:$0xff]
  %v3727 = vld [vmem:[%s3725 + $0x8] sm:$0xff]
  %v3728 = vld [vmem:[%s3725 + $0x10] sm:$0xff]
  %v3729 = vld [vmem:[%s3725 + $0x18] sm:$0xff]
  %v3730 = vld [vmem:[%s3725 + $0x20] sm:$0xff]
  %v3731 = vld [vmem:[%s3725 + $0x28] sm:$0xff]
  %v3732 = vld [vmem:[%s3725 + $0x30] sm:$0xff]
  %v3733 = vld [vmem:[%s3725 + $0x38] sm:$0xff]
  %v3734 = vld [vmem:[%s3725 + $0x40] sm:$0xff]
  %v3735 = vld [vmem:[%s3725 + $0x48] sm:$0xff]
  %v3736 = vld [vmem:[%s3725 + $0x50] sm:$0xff]
  %v3737 = vld [vmem:[%s3725 + $0x58] sm:$0xff]
  %v3738 = vld [vmem:[%s3725 + $0x60] sm:$0xff]
  %v3739 = vld [vmem:[%s3725 + $0x68] sm:$0xff]
  %v3740 = vld [vmem:[%s3725 + $0x70] sm:$0xff]
  %v3741 = vld [vmem:[%s3725 + $0x78] sm:$0xff]
  %v3742 = vld [vmem:[%s3725 + $0x80] sm:$0xff]
  %v3743 = vld [vmem:[%s3725 + $0x88] sm:$0xff]
  %v3744 = vld [vmem:[%s3725 + $0x90] sm:$0xff]
  %v3745 = vld [vmem:[%s3725 + $0x98] sm:$0xff]
  %v3746 = vld [vmem:[%s3725 + $0xa0] sm:$0xff]
  %v3768 = vunpack.c.l.b16 %v3726
  %v3769 = vunpack.c.h.b16 %v3726
  %v3770 = vunpack.c.l.b16 %v3727
  %v3771 = vunpack.c.h.b16 %v3727
  %v3772 = vunpack.c.l.b16 %v3728
  %v3773 = vunpack.c.h.b16 %v3728
  %v3774 = vunpack.c.l.b16 %v3729
  %v3775 = vunpack.c.h.b16 %v3729
  %v3776 = vunpack.c.l.b16 %v3730
  %v3777 = vunpack.c.h.b16 %v3730
  %v3778 = vunpack.c.l.b16 %v3731
  %v3779 = vunpack.c.h.b16 %v3731
  %v3780 = vunpack.c.l.b16 %v3732
  %v3781 = vunpack.c.h.b16 %v3732
  %v3782 = vunpack.c.l.b16 %v3733
  %v3783 = vunpack.c.h.b16 %v3733
  %v3784 = vunpack.c.l.b16 %v3734
  %v3785 = vunpack.c.h.b16 %v3734
  %v3786 = vunpack.c.l.b16 %v3735
  %v3787 = vunpack.c.h.b16 %v3735
  %v3788 = vunpack.c.l.b16 %v3736
  %v3789 = vunpack.c.h.b16 %v3736
  %v3790 = vunpack.c.l.b16 %v3737
  %v3791 = vunpack.c.h.b16 %v3737
  %v3792 = vunpack.c.l.b16 %v3738
  %v3793 = vunpack.c.h.b16 %v3738
  %v3794 = vunpack.c.l.b16 %v3739
  %v3795 = vunpack.c.h.b16 %v3739
  %v3796 = vunpack.c.l.b16 %v3740
  %v3797 = vunpack.c.h.b16 %v3740
  %v3798 = vunpack.c.l.b16 %v3741
  %v3799 = vunpack.c.h.b16 %v3741
  %v3800 = vunpack.c.l.b16 %v3742
  %v3801 = vunpack.c.h.b16 %v3742
  %v3802 = vunpack.c.l.b16 %v3743
  %v3803 = vunpack.c.h.b16 %v3743
  %v3804 = vunpack.c.l.b16 %v3744
  %v3805 = vunpack.c.h.b16 %v3744
  %v3806 = vunpack.c.l.b16 %v3745
  %v3807 = vunpack.c.h.b16 %v3745
  %v3808 = vunpack.c.l.b16 %v3746
  %v3809 = vunpack.c.h.b16 %v3746
  %v3810 = vpack.c.b16 %v3770, %v3768
  %v3811 = vpack.c.b16 %v3771, %v3769
  %v3812 = vpack.c.b16 %v3774, %v3772
  %v3813 = vpack.c.b16 %v3775, %v3773
  %v3814 = vpack.c.b16 %v3778, %v3776
  %v3815 = vpack.c.b16 %v3779, %v3777
  %v3816 = vpack.c.b16 %v3782, %v3780
  %v3817 = vpack.c.b16 %v3783, %v3781
  %v3818 = vpack.c.b16 %v3786, %v3784
  %v3819 = vpack.c.b16 %v3787, %v3785
  %v3820 = vpack.c.b16 %v3790, %v3788
  %v3821 = vpack.c.b16 %v3791, %v3789
  %v3822 = vpack.c.b16 %v3794, %v3792
  %v3823 = vpack.c.b16 %v3795, %v3793
  %v3824 = vpack.c.b16 %v3798, %v3796
  %v3825 = vpack.c.b16 %v3799, %v3797
  %v3826 = vpack.c.b16 %v3802, %v3800
  %v3827 = vpack.c.b16 %v3803, %v3801
  %v3828 = vpack.c.b16 %v3806, %v3804
  %v3829 = vpack.c.b16 %v3807, %v3805
  %v3830 = vpack.c.b16 %v3808, %v3808
  %v3831 = vpack.c.b16 %v3809, %v3809
  %v3853 = vsel %vm2578, %v3710, 0
  %v3856 = vsel %vm2578, %v3712, 0
  %v3859 = vsel %vm2578, %v3714, 0
  %v3862 = vsel %vm2578, %v3716, 0
  %v3865 = vsel %vm2578, %v3718, 0
  %v3868 = vsel %vm2578, %v3720, 0
  %v3871 = vsel %vm2578, %v3722, 0
  %v3874 = vsel %vm2578, %v3724, 0
  %v3877 = vsel %vm2603, %v3830, 0
  %v3880 = vsel %vm2603, %v3831, 0
  %3882 = vmatprep.subr.bf16.mxu0 %v3811
  %3883 = vmatpush1.bf16.msra.mxu0 %v3810
  %3884 = vmatprep.subr.bf16.mxu0 %v3813
  %3885 = vmatpush1.bf16.msra.mxu0 %v3812
  %3886 = vmatprep.subr.bf16.mxu0 %v3815
  %3887 = vmatpush1.bf16.msra.mxu0 %v3814
  %3888 = vmatprep.subr.bf16.mxu0 %v3817
  %3889 = vmatpush1.bf16.msra.mxu0 %v3816
  %3890 = vmatprep.subr.bf16.mxu0 %v3819
  %3891 = vmatpush1.bf16.msra.mxu0 %v3818
  %3892 = vmatprep.subr.bf16.mxu0 %v3821
  %3893 = vmatpush1.bf16.msra.mxu0 %v3820
  %3894 = vmatprep.subr.bf16.mxu0 %v3823
  %3895 = vmatpush1.bf16.msra.mxu0 %v3822
  %3896 = vmatprep.subr.bf16.mxu0 %v3825
  %3897 = vmatpush1.bf16.msra.mxu0 %v3824
  %3898 = vmatprep.subr.bf16.mxu0 %v3827
  %3899 = vmatpush1.bf16.msra.mxu0 %v3826
  %3900 = vmatprep.subr.bf16.mxu0 %v3829
  %3901 = vmatpush1.bf16.msra.mxu0 %v3828
  %3902 = vmatprep.subr.bf16.mxu0 %v3880
  %3903 = vmatpush1.bf16.msra.mxu0 %v3877
  %3904 = vmatprep.subr.bf16.mxu0 0
  %3905 = vmatpush1.bf16.msra.mxu0 0
  %3906 = vmatprep.subr.bf16.mxu0 0
  %3907 = vmatpush1.bf16.msra.mxu0 0
  %3908 = vmatprep.subr.bf16.mxu0 0
  %3909 = vmatpush1.bf16.msra.mxu0 0
  %3910 = vmatprep.subr.bf16.mxu0 0
  %3911 = vmatpush1.bf16.msra.mxu0 0
  %3912 = vmatprep.subr.bf16.mxu0 0
  %3913 = vmatpush1.bf16.msra.mxu0 0
  %3914 = vmatprep.mubr.bf16.mxu0 %v3853
  %3915 = vmatmul.mubr.bf16.gmra.mrb[0].mxu0 %v3709
  %v3916 = vpop.f32.mrb[0].mxu0
  %v3917 = vadd.f32 0.0, %v3916
  %v3918 = vpop.f32.mrb[0].mxu0
  %v3919 = vadd.f32 0.0, %v3918
  %v3920 = vpop.f32.mrb[0].mxu0
  %v3921 = vadd.f32 0.0, %v3920
  %v3922 = vpop.f32.mrb[0].mxu0
  %v3923 = vadd.f32 0.0, %v3922
  %3924 = vmatprep.mubr.bf16.mxu0 %v3856
  %3925 = vmatmul.mubr.bf16.gmra.mrb[0].mxu0 %v3711
  %v3926 = vpop.f32.mrb[0].mxu0
  %v3927 = vadd.f32 0.0, %v3926
  %v3928 = vpop.f32.mrb[0].mxu0
  %v3929 = vadd.f32 0.0, %v3928
  %v3930 = vpop.f32.mrb[0].mxu0
  %v3931 = vadd.f32 0.0, %v3930
  %v3932 = vpop.f32.mrb[0].mxu0
  %v3933 = vadd.f32 0.0, %v3932
  %3934 = vmatprep.mubr.bf16.mxu0 %v3859
  %3935 = vmatmul.mubr.bf16.gmra.mrb[0].mxu0 %v3713
  %v3936 = vpop.f32.mrb[0].mxu0
  %v3937 = vadd.f32 0.0, %v3936
  %v3938 = vpop.f32.mrb[0].mxu0
  %v3939 = vadd.f32 0.0, %v3938
  %v3940 = vpop.f32.mrb[0].mxu0
  %v3941 = vadd.f32 0.0, %v3940
  %v3942 = vpop.f32.mrb[0].mxu0
  %v3943 = vadd.f32 0.0, %v3942
  %3944 = vmatprep.mubr.bf16.mxu0 %v3862
  %3945 = vmatmul.mubr.bf16.gmra.mrb[0].mxu0 %v3715
  %v3946 = vpop.f32.mrb[0].mxu0
  %v3947 = vadd.f32 0.0, %v3946
  %v3948 = vpop.f32.mrb[0].mxu0
  %v3949 = vadd.f32 0.0, %v3948
  %v3950 = vpop.f32.mrb[0].mxu0
  %v3951 = vadd.f32 0.0, %v3950
  %v3952 = vpop.f32.mrb[0].mxu0
  %v3953 = vadd.f32 0.0, %v3952
  %3954 = vmatprep.mubr.bf16.mxu0 %v3865
  %3955 = vmatmul.mubr.bf16.gmra.mrb[0].mxu0 %v3717
  %v3956 = vpop.f32.mrb[0].mxu0
  %v3957 = vadd.f32 0.0, %v3956
  %v3958 = vpop.f32.mrb[0].mxu0
  %v3959 = vadd.f32 0.0, %v3958
  %v3960 = vpop.f32.mrb[0].mxu0
  %v3961 = vadd.f32 0.0, %v3960
  %v3962 = vpop.f32.mrb[0].mxu0
  %v3963 = vadd.f32 0.0, %v3962
  %3964 = vmatprep.mubr.bf16.mxu0 %v3868
  %3965 = vmatmul.mubr.bf16.gmra.mrb[0].mxu0 %v3719
  %v3966 = vpop.f32.mrb[0].mxu0
  %v3967 = vadd.f32 0.0, %v3966
  %v3968 = vpop.f32.mrb[0].mxu0
  %v3969 = vadd.f32 0.0, %v3968
  %v3970 = vpop.f32.mrb[0].mxu0
  %v3971 = vadd.f32 0.0, %v3970
  %v3972 = vpop.f32.mrb[0].mxu0
  %v3973 = vadd.f32 0.0, %v3972
  %3974 = vmatprep.mubr.bf16.mxu0 %v3871
  %3975 = vmatmul.mubr.bf16.gmra.mrb[0].mxu0 %v3721
  %v3976 = vpop.f32.mrb[0].mxu0
  %v3977 = vadd.f32 0.0, %v3976
  %v3978 = vpop.f32.mrb[0].mxu0
  %v3979 = vadd.f32 0.0, %v3978
  %v3980 = vpop.f32.mrb[0].mxu0
  %v3981 = vadd.f32 0.0, %v3980
  %v3982 = vpop.f32.mrb[0].mxu0
  %v3983 = vadd.f32 0.0, %v3982
  %3984 = vmatprep.mubr.bf16.mxu0 %v3874
  %3985 = vmatmul.mubr.bf16.gmra.mrb[0].mxu0 %v3723
  %v3986 = vpop.f32.mrb[0].mxu0
  %v3987 = vadd.f32 0.0, %v3986
  %v3988 = vpop.f32.mrb[0].mxu0
  %v3989 = vadd.f32 0.0, %v3988
  %v3990 = vpop.f32.mrb[0].mxu0
  %v3991 = vadd.f32 0.0, %v3990
  %v3992 = vpop.f32.mrb[0].mxu0
  %v3993 = vadd.f32 0.0, %v3992
  %3994 = vdwg.mxu0
  %v3995 = vadd.f32 %v3467, %v3917
  %v3996 = vadd.f32 %v3468, %v3919
  %v3997 = vadd.f32 %v3469, %v3921
  %v3998 = vadd.f32 %v3470, %v3923
  %v3999 = vadd.f32 %v3471, %v3927
  %v4000 = vadd.f32 %v3472, %v3929
  %v4001 = vadd.f32 %v3473, %v3931
  %v4002 = vadd.f32 %v3474, %v3933
  %v4003 = vadd.f32 %v3475, %v3937
  %v4004 = vadd.f32 %v3476, %v3939
  %v4005 = vadd.f32 %v3477, %v3941
  %v4006 = vadd.f32 %v3478, %v3943
  %v4007 = vadd.f32 %v3479, %v3947
  %v4008 = vadd.f32 %v3480, %v3949
  %v4009 = vadd.f32 %v3481, %v3951
  %v4010 = vadd.f32 %v3482, %v3953
  %v4011 = vadd.f32 %v3483, %v3957
  %v4012 = vadd.f32 %v3484, %v3959
  %v4013 = vadd.f32 %v3485, %v3961
  %v4014 = vadd.f32 %v3486, %v3963
  %v4015 = vadd.f32 %v3487, %v3967
  %v4016 = vadd.f32 %v3488, %v3969
  %v4017 = vadd.f32 %v3489, %v3971
  %v4018 = vadd.f32 %v3490, %v3973
  %v4019 = vadd.f32 %v3491, %v3977
  %v4020 = vadd.f32 %v3492, %v3979
  %v4021 = vadd.f32 %v3493, %v3981
  %v4022 = vadd.f32 %v3494, %v3983
  %v4023 = vadd.f32 %v3495, %v3987
  %v4024 = vadd.f32 %v3496, %v3989
  %v4025 = vadd.f32 %v3497, %v3991
  %v4026 = vadd.f32 %v3498, %v3993
  %s4027 = scalar_lea.vmem %s3, 512
  %v4028 = vld [vmem:[%s4027] sm:$0xff]
  %v4029 = vld [vmem:[%s4027 + $0x8] sm:$0xff]
  %v4030 = vld [vmem:[%s4027 + $0x10] sm:$0xff]
  %v4031 = vld [vmem:[%s4027 + $0x18] sm:$0xff]
  %v4032 = vld [vmem:[%s4027 + $0x20] sm:$0xff]
  %v4033 = vld [vmem:[%s4027 + $0x28] sm:$0xff]
  %v4034 = vld [vmem:[%s4027 + $0x30] sm:$0xff]
  %v4035 = vld [vmem:[%s4027 + $0x38] sm:$0xff]
  %v4036 = vld [vmem:[%s4027 + $0x40] sm:$0xff]
  %v4037 = vld [vmem:[%s4027 + $0x48] sm:$0xff]
  %v4038 = vld [vmem:[%s4027 + $0x50] sm:$0xff]
  %v4039 = vld [vmem:[%s4027 + $0x58] sm:$0xff]
  %v4040 = vld [vmem:[%s4027 + $0x60] sm:$0xff]
  %v4041 = vld [vmem:[%s4027 + $0x68] sm:$0xff]
  %v4042 = vld [vmem:[%s4027 + $0x70] sm:$0xff]
  %v4043 = vld [vmem:[%s4027 + $0x78] sm:$0xff]
  %v4060 = vunpack.c.l.b16 %v4028
  %v4061 = vunpack.c.h.b16 %v4028
  %v4062 = vunpack.c.l.b16 %v4029
  %v4063 = vunpack.c.h.b16 %v4029
  %v4064 = vunpack.c.l.b16 %v4030
  %v4065 = vunpack.c.h.b16 %v4030
  %v4066 = vunpack.c.l.b16 %v4031
  %v4067 = vunpack.c.h.b16 %v4031
  %v4068 = vunpack.c.l.b16 %v4032
  %v4069 = vunpack.c.h.b16 %v4032
  %v4070 = vunpack.c.l.b16 %v4033
  %v4071 = vunpack.c.h.b16 %v4033
  %v4072 = vunpack.c.l.b16 %v4034
  %v4073 = vunpack.c.h.b16 %v4034
  %v4074 = vunpack.c.l.b16 %v4035
  %v4075 = vunpack.c.h.b16 %v4035
  %v4076 = vunpack.c.l.b16 %v4036
  %v4077 = vunpack.c.h.b16 %v4036
  %v4078 = vunpack.c.l.b16 %v4037
  %v4079 = vunpack.c.h.b16 %v4037
  %v4080 = vunpack.c.l.b16 %v4038
  %v4081 = vunpack.c.h.b16 %v4038
  %v4082 = vunpack.c.l.b16 %v4039
  %v4083 = vunpack.c.h.b16 %v4039
  %v4084 = vunpack.c.l.b16 %v4040
  %v4085 = vunpack.c.h.b16 %v4040
  %v4086 = vunpack.c.l.b16 %v4041
  %v4087 = vunpack.c.h.b16 %v4041
  %v4088 = vunpack.c.l.b16 %v4042
  %v4089 = vunpack.c.h.b16 %v4042
  %v4090 = vunpack.c.l.b16 %v4043
  %v4091 = vunpack.c.h.b16 %v4043
  %v4092 = vpack.c.b16 %v4062, %v4060
  %v4093 = vpack.c.b16 %v4063, %v4061
  %v4094 = vpack.c.b16 %v4066, %v4064
  %v4095 = vpack.c.b16 %v4067, %v4065
  %v4096 = vpack.c.b16 %v4070, %v4068
  %v4097 = vpack.c.b16 %v4071, %v4069
  %v4098 = vpack.c.b16 %v4074, %v4072
  %v4099 = vpack.c.b16 %v4075, %v4073
  %v4100 = vpack.c.b16 %v4078, %v4076
  %v4101 = vpack.c.b16 %v4079, %v4077
  %v4102 = vpack.c.b16 %v4082, %v4080
  %v4103 = vpack.c.b16 %v4083, %v4081
  %v4104 = vpack.c.b16 %v4086, %v4084
  %v4105 = vpack.c.b16 %v4087, %v4085
  %v4106 = vpack.c.b16 %v4090, %v4088
  %v4107 = vpack.c.b16 %v4091, %v4089
  %4124 = vmatprep.subr.bf16.mxu0 %v1948
  %4125 = vmatpush1.bf16.msra.mxu0 %v1947
  %4126 = vmatprep.subr.bf16.mxu0 %v1950
  %4127 = vmatpush1.bf16.msra.mxu0 %v1949
  %4128 = vmatprep.subr.bf16.mxu0 %v1952
  %4129 = vmatpush1.bf16.msra.mxu0 %v1951
  %4130 = vmatprep.subr.bf16.mxu0 %v1954
  %4131 = vmatpush1.bf16.msra.mxu0 %v1953
  %4132 = vmatprep.subr.bf16.mxu0 %v1956
  %4133 = vmatpush1.bf16.msra.mxu0 %v1955
  %4134 = vmatprep.subr.bf16.mxu0 %v1958
  %4135 = vmatpush1.bf16.msra.mxu0 %v1957
  %4136 = vmatprep.subr.bf16.mxu0 %v1960
  %4137 = vmatpush1.bf16.msra.mxu0 %v1959
  %4138 = vmatprep.subr.bf16.mxu0 %v1962
  %4139 = vmatpush1.bf16.msra.mxu0 %v1961
  %4140 = vmatprep.subr.bf16.mxu0 %v1964
  %4141 = vmatpush1.bf16.msra.mxu0 %v1963
  %4142 = vmatprep.subr.bf16.mxu0 %v1966
  %4143 = vmatpush1.bf16.msra.mxu0 %v1965
  %4144 = vmatprep.subr.bf16.mxu0 %v1968
  %4145 = vmatpush1.bf16.msra.mxu0 %v1967
  %4146 = vmatprep.subr.bf16.mxu0 %v1970
  %4147 = vmatpush1.bf16.msra.mxu0 %v1969
  %4148 = vmatprep.subr.bf16.mxu0 %v1972
  %4149 = vmatpush1.bf16.msra.mxu0 %v1971
  %4150 = vmatprep.subr.bf16.mxu0 %v1974
  %4151 = vmatpush1.bf16.msra.mxu0 %v1973
  %4152 = vmatprep.subr.bf16.mxu0 %v1976
  %4153 = vmatpush1.bf16.msra.mxu0 %v1975
  %4154 = vmatprep.subr.bf16.mxu0 %v1978
  %4155 = vmatpush1.bf16.msra.mxu0 %v1977
  %4156 = vmatprep.mubr.bf16.mxu0 %v4093
  %4157 = vmatmul.mubr.bf16.gmra.mrb[0].mxu0 %v4092
  %v4158 = vpop.f32.mrb[0].mxu0
  %v4159 = vadd.f32 0.0, %v4158
  %v4160 = vpop.f32.mrb[0].mxu0
  %v4161 = vadd.f32 0.0, %v4160
  %v4162 = vpop.f32.mrb[0].mxu0
  %v4163 = vadd.f32 0.0, %v4162
  %v4164 = vpop.f32.mrb[0].mxu0
  %v4165 = vadd.f32 0.0, %v4164
  %4166 = vmatprep.mubr.bf16.mxu0 %v4095
  %4167 = vmatmul.mubr.bf16.gmra.mrb[0].mxu0 %v4094
  %v4168 = vpop.f32.mrb[0].mxu0
  %v4169 = vadd.f32 0.0, %v4168
  %v4170 = vpop.f32.mrb[0].mxu0
  %v4171 = vadd.f32 0.0, %v4170
  %v4172 = vpop.f32.mrb[0].mxu0
  %v4173 = vadd.f32 0.0, %v4172
  %v4174 = vpop.f32.mrb[0].mxu0
  %v4175 = vadd.f32 0.0, %v4174
  %4176 = vmatprep.mubr.bf16.mxu0 %v4097
  %4177 = vmatmul.mubr.bf16.gmra.mrb[0].mxu0 %v4096
  %v4178 = vpop.f32.mrb[0].mxu0
  %v4179 = vadd.f32 0.0, %v4178
  %v4180 = vpop.f32.mrb[0].mxu0
  %v4181 = vadd.f32 0.0, %v4180
  %v4182 = vpop.f32.mrb[0].mxu0
  %v4183 = vadd.f32 0.0, %v4182
  %v4184 = vpop.f32.mrb[0].mxu0
  %v4185 = vadd.f32 0.0, %v4184
  %4186 = vmatprep.mubr.bf16.mxu0 %v4099
  %4187 = vmatmul.mubr.bf16.gmra.mrb[0].mxu0 %v4098
  %v4188 = vpop.f32.mrb[0].mxu0
  %v4189 = vadd.f32 0.0, %v4188
  %v4190 = vpop.f32.mrb[0].mxu0
  %v4191 = vadd.f32 0.0, %v4190
  %v4192 = vpop.f32.mrb[0].mxu0
  %v4193 = vadd.f32 0.0, %v4192
  %v4194 = vpop.f32.mrb[0].mxu0
  %v4195 = vadd.f32 0.0, %v4194
  %4196 = vmatprep.mubr.bf16.mxu0 %v4101
  %4197 = vmatmul.mubr.bf16.gmra.mrb[0].mxu0 %v4100
  %v4198 = vpop.f32.mrb[0].mxu0
  %v4199 = vadd.f32 0.0, %v4198
  %v4200 = vpop.f32.mrb[0].mxu0
  %v4201 = vadd.f32 0.0, %v4200
  %v4202 = vpop.f32.mrb[0].mxu0
  %v4203 = vadd.f32 0.0, %v4202
  %v4204 = vpop.f32.mrb[0].mxu0
  %v4205 = vadd.f32 0.0, %v4204
  %4206 = vmatprep.mubr.bf16.mxu0 %v4103
  %4207 = vmatmul.mubr.bf16.gmra.mrb[0].mxu0 %v4102
  %v4208 = vpop.f32.mrb[0].mxu0
  %v4209 = vadd.f32 0.0, %v4208
  %v4210 = vpop.f32.mrb[0].mxu0
  %v4211 = vadd.f32 0.0, %v4210
  %v4212 = vpop.f32.mrb[0].mxu0
  %v4213 = vadd.f32 0.0, %v4212
  %v4214 = vpop.f32.mrb[0].mxu0
  %v4215 = vadd.f32 0.0, %v4214
  %4216 = vmatprep.mubr.bf16.mxu0 %v4105
  %4217 = vmatmul.mubr.bf16.gmra.mrb[0].mxu0 %v4104
  %v4218 = vpop.f32.mrb[0].mxu0
  %v4219 = vadd.f32 0.0, %v4218
  %v4220 = vpop.f32.mrb[0].mxu0
  %v4221 = vadd.f32 0.0, %v4220
  %v4222 = vpop.f32.mrb[0].mxu0
  %v4223 = vadd.f32 0.0, %v4222
  %v4224 = vpop.f32.mrb[0].mxu0
  %v4225 = vadd.f32 0.0, %v4224
  %4226 = vmatprep.mubr.bf16.mxu0 %v4107
  %4227 = vmatmul.mubr.bf16.gmra.mrb[0].mxu0 %v4106
  %v4228 = vpop.f32.mrb[0].mxu0
  %v4229 = vadd.f32 0.0, %v4228
  %v4230 = vpop.f32.mrb[0].mxu0
  %v4231 = vadd.f32 0.0, %v4230
  %v4232 = vpop.f32.mrb[0].mxu0
  %v4233 = vadd.f32 0.0, %v4232
  %v4234 = vpop.f32.mrb[0].mxu0
  %v4235 = vadd.f32 0.0, %v4234
  %4236 = vdwg.mxu0
  %v4237 = vpack.c.bf16 %v4163, %v4159
  %v4238 = vpack.c.bf16 %v4165, %v4161
  %v4239 = vpack.c.bf16 %v4173, %v4169
  %v4240 = vpack.c.bf16 %v4175, %v4171
  %v4241 = vpack.c.bf16 %v4183, %v4179
  %v4242 = vpack.c.bf16 %v4185, %v4181
  %v4243 = vpack.c.bf16 %v4193, %v4189
  %v4244 = vpack.c.bf16 %v4195, %v4191
  %v4245 = vpack.c.bf16 %v4203, %v4199
  %v4246 = vpack.c.bf16 %v4205, %v4201
  %v4247 = vpack.c.bf16 %v4213, %v4209
  %v4248 = vpack.c.bf16 %v4215, %v4211
  %v4249 = vpack.c.bf16 %v4223, %v4219
  %v4250 = vpack.c.bf16 %v4225, %v4221
  %v4251 = vpack.c.bf16 %v4233, %v4229
  %v4252 = vpack.c.bf16 %v4235, %v4231
  %s4253 = scalar_lea.vmem %s4, 672
  %v4254 = vld [vmem:[%s4253] sm:$0xff]
  %v4255 = vld [vmem:[%s4253 + $0x8] sm:$0xff]
  %v4256 = vld [vmem:[%s4253 + $0x10] sm:$0xff]
  %v4257 = vld [vmem:[%s4253 + $0x18] sm:$0xff]
  %v4258 = vld [vmem:[%s4253 + $0x20] sm:$0xff]
  %v4259 = vld [vmem:[%s4253 + $0x28] sm:$0xff]
  %v4260 = vld [vmem:[%s4253 + $0x30] sm:$0xff]
  %v4261 = vld [vmem:[%s4253 + $0x38] sm:$0xff]
  %v4262 = vld [vmem:[%s4253 + $0x40] sm:$0xff]
  %v4263 = vld [vmem:[%s4253 + $0x48] sm:$0xff]
  %v4264 = vld [vmem:[%s4253 + $0x50] sm:$0xff]
  %v4265 = vld [vmem:[%s4253 + $0x58] sm:$0xff]
  %v4266 = vld [vmem:[%s4253 + $0x60] sm:$0xff]
  %v4267 = vld [vmem:[%s4253 + $0x68] sm:$0xff]
  %v4268 = vld [vmem:[%s4253 + $0x70] sm:$0xff]
  %v4269 = vld [vmem:[%s4253 + $0x78] sm:$0xff]
  %v4270 = vld [vmem:[%s4253 + $0x80] sm:$0xff]
  %v4271 = vld [vmem:[%s4253 + $0x88] sm:$0xff]
  %v4272 = vld [vmem:[%s4253 + $0x90] sm:$0xff]
  %v4273 = vld [vmem:[%s4253 + $0x98] sm:$0xff]
  %v4274 = vld [vmem:[%s4253 + $0xa0] sm:$0xff]
  %v4296 = vunpack.c.l.b16 %v4254
  %v4297 = vunpack.c.h.b16 %v4254
  %v4298 = vunpack.c.l.b16 %v4255
  %v4299 = vunpack.c.h.b16 %v4255
  %v4300 = vunpack.c.l.b16 %v4256
  %v4301 = vunpack.c.h.b16 %v4256
  %v4302 = vunpack.c.l.b16 %v4257
  %v4303 = vunpack.c.h.b16 %v4257
  %v4304 = vunpack.c.l.b16 %v4258
  %v4305 = vunpack.c.h.b16 %v4258
  %v4306 = vunpack.c.l.b16 %v4259
  %v4307 = vunpack.c.h.b16 %v4259
  %v4308 = vunpack.c.l.b16 %v4260
  %v4309 = vunpack.c.h.b16 %v4260
  %v4310 = vunpack.c.l.b16 %v4261
  %v4311 = vunpack.c.h.b16 %v4261
  %v4312 = vunpack.c.l.b16 %v4262
  %v4313 = vunpack.c.h.b16 %v4262
  %v4314 = vunpack.c.l.b16 %v4263
  %v4315 = vunpack.c.h.b16 %v4263
  %v4316 = vunpack.c.l.b16 %v4264
  %v4317 = vunpack.c.h.b16 %v4264
  %v4318 = vunpack.c.l.b16 %v4265
  %v4319 = vunpack.c.h.b16 %v4265
  %v4320 = vunpack.c.l.b16 %v4266
  %v4321 = vunpack.c.h.b16 %v4266
  %v4322 = vunpack.c.l.b16 %v4267
  %v4323 = vunpack.c.h.b16 %v4267
  %v4324 = vunpack.c.l.b16 %v4268
  %v4325 = vunpack.c.h.b16 %v4268
  %v4326 = vunpack.c.l.b16 %v4269
  %v4327 = vunpack.c.h.b16 %v4269
  %v4328 = vunpack.c.l.b16 %v4270
  %v4329 = vunpack.c.h.b16 %v4270
  %v4330 = vunpack.c.l.b16 %v4271
  %v4331 = vunpack.c.h.b16 %v4271
  %v4332 = vunpack.c.l.b16 %v4272
  %v4333 = vunpack.c.h.b16 %v4272
  %v4334 = vunpack.c.l.b16 %v4273
  %v4335 = vunpack.c.h.b16 %v4273
  %v4336 = vunpack.c.l.b16 %v4274
  %v4337 = vunpack.c.h.b16 %v4274
  %v4338 = vpack.c.b16 %v4298, %v4296
  %v4339 = vpack.c.b16 %v4299, %v4297
  %v4340 = vpack.c.b16 %v4302, %v4300
  %v4341 = vpack.c.b16 %v4303, %v4301
  %v4342 = vpack.c.b16 %v4306, %v4304
  %v4343 = vpack.c.b16 %v4307, %v4305
  %v4344 = vpack.c.b16 %v4310, %v4308
  %v4345 = vpack.c.b16 %v4311, %v4309
  %v4346 = vpack.c.b16 %v4314, %v4312
  %v4347 = vpack.c.b16 %v4315, %v4313
  %v4348 = vpack.c.b16 %v4318, %v4316
  %v4349 = vpack.c.b16 %v4319, %v4317
  %v4350 = vpack.c.b16 %v4322, %v4320
  %v4351 = vpack.c.b16 %v4323, %v4321
  %v4352 = vpack.c.b16 %v4326, %v4324
  %v4353 = vpack.c.b16 %v4327, %v4325
  %v4354 = vpack.c.b16 %v4330, %v4328
  %v4355 = vpack.c.b16 %v4331, %v4329
  %v4356 = vpack.c.b16 %v4334, %v4332
  %v4357 = vpack.c.b16 %v4335, %v4333
  %v4358 = vpack.c.b16 %v4336, %v4336
  %v4359 = vpack.c.b16 %v4337, %v4337
  %v4381 = vsel %vm2578, %v4238, 0
  %v4384 = vsel %vm2578, %v4240, 0
  %v4387 = vsel %vm2578, %v4242, 0
  %v4390 = vsel %vm2578, %v4244, 0
  %v4393 = vsel %vm2578, %v4246, 0
  %v4396 = vsel %vm2578, %v4248, 0
  %v4399 = vsel %vm2578, %v4250, 0
  %v4402 = vsel %vm2578, %v4252, 0
  %v4405 = vsel %vm2603, %v4358, 0
  %v4408 = vsel %vm2603, %v4359, 0
  %4410 = vmatprep.subr.bf16.mxu0 %v4339
  %4411 = vmatpush1.bf16.msra.mxu0 %v4338
  %4412 = vmatprep.subr.bf16.mxu0 %v4341
  %4413 = vmatpush1.bf16.msra.mxu0 %v4340
  %4414 = vmatprep.subr.bf16.mxu0 %v4343
  %4415 = vmatpush1.bf16.msra.mxu0 %v4342
  %4416 = vmatprep.subr.bf16.mxu0 %v4345
  %4417 = vmatpush1.bf16.msra.mxu0 %v4344
  %4418 = vmatprep.subr.bf16.mxu0 %v4347
  %4419 = vmatpush1.bf16.msra.mxu0 %v4346
  %4420 = vmatprep.subr.bf16.mxu0 %v4349
  %4421 = vmatpush1.bf16.msra.mxu0 %v4348
  %4422 = vmatprep.subr.bf16.mxu0 %v4351
  %4423 = vmatpush1.bf16.msra.mxu0 %v4350
  %4424 = vmatprep.subr.bf16.mxu0 %v4353
  %4425 = vmatpush1.bf16.msra.mxu0 %v4352
  %4426 = vmatprep.subr.bf16.mxu0 %v4355
  %4427 = vmatpush1.bf16.msra.mxu0 %v4354
  %4428 = vmatprep.subr.bf16.mxu0 %v4357
  %4429 = vmatpush1.bf16.msra.mxu0 %v4356
  %4430 = vmatprep.subr.bf16.mxu0 %v4408
  %4431 = vmatpush1.bf16.msra.mxu0 %v4405
  %4432 = vmatprep.subr.bf16.mxu0 0
  %4433 = vmatpush1.bf16.msra.mxu0 0
  %4434 = vmatprep.subr.bf16.mxu0 0
  %4435 = vmatpush1.bf16.msra.mxu0 0
  %4436 = vmatprep.subr.bf16.mxu0 0
  %4437 = vmatpush1.bf16.msra.mxu0 0
  %4438 = vmatprep.subr.bf16.mxu0 0
  %4439 = vmatpush1.bf16.msra.mxu0 0
  %4440 = vmatprep.subr.bf16.mxu0 0
  %4441 = vmatpush1.bf16.msra.mxu0 0
  %4442 = vmatprep.mubr.bf16.mxu0 %v4381
  %4443 = vmatmul.mubr.bf16.gmra.mrb[0].mxu0 %v4237
  %v4444 = vpop.f32.mrb[0].mxu0
  %v4445 = vadd.f32 0.0, %v4444
  %v4446 = vpop.f32.mrb[0].mxu0
  %v4447 = vadd.f32 0.0, %v4446
  %v4448 = vpop.f32.mrb[0].mxu0
  %v4449 = vadd.f32 0.0, %v4448
  %v4450 = vpop.f32.mrb[0].mxu0
  %v4451 = vadd.f32 0.0, %v4450
  %4452 = vmatprep.mubr.bf16.mxu0 %v4384
  %4453 = vmatmul.mubr.bf16.gmra.mrb[0].mxu0 %v4239
  %v4454 = vpop.f32.mrb[0].mxu0
  %v4455 = vadd.f32 0.0, %v4454
  %v4456 = vpop.f32.mrb[0].mxu0
  %v4457 = vadd.f32 0.0, %v4456
  %v4458 = vpop.f32.mrb[0].mxu0
  %v4459 = vadd.f32 0.0, %v4458
  %v4460 = vpop.f32.mrb[0].mxu0
  %v4461 = vadd.f32 0.0, %v4460
  %4462 = vmatprep.mubr.bf16.mxu0 %v4387
  %4463 = vmatmul.mubr.bf16.gmra.mrb[0].mxu0 %v4241
  %v4464 = vpop.f32.mrb[0].mxu0
  %v4465 = vadd.f32 0.0, %v4464
  %v4466 = vpop.f32.mrb[0].mxu0
  %v4467 = vadd.f32 0.0, %v4466
  %v4468 = vpop.f32.mrb[0].mxu0
  %v4469 = vadd.f32 0.0, %v4468
  %v4470 = vpop.f32.mrb[0].mxu0
  %v4471 = vadd.f32 0.0, %v4470
  %4472 = vmatprep.mubr.bf16.mxu0 %v4390
  %4473 = vmatmul.mubr.bf16.gmra.mrb[0].mxu0 %v4243
  %v4474 = vpop.f32.mrb[0].mxu0
  %v4475 = vadd.f32 0.0, %v4474
  %v4476 = vpop.f32.mrb[0].mxu0
  %v4477 = vadd.f32 0.0, %v4476
  %v4478 = vpop.f32.mrb[0].mxu0
  %v4479 = vadd.f32 0.0, %v4478
  %v4480 = vpop.f32.mrb[0].mxu0
  %v4481 = vadd.f32 0.0, %v4480
  %4482 = vmatprep.mubr.bf16.mxu0 %v4393
  %4483 = vmatmul.mubr.bf16.gmra.mrb[0].mxu0 %v4245
  %v4484 = vpop.f32.mrb[0].mxu0
  %v4485 = vadd.f32 0.0, %v4484
  %v4486 = vpop.f32.mrb[0].mxu0
  %v4487 = vadd.f32 0.0, %v4486
  %v4488 = vpop.f32.mrb[0].mxu0
  %v4489 = vadd.f32 0.0, %v4488
  %v4490 = vpop.f32.mrb[0].mxu0
  %v4491 = vadd.f32 0.0, %v4490
  %4492 = vmatprep.mubr.bf16.mxu0 %v4396
  %4493 = vmatmul.mubr.bf16.gmra.mrb[0].mxu0 %v4247
  %v4494 = vpop.f32.mrb[0].mxu0
  %v4495 = vadd.f32 0.0, %v4494
  %v4496 = vpop.f32.mrb[0].mxu0
  %v4497 = vadd.f32 0.0, %v4496
  %v4498 = vpop.f32.mrb[0].mxu0
  %v4499 = vadd.f32 0.0, %v4498
  %v4500 = vpop.f32.mrb[0].mxu0
  %v4501 = vadd.f32 0.0, %v4500
  %4502 = vmatprep.mubr.bf16.mxu0 %v4399
  %4503 = vmatmul.mubr.bf16.gmra.mrb[0].mxu0 %v4249
  %v4504 = vpop.f32.mrb[0].mxu0
  %v4505 = vadd.f32 0.0, %v4504
  %v4506 = vpop.f32.mrb[0].mxu0
  %v4507 = vadd.f32 0.0, %v4506
  %v4508 = vpop.f32.mrb[0].mxu0
  %v4509 = vadd.f32 0.0, %v4508
  %v4510 = vpop.f32.mrb[0].mxu0
  %v4511 = vadd.f32 0.0, %v4510
  %4512 = vmatprep.mubr.bf16.mxu0 %v4402
  %4513 = vmatmul.mubr.bf16.gmra.mrb[0].mxu0 %v4251
  %v4514 = vpop.f32.mrb[0].mxu0
  %v4515 = vadd.f32 0.0, %v4514
  %v4516 = vpop.f32.mrb[0].mxu0
  %v4517 = vadd.f32 0.0, %v4516
  %v4518 = vpop.f32.mrb[0].mxu0
  %v4519 = vadd.f32 0.0, %v4518
  %v4520 = vpop.f32.mrb[0].mxu0
  %v4521 = vadd.f32 0.0, %v4520
  %4522 = vdwg.mxu0
  %v4523 = vadd.f32 %v3995, %v4445
  %v4524 = vadd.f32 %v3996, %v4447
  %v4525 = vadd.f32 %v3997, %v4449
  %v4526 = vadd.f32 %v3998, %v4451
  %v4527 = vadd.f32 %v3999, %v4455
  %v4528 = vadd.f32 %v4000, %v4457
  %v4529 = vadd.f32 %v4001, %v4459
  %v4530 = vadd.f32 %v4002, %v4461
  %v4531 = vadd.f32 %v4003, %v4465
  %v4532 = vadd.f32 %v4004, %v4467
  %v4533 = vadd.f32 %v4005, %v4469
  %v4534 = vadd.f32 %v4006, %v4471
  %v4535 = vadd.f32 %v4007, %v4475
  %v4536 = vadd.f32 %v4008, %v4477
  %v4537 = vadd.f32 %v4009, %v4479
  %v4538 = vadd.f32 %v4010, %v4481
  %v4539 = vadd.f32 %v4011, %v4485
  %v4540 = vadd.f32 %v4012, %v4487
  %v4541 = vadd.f32 %v4013, %v4489
  %v4542 = vadd.f32 %v4014, %v4491
  %v4543 = vadd.f32 %v4015, %v4495
  %v4544 = vadd.f32 %v4016, %v4497
  %v4545 = vadd.f32 %v4017, %v4499
  %v4546 = vadd.f32 %v4018, %v4501
  %v4547 = vadd.f32 %v4019, %v4505
  %v4548 = vadd.f32 %v4020, %v4507
  %v4549 = vadd.f32 %v4021, %v4509
  %v4550 = vadd.f32 %v4022, %v4511
  %v4551 = vadd.f32 %v4023, %v4515
  %v4552 = vadd.f32 %v4024, %v4517
  %v4553 = vadd.f32 %v4025, %v4519
  %v4554 = vadd.f32 %v4026, %v4521
  %v4555 = vld [vmem:[%s5] sm:$0x3]
  %v4557 = vlaneseq
  %v4558 = vshrl.u32 %v4557, 7
  %v4559 = vsub.s32 0, %v4558
  %v4560 = vrot.slane %v4555, %v4559
  %v4561 = vlaneseq
  %v4562 = vshrl.u32 %v4561, 7
  %v4563 = vsub.s32 1, %v4562
  %v4564 = vrot.slane %v4555, %v4563
  %v4567 = vadd.f32 %v4523, %v4560
  %v4568 = vadd.f32 %v4524, %v4564
  %v4569 = vadd.f32 %v4525, %v4560
  %v4570 = vadd.f32 %v4526, %v4564
  %v4571 = vadd.f32 %v4527, %v4560
  %v4572 = vadd.f32 %v4528, %v4564
  %v4573 = vadd.f32 %v4529, %v4560
  %v4574 = vadd.f32 %v4530, %v4564
  %v4575 = vadd.f32 %v4531, %v4560
  %v4576 = vadd.f32 %v4532, %v4564
  %v4577 = vadd.f32 %v4533, %v4560
  %v4578 = vadd.f32 %v4534, %v4564
  %v4579 = vadd.f32 %v4535, %v4560
  %v4580 = vadd.f32 %v4536, %v4564
  %v4581 = vadd.f32 %v4537, %v4560
  %v4582 = vadd.f32 %v4538, %v4564
  %v4583 = vadd.f32 %v4539, %v4560
  %v4584 = vadd.f32 %v4540, %v4564
  %v4585 = vadd.f32 %v4541, %v4560
  %v4586 = vadd.f32 %v4542, %v4564
  %v4587 = vadd.f32 %v4543, %v4560
  %v4588 = vadd.f32 %v4544, %v4564
  %v4589 = vadd.f32 %v4545, %v4560
  %v4590 = vadd.f32 %v4546, %v4564
  %v4591 = vadd.f32 %v4547, %v4560
  %v4592 = vadd.f32 %v4548, %v4564
  %v4593 = vadd.f32 %v4549, %v4560
  %v4594 = vadd.f32 %v4550, %v4564
  %v4595 = vadd.f32 %v4551, %v4560
  %v4596 = vadd.f32 %v4552, %v4564
  %v4597 = vadd.f32 %v4553, %v4560
  %v4598 = vadd.f32 %v4554, %v4564
  %v4599 = vmax.f32 %v4567, 0.0
  %v4600 = vmax.f32 %v4568, 0.0
  %v4601 = vmax.f32 %v4569, 0.0
  %v4602 = vmax.f32 %v4570, 0.0
  %v4603 = vmax.f32 %v4571, 0.0
  %v4604 = vmax.f32 %v4572, 0.0
  %v4605 = vmax.f32 %v4573, 0.0
  %v4606 = vmax.f32 %v4574, 0.0
  %v4607 = vmax.f32 %v4575, 0.0
  %v4608 = vmax.f32 %v4576, 0.0
  %v4609 = vmax.f32 %v4577, 0.0
  %v4610 = vmax.f32 %v4578, 0.0
  %v4611 = vmax.f32 %v4579, 0.0
  %v4612 = vmax.f32 %v4580, 0.0
  %v4613 = vmax.f32 %v4581, 0.0
  %v4614 = vmax.f32 %v4582, 0.0
  %v4615 = vmax.f32 %v4583, 0.0
  %v4616 = vmax.f32 %v4584, 0.0
  %v4617 = vmax.f32 %v4585, 0.0
  %v4618 = vmax.f32 %v4586, 0.0
  %v4619 = vmax.f32 %v4587, 0.0
  %v4620 = vmax.f32 %v4588, 0.0
  %v4621 = vmax.f32 %v4589, 0.0
  %v4622 = vmax.f32 %v4590, 0.0
  %v4623 = vmax.f32 %v4591, 0.0
  %v4624 = vmax.f32 %v4592, 0.0
  %v4625 = vmax.f32 %v4593, 0.0
  %v4626 = vmax.f32 %v4594, 0.0
  %v4627 = vmax.f32 %v4595, 0.0
  %v4628 = vmax.f32 %v4596, 0.0
  %v4629 = vmax.f32 %v4597, 0.0
  %v4630 = vmax.f32 %v4598, 0.0
  %v4631 = vpack.c.bf16 %v4601, %v4599
  %v4632 = vpack.c.bf16 %v4602, %v4600
  %v4633 = vpack.c.bf16 %v4605, %v4603
  %v4634 = vpack.c.bf16 %v4606, %v4604
  %v4635 = vpack.c.bf16 %v4609, %v4607
  %v4636 = vpack.c.bf16 %v4610, %v4608
  %v4637 = vpack.c.bf16 %v4613, %v4611
  %v4638 = vpack.c.bf16 %v4614, %v4612
  %v4639 = vpack.c.bf16 %v4617, %v4615
  %v4640 = vpack.c.bf16 %v4618, %v4616
  %v4641 = vpack.c.bf16 %v4621, %v4619
  %v4642 = vpack.c.bf16 %v4622, %v4620
  %v4643 = vpack.c.bf16 %v4625, %v4623
  %v4644 = vpack.c.bf16 %v4626, %v4624
  %v4645 = vpack.c.bf16 %v4629, %v4627
  %v4646 = vpack.c.bf16 %v4630, %v4628
  %v4647 = vld [vmem:[%s6] sm:$0xf]
  %4648 = vmatprep.subr.bf16.mxu0 %v4632
  %4649 = vmatpush1.bf16.msra.mxu0 %v4631
  %4650 = vmatprep.subr.bf16.mxu0 %v4634
  %4651 = vmatpush1.bf16.msra.mxu0 %v4633
  %4652 = vmatprep.subr.bf16.mxu0 %v4636
  %4653 = vmatpush1.bf16.msra.mxu0 %v4635
  %4654 = vmatprep.subr.bf16.mxu0 %v4638
  %4655 = vmatpush1.bf16.msra.mxu0 %v4637
  %4656 = vmatprep.subr.bf16.mxu0 %v4640
  %4657 = vmatpush1.bf16.msra.mxu0 %v4639
  %4658 = vmatprep.subr.bf16.mxu0 %v4642
  %4659 = vmatpush1.bf16.msra.mxu0 %v4641
  %4660 = vmatprep.subr.bf16.mxu0 %v4644
  %4661 = vmatpush1.bf16.msra.mxu0 %v4643
  %4662 = vmatprep.subr.bf16.mxu0 %v4646
  %4663 = vmatpush1.bf16.msra.mxu0 %v4645
  %4664 = vmatprep.subr.bf16.mxu0 0
  %4665 = vmatpush1.bf16.msra.mxu0 0
  %4666 = vmatprep.subr.bf16.mxu0 0
  %4667 = vmatpush1.bf16.msra.mxu0 0
  %4668 = vmatprep.subr.bf16.mxu0 0
  %4669 = vmatpush1.bf16.msra.mxu0 0
  %4670 = vmatprep.subr.bf16.mxu0 0
  %4671 = vmatpush1.bf16.msra.mxu0 0
  %4672 = vmatprep.subr.bf16.mxu0 0
  %4673 = vmatpush1.bf16.msra.mxu0 0
  %4674 = vmatprep.subr.bf16.mxu0 0
  %4675 = vmatpush1.bf16.msra.mxu0 0
  %4676 = vmatprep.subr.bf16.mxu0 0
  %4677 = vmatpush1.bf16.msra.mxu0 0
  %4678 = vmatprep.subr.bf16.mxu0 0
  %4679 = vmatpush1.bf16.msra.mxu0 0
  %4680 = vmatprep.mubr.bf16.mxu0 0
  %4681 = vmatmul.mubr.bf16.gmra.mrb[0].mxu0 %v4647
  %v4682 = vpop.f32.mrb[0].mxu0
  %v4683 = vadd.f32 0.0, %v4682
  %v4684 = vpop.f32.mrb[0].mxu0
  %v4685 = vadd.f32 0.0, %v4684
  %v4686 = vpop.f32.mrb[0].mxu0
  %v4687 = vpop.f32.mrb[0].mxu0
  %4688 = vdwg.mxu0
  %v4689 = vpack.c.bf16 %v4683, %v4683
  %v4690 = vpack.c.bf16 %v4685, %v4685
  %v4691 = vld [vmem:[%s7] sm:$0xf]
  %v4692 = vld [vmem:[%s7 + $0x4] sm:$0xf]
  %v4693 = vld [vmem:[%s7 + $0x8] sm:$0xf]
  %v4694 = vld [vmem:[%s7 + $0xc] sm:$0xf]
  %v4695 = vld [vmem:[%s7 + $0x10] sm:$0xf]
  %v4696 = vld [vmem:[%s7 + $0x14] sm:$0xf]
  %v4697 = vld [vmem:[%s7 + $0x18] sm:$0xf]
  %v4698 = vld [vmem:[%s7 + $0x1c] sm:$0xf]
  %v4699 = vld [vmem:[%s7 + $0x20] sm:$0xf]
  %v4700 = vld [vmem:[%s7 + $0x24] sm:$0xf]
  %v4701 = vld [vmem:[%s7 + $0x28] sm:$0xf]
  %v4702 = vld [vmem:[%s7 + $0x2c] sm:$0xf]
  %v4703 = vld [vmem:[%s7 + $0x30] sm:$0xf]
  %v4704 = vld [vmem:[%s7 + $0x34] sm:$0xf]
  %v4705 = vld [vmem:[%s7 + $0x38] sm:$0xf]
  %v4706 = vld [vmem:[%s7 + $0x3c] sm:$0xf]
  %v4707 = vld [vmem:[%s7 + $0x40] sm:$0xf]
  %v4708 = vld [vmem:[%s7 + $0x44] sm:$0xf]
  %v4709 = vld [vmem:[%s7 + $0x48] sm:$0xf]
  %v4710 = vld [vmem:[%s7 + $0x4c] sm:$0xf]
  %s4711 = scalar_lea.vmem %s6, 4
  %v4712 = vld [vmem:[%s4711] sm:$0xf]
  %4713 = vmatprep.subr.bf16.mxu0 %v4632
  %4714 = vmatpush1.bf16.msra.mxu0 %v4631
  %4715 = vmatprep.subr.bf16.mxu0 %v4634
  %4716 = vmatpush1.bf16.msra.mxu0 %v4633
  %4717 = vmatprep.subr.bf16.mxu0 %v4636
  %4718 = vmatpush1.bf16.msra.mxu0 %v4635
  %4719 = vmatprep.subr.bf16.mxu0 %v4638
  %4720 = vmatpush1.bf16.msra.mxu0 %v4637
  %4721 = vmatprep.subr.bf16.mxu0 %v4640
  %4722 = vmatpush1.bf16.msra.mxu0 %v4639
  %4723 = vmatprep.subr.bf16.mxu0 %v4642
  %4724 = vmatpush1.bf16.msra.mxu0 %v4641
  %4725 = vmatprep.subr.bf16.mxu0 %v4644
  %4726 = vmatpush1.bf16.msra.mxu0 %v4643
  %4727 = vmatprep.subr.bf16.mxu0 %v4646
  %4728 = vmatpush1.bf16.msra.mxu0 %v4645
  %4729 = vmatprep.subr.bf16.mxu0 0
  %4730 = vmatpush1.bf16.msra.mxu0 0
  %4731 = vmatprep.subr.bf16.mxu0 0
  %4732 = vmatpush1.bf16.msra.mxu0 0
  %4733 = vmatprep.subr.bf16.mxu0 0
  %4734 = vmatpush1.bf16.msra.mxu0 0
  %4735 = vmatprep.subr.bf16.mxu0 0
  %4736 = vmatpush1.bf16.msra.mxu0 0
  %4737 = vmatprep.subr.bf16.mxu0 0
  %4738 = vmatpush1.bf16.msra.mxu0 0
  %4739 = vmatprep.subr.bf16.mxu0 0
  %4740 = vmatpush1.bf16.msra.mxu0 0
  %4741 = vmatprep.subr.bf16.mxu0 0
  %4742 = vmatpush1.bf16.msra.mxu0 0
  %4743 = vmatprep.subr.bf16.mxu0 0
  %4744 = vmatpush1.bf16.msra.mxu0 0
  %4745 = vmatprep.mubr.bf16.mxu0 0
  %4746 = vmatmul.mubr.bf16.gmra.mrb[0].mxu0 %v4712
  %v4747 = vpop.f32.mrb[0].mxu0
  %v4748 = vadd.f32 0.0, %v4747
  %v4749 = vpop.f32.mrb[0].mxu0
  %v4750 = vadd.f32 0.0, %v4749
  %v4751 = vpop.f32.mrb[0].mxu0
  %v4752 = vpop.f32.mrb[0].mxu0
  %4753 = vdwg.mxu0
  %v4754 = vpack.c.bf16 %v4748, %v4748
  %v4755 = vpack.c.bf16 %v4750, %v4750
  %s4756 = scalar_lea.vmem %s7, 80
  %v4757 = vld [vmem:[%s4756] sm:$0xf]
  %v4758 = vld [vmem:[%s4756 + $0x4] sm:$0xf]
  %v4759 = vld [vmem:[%s4756 + $0x8] sm:$0xf]
  %v4760 = vld [vmem:[%s4756 + $0xc] sm:$0xf]
  %v4761 = vld [vmem:[%s4756 + $0x10] sm:$0xf]
  %v4762 = vld [vmem:[%s4756 + $0x14] sm:$0xf]
  %v4763 = vld [vmem:[%s4756 + $0x18] sm:$0xf]
  %v4764 = vld [vmem:[%s4756 + $0x1c] sm:$0xf]
  %v4765 = vld [vmem:[%s4756 + $0x20] sm:$0xf]
  %v4766 = vld [vmem:[%s4756 + $0x24] sm:$0xf]
  %v4767 = vld [vmem:[%s4756 + $0x28] sm:$0xf]
  %v4768 = vld [vmem:[%s4756 + $0x2c] sm:$0xf]
  %v4769 = vld [vmem:[%s4756 + $0x30] sm:$0xf]
  %v4770 = vld [vmem:[%s4756 + $0x34] sm:$0xf]
  %v4771 = vld [vmem:[%s4756 + $0x38] sm:$0xf]
  %v4772 = vld [vmem:[%s4756 + $0x3c] sm:$0xf]
  %v4773 = vld [vmem:[%s4756 + $0x40] sm:$0xf]
  %v4774 = vld [vmem:[%s4756 + $0x44] sm:$0xf]
  %v4775 = vld [vmem:[%s4756 + $0x48] sm:$0xf]
  %v4776 = vld [vmem:[%s4756 + $0x4c] sm:$0xf]
  %v4797 = vunpack.c.l.b16 %v4757
  %v4798 = vunpack.c.l.b16 %v4758
  %v4799 = vunpack.c.l.b16 %v4759
  %v4800 = vunpack.c.l.b16 %v4760
  %v4801 = vunpack.c.l.b16 %v4761
  %v4802 = vunpack.c.l.b16 %v4762
  %v4803 = vunpack.c.l.b16 %v4763
  %v4804 = vunpack.c.l.b16 %v4764
  %v4805 = vunpack.c.l.b16 %v4765
  %v4806 = vunpack.c.l.b16 %v4766
  %v4807 = vunpack.c.l.b16 %v4767
  %v4808 = vunpack.c.l.b16 %v4768
  %v4809 = vunpack.c.l.b16 %v4769
  %v4810 = vunpack.c.l.b16 %v4770
  %v4811 = vunpack.c.l.b16 %v4771
  %v4812 = vunpack.c.l.b16 %v4772
  %v4813 = vunpack.c.l.b16 %v4773
  %v4814 = vunpack.c.l.b16 %v4774
  %v4815 = vunpack.c.l.b16 %v4775
  %v4816 = vunpack.c.l.b16 %v4776
  %v4817 = vpack.c.b16 %v4798, %v4797
  %v4818 = vpack.c.b16 %v4800, %v4799
  %v4819 = vpack.c.b16 %v4802, %v4801
  %v4820 = vpack.c.b16 %v4804, %v4803
  %v4821 = vpack.c.b16 %v4806, %v4805
  %v4822 = vpack.c.b16 %v4808, %v4807
  %v4823 = vpack.c.b16 %v4810, %v4809
  %v4824 = vpack.c.b16 %v4812, %v4811
  %v4825 = vpack.c.b16 %v4814, %v4813
  %v4826 = vpack.c.b16 %v4816, %v4815
  %v4838 = vsel %vm170, %v4755, 0
  %4840 = vmatprep.subr.bf16.mxu0 0
  %4841 = vmatpush1.bf16.msra.mxu0 %v4817
  %4842 = vmatprep.subr.bf16.mxu0 0
  %4843 = vmatpush1.bf16.msra.mxu0 %v4818
  %4844 = vmatprep.subr.bf16.mxu0 0
  %4845 = vmatpush1.bf16.msra.mxu0 %v4819
  %4846 = vmatprep.subr.bf16.mxu0 0
  %4847 = vmatpush1.bf16.msra.mxu0 %v4820
  %4848 = vmatprep.subr.bf16.mxu0 0
  %4849 = vmatpush1.bf16.msra.mxu0 %v4821
  %4850 = vmatprep.subr.bf16.mxu0 0
  %4851 = vmatpush1.bf16.msra.mxu0 %v4822
  %4852 = vmatprep.subr.bf16.mxu0 0
  %4853 = vmatpush1.bf16.msra.mxu0 %v4823
  %4854 = vmatprep.subr.bf16.mxu0 0
  %4855 = vmatpush1.bf16.msra.mxu0 %v4824
  %4856 = vmatprep.subr.bf16.mxu0 0
  %4857 = vmatpush1.bf16.msra.mxu0 %v4825
  %4858 = vmatprep.subr.bf16.mxu0 0
  %4859 = vmatpush1.bf16.msra.mxu0 %v4826
  %4860 = vmatprep.subr.bf16.mxu0 0
  %4861 = vmatpush1.bf16.msra.mxu0 0
  %4862 = vmatprep.subr.bf16.mxu0 0
  %4863 = vmatpush1.bf16.msra.mxu0 0
  %4864 = vmatprep.subr.bf16.mxu0 0
  %4865 = vmatpush1.bf16.msra.mxu0 0
  %4866 = vmatprep.subr.bf16.mxu0 0
  %4867 = vmatpush1.bf16.msra.mxu0 0
  %4868 = vmatprep.subr.bf16.mxu0 0
  %4869 = vmatpush1.bf16.msra.mxu0 0
  %4870 = vmatprep.subr.bf16.mxu0 0
  %4871 = vmatpush1.bf16.msra.mxu0 0
  %4872 = vmatprep.mubr.bf16.mxu0 %v4838
  %4873 = vmatmul.mubr.bf16.gmra.mrb[0].mxu0 %v4754
  %v4874 = vpop.f32.mrb[0].mxu0
  %v4875 = vadd.f32 0.0, %v4874
  %v4876 = vpop.f32.mrb[0].mxu0
  %v4877 = vpop.f32.mrb[0].mxu0
  %v4878 = vpop.f32.mrb[0].mxu0
  %4879 = vdwg.mxu0
  %v4900 = vunpack.c.l.b16 %v4691
  %v4901 = vunpack.c.l.b16 %v4692
  %v4902 = vunpack.c.l.b16 %v4693
  %v4903 = vunpack.c.l.b16 %v4694
  %v4904 = vunpack.c.l.b16 %v4695
  %v4905 = vunpack.c.l.b16 %v4696
  %v4906 = vunpack.c.l.b16 %v4697
  %v4907 = vunpack.c.l.b16 %v4698
  %v4908 = vunpack.c.l.b16 %v4699
  %v4909 = vunpack.c.l.b16 %v4700
  %v4910 = vunpack.c.l.b16 %v4701
  %v4911 = vunpack.c.l.b16 %v4702
  %v4912 = vunpack.c.l.b16 %v4703
  %v4913 = vunpack.c.l.b16 %v4704
  %v4914 = vunpack.c.l.b16 %v4705
  %v4915 = vunpack.c.l.b16 %v4706
  %v4916 = vunpack.c.l.b16 %v4707
  %v4917 = vunpack.c.l.b16 %v4708
  %v4918 = vunpack.c.l.b16 %v4709
  %v4919 = vunpack.c.l.b16 %v4710
  %v4920 = vpack.c.b16 %v4901, %v4900
  %v4921 = vpack.c.b16 %v4903, %v4902
  %v4922 = vpack.c.b16 %v4905, %v4904
  %v4923 = vpack.c.b16 %v4907, %v4906
  %v4924 = vpack.c.b16 %v4909, %v4908
  %v4925 = vpack.c.b16 %v4911, %v4910
  %v4926 = vpack.c.b16 %v4913, %v4912
  %v4927 = vpack.c.b16 %v4915, %v4914
  %v4928 = vpack.c.b16 %v4917, %v4916
  %v4929 = vpack.c.b16 %v4919, %v4918
  %v4941 = vsel %vm170, %v4690, 0
  %4943 = vmatprep.subr.bf16.mxu0 0
  %4944 = vmatpush1.bf16.msra.mxu0 %v4920
  %4945 = vmatprep.subr.bf16.mxu0 0
  %4946 = vmatpush1.bf16.msra.mxu0 %v4921
  %4947 = vmatprep.subr.bf16.mxu0 0
  %4948 = vmatpush1.bf16.msra.mxu0 %v4922
  %4949 = vmatprep.subr.bf16.mxu0 0
  %4950 = vmatpush1.bf16.msra.mxu0 %v4923
  %4951 = vmatprep.subr.bf16.mxu0 0
  %4952 = vmatpush1.bf16.msra.mxu0 %v4924
  %4953 = vmatprep.subr.bf16.mxu0 0
  %4954 = vmatpush1.bf16.msra.mxu0 %v4925
  %4955 = vmatprep.subr.bf16.mxu0 0
  %4956 = vmatpush1.bf16.msra.mxu0 %v4926
  %4957 = vmatprep.subr.bf16.mxu0 0
  %4958 = vmatpush1.bf16.msra.mxu0 %v4927
  %4959 = vmatprep.subr.bf16.mxu0 0
  %4960 = vmatpush1.bf16.msra.mxu0 %v4928
  %4961 = vmatprep.subr.bf16.mxu0 0
  %4962 = vmatpush1.bf16.msra.mxu0 %v4929
  %4963 = vmatprep.subr.bf16.mxu0 0
  %4964 = vmatpush1.bf16.msra.mxu0 0
  %4965 = vmatprep.subr.bf16.mxu0 0
  %4966 = vmatpush1.bf16.msra.mxu0 0
  %4967 = vmatprep.subr.bf16.mxu0 0
  %4968 = vmatpush1.bf16.msra.mxu0 0
  %4969 = vmatprep.subr.bf16.mxu0 0
  %4970 = vmatpush1.bf16.msra.mxu0 0
  %4971 = vmatprep.subr.bf16.mxu0 0
  %4972 = vmatpush1.bf16.msra.mxu0 0
  %4973 = vmatprep.subr.bf16.mxu0 0
  %4974 = vmatpush1.bf16.msra.mxu0 0
  %4975 = vmatprep.mubr.bf16.mxu0 %v4941
  %4976 = vmatmul.mubr.bf16.gmra.mrb[0].mxu0 %v4689
  %v4977 = vpop.f32.mrb[0].mxu0
  %v4978 = vadd.f32 %v4875, %v4977
  %v4979 = vpop.f32.mrb[0].mxu0
  %v4980 = vpop.f32.mrb[0].mxu0
  %v4981 = vpop.f32.mrb[0].mxu0
  %4982 = vdwg.mxu0
  %s4983 = scalar_lea.vmem %s6, 8
  %v4984 = vld [vmem:[%s4983] sm:$0xf]
  %4985 = vmatprep.subr.bf16.mxu0 %v4632
  %4986 = vmatpush1.bf16.msra.mxu0 %v4631
  %4987 = vmatprep.subr.bf16.mxu0 %v4634
  %4988 = vmatpush1.bf16.msra.mxu0 %v4633
  %4989 = vmatprep.subr.bf16.mxu0 %v4636
  %4990 = vmatpush1.bf16.msra.mxu0 %v4635
  %4991 = vmatprep.subr.bf16.mxu0 %v4638
  %4992 = vmatpush1.bf16.msra.mxu0 %v4637
  %4993 = vmatprep.subr.bf16.mxu0 %v4640
  %4994 = vmatpush1.bf16.msra.mxu0 %v4639
  %4995 = vmatprep.subr.bf16.mxu0 %v4642
  %4996 = vmatpush1.bf16.msra.mxu0 %v4641
  %4997 = vmatprep.subr.bf16.mxu0 %v4644
  %4998 = vmatpush1.bf16.msra.mxu0 %v4643
  %4999 = vmatprep.subr.bf16.mxu0 %v4646
  %5000 = vmatpush1.bf16.msra.mxu0 %v4645
  %5001 = vmatprep.subr.bf16.mxu0 0
  %5002 = vmatpush1.bf16.msra.mxu0 0
  %5003 = vmatprep.subr.bf16.mxu0 0
  %5004 = vmatpush1.bf16.msra.mxu0 0
  %5005 = vmatprep.subr.bf16.mxu0 0
  %5006 = vmatpush1.bf16.msra.mxu0 0
  %5007 = vmatprep.subr.bf16.mxu0 0
  %5008 = vmatpush1.bf16.msra.mxu0 0
  %5009 = vmatprep.subr.bf16.mxu0 0
  %5010 = vmatpush1.bf16.msra.mxu0 0
  %5011 = vmatprep.subr.bf16.mxu0 0
  %5012 = vmatpush1.bf16.msra.mxu0 0
  %5013 = vmatprep.subr.bf16.mxu0 0
  %5014 = vmatpush1.bf16.msra.mxu0 0
  %5015 = vmatprep.subr.bf16.mxu0 0
  %5016 = vmatpush1.bf16.msra.mxu0 0
  %5017 = vmatprep.mubr.bf16.mxu0 0
  %5018 = vmatmul.mubr.bf16.gmra.mrb[0].mxu0 %v4984
  %v5019 = vpop.f32.mrb[0].mxu0
  %v5020 = vadd.f32 0.0, %v5019
  %v5021 = vpop.f32.mrb[0].mxu0
  %v5022 = vadd.f32 0.0, %v5021
  %v5023 = vpop.f32.mrb[0].mxu0
  %v5024 = vpop.f32.mrb[0].mxu0
  %5025 = vdwg.mxu0
  %v5026 = vpack.c.bf16 %v5020, %v5020
  %v5027 = vpack.c.bf16 %v5022, %v5022
  %s5028 = scalar_lea.vmem %s7, 160
  %v5029 = vld [vmem:[%s5028] sm:$0xf]
  %v5030 = vld [vmem:[%s5028 + $0x4] sm:$0xf]
  %v5031 = vld [vmem:[%s5028 + $0x8] sm:$0xf]
  %v5032 = vld [vmem:[%s5028 + $0xc] sm:$0xf]
  %v5033 = vld [vmem:[%s5028 + $0x10] sm:$0xf]
  %v5034 = vld [vmem:[%s5028 + $0x14] sm:$0xf]
  %v5035 = vld [vmem:[%s5028 + $0x18] sm:$0xf]
  %v5036 = vld [vmem:[%s5028 + $0x1c] sm:$0xf]
  %v5037 = vld [vmem:[%s5028 + $0x20] sm:$0xf]
  %v5038 = vld [vmem:[%s5028 + $0x24] sm:$0xf]
  %v5039 = vld [vmem:[%s5028 + $0x28] sm:$0xf]
  %v5040 = vld [vmem:[%s5028 + $0x2c] sm:$0xf]
  %v5041 = vld [vmem:[%s5028 + $0x30] sm:$0xf]
  %v5042 = vld [vmem:[%s5028 + $0x34] sm:$0xf]
  %v5043 = vld [vmem:[%s5028 + $0x38] sm:$0xf]
  %v5044 = vld [vmem:[%s5028 + $0x3c] sm:$0xf]
  %v5045 = vld [vmem:[%s5028 + $0x40] sm:$0xf]
  %v5046 = vld [vmem:[%s5028 + $0x44] sm:$0xf]
  %v5047 = vld [vmem:[%s5028 + $0x48] sm:$0xf]
  %v5048 = vld [vmem:[%s5028 + $0x4c] sm:$0xf]
  %v5069 = vunpack.c.l.b16 %v5029
  %v5070 = vunpack.c.l.b16 %v5030
  %v5071 = vunpack.c.l.b16 %v5031
  %v5072 = vunpack.c.l.b16 %v5032
  %v5073 = vunpack.c.l.b16 %v5033
  %v5074 = vunpack.c.l.b16 %v5034
  %v5075 = vunpack.c.l.b16 %v5035
  %v5076 = vunpack.c.l.b16 %v5036
  %v5077 = vunpack.c.l.b16 %v5037
  %v5078 = vunpack.c.l.b16 %v5038
  %v5079 = vunpack.c.l.b16 %v5039
  %v5080 = vunpack.c.l.b16 %v5040
  %v5081 = vunpack.c.l.b16 %v5041
  %v5082 = vunpack.c.l.b16 %v5042
  %v5083 = vunpack.c.l.b16 %v5043
  %v5084 = vunpack.c.l.b16 %v5044
  %v5085 = vunpack.c.l.b16 %v5045
  %v5086 = vunpack.c.l.b16 %v5046
  %v5087 = vunpack.c.l.b16 %v5047
  %v5088 = vunpack.c.l.b16 %v5048
  %v5089 = vpack.c.b16 %v5070, %v5069
  %v5090 = vpack.c.b16 %v5072, %v5071
  %v5091 = vpack.c.b16 %v5074, %v5073
  %v5092 = vpack.c.b16 %v5076, %v5075
  %v5093 = vpack.c.b16 %v5078, %v5077
  %v5094 = vpack.c.b16 %v5080, %v5079
  %v5095 = vpack.c.b16 %v5082, %v5081
  %v5096 = vpack.c.b16 %v5084, %v5083
  %v5097 = vpack.c.b16 %v5086, %v5085
  %v5098 = vpack.c.b16 %v5088, %v5087
  %v5110 = vsel %vm170, %v5027, 0
  %5112 = vmatprep.subr.bf16.mxu0 0
  %5113 = vmatpush1.bf16.msra.mxu0 %v5089
  %5114 = vmatprep.subr.bf16.mxu0 0
  %5115 = vmatpush1.bf16.msra.mxu0 %v5090
  %5116 = vmatprep.subr.bf16.mxu0 0
  %5117 = vmatpush1.bf16.msra.mxu0 %v5091
  %5118 = vmatprep.subr.bf16.mxu0 0
  %5119 = vmatpush1.bf16.msra.mxu0 %v5092
  %5120 = vmatprep.subr.bf16.mxu0 0
  %5121 = vmatpush1.bf16.msra.mxu0 %v5093
  %5122 = vmatprep.subr.bf16.mxu0 0
  %5123 = vmatpush1.bf16.msra.mxu0 %v5094
  %5124 = vmatprep.subr.bf16.mxu0 0
  %5125 = vmatpush1.bf16.msra.mxu0 %v5095
  %5126 = vmatprep.subr.bf16.mxu0 0
  %5127 = vmatpush1.bf16.msra.mxu0 %v5096
  %5128 = vmatprep.subr.bf16.mxu0 0
  %5129 = vmatpush1.bf16.msra.mxu0 %v5097
  %5130 = vmatprep.subr.bf16.mxu0 0
  %5131 = vmatpush1.bf16.msra.mxu0 %v5098
  %5132 = vmatprep.subr.bf16.mxu0 0
  %5133 = vmatpush1.bf16.msra.mxu0 0
  %5134 = vmatprep.subr.bf16.mxu0 0
  %5135 = vmatpush1.bf16.msra.mxu0 0
  %5136 = vmatprep.subr.bf16.mxu0 0
  %5137 = vmatpush1.bf16.msra.mxu0 0
  %5138 = vmatprep.subr.bf16.mxu0 0
  %5139 = vmatpush1.bf16.msra.mxu0 0
  %5140 = vmatprep.subr.bf16.mxu0 0
  %5141 = vmatpush1.bf16.msra.mxu0 0
  %5142 = vmatprep.subr.bf16.mxu0 0
  %5143 = vmatpush1.bf16.msra.mxu0 0
  %5144 = vmatprep.mubr.bf16.mxu0 %v5110
  %5145 = vmatmul.mubr.bf16.gmra.mrb[0].mxu0 %v5026
  %v5146 = vpop.f32.mrb[0].mxu0
  %v5147 = vadd.f32 0.0, %v5146
  %v5148 = vpop.f32.mrb[0].mxu0
  %v5149 = vpop.f32.mrb[0].mxu0
  %v5150 = vpop.f32.mrb[0].mxu0
  %5151 = vdwg.mxu0
  %v5152 = vadd.f32 %v4978, %v5147
  %s5153 = scalar_lea.vmem %s6, 12
  %v5154 = vld [vmem:[%s5153] sm:$0xf]
  %5155 = vmatprep.subr.bf16.mxu0 %v4632
  %5156 = vmatpush1.bf16.msra.mxu0 %v4631
  %5157 = vmatprep.subr.bf16.mxu0 %v4634
  %5158 = vmatpush1.bf16.msra.mxu0 %v4633
  %5159 = vmatprep.subr.bf16.mxu0 %v4636
  %5160 = vmatpush1.bf16.msra.mxu0 %v4635
  %5161 = vmatprep.subr.bf16.mxu0 %v4638
  %5162 = vmatpush1.bf16.msra.mxu0 %v4637
  %5163 = vmatprep.subr.bf16.mxu0 %v4640
  %5164 = vmatpush1.bf16.msra.mxu0 %v4639
  %5165 = vmatprep.subr.bf16.mxu0 %v4642
  %5166 = vmatpush1.bf16.msra.mxu0 %v4641
  %5167 = vmatprep.subr.bf16.mxu0 %v4644
  %5168 = vmatpush1.bf16.msra.mxu0 %v4643
  %5169 = vmatprep.subr.bf16.mxu0 %v4646
  %5170 = vmatpush1.bf16.msra.mxu0 %v4645
  %5171 = vmatprep.subr.bf16.mxu0 0
  %5172 = vmatpush1.bf16.msra.mxu0 0
  %5173 = vmatprep.subr.bf16.mxu0 0
  %5174 = vmatpush1.bf16.msra.mxu0 0
  %5175 = vmatprep.subr.bf16.mxu0 0
  %5176 = vmatpush1.bf16.msra.mxu0 0
  %5177 = vmatprep.subr.bf16.mxu0 0
  %5178 = vmatpush1.bf16.msra.mxu0 0
  %5179 = vmatprep.subr.bf16.mxu0 0
  %5180 = vmatpush1.bf16.msra.mxu0 0
  %5181 = vmatprep.subr.bf16.mxu0 0
  %5182 = vmatpush1.bf16.msra.mxu0 0
  %5183 = vmatprep.subr.bf16.mxu0 0
  %5184 = vmatpush1.bf16.msra.mxu0 0
  %5185 = vmatprep.subr.bf16.mxu0 0
  %5186 = vmatpush1.bf16.msra.mxu0 0
  %5187 = vmatprep.mubr.bf16.mxu0 0
  %5188 = vmatmul.mubr.bf16.gmra.mrb[0].mxu0 %v5154
  %v5189 = vpop.f32.mrb[0].mxu0
  %v5190 = vadd.f32 0.0, %v5189
  %v5191 = vpop.f32.mrb[0].mxu0
  %v5192 = vadd.f32 0.0, %v5191
  %v5193 = vpop.f32.mrb[0].mxu0
  %v5194 = vpop.f32.mrb[0].mxu0
  %5195 = vdwg.mxu0
  %v5196 = vpack.c.bf16 %v5190, %v5190
  %v5197 = vpack.c.bf16 %v5192, %v5192
  %s5198 = scalar_lea.vmem %s7, 240
  %v5199 = vld [vmem:[%s5198] sm:$0xf]
  %v5200 = vld [vmem:[%s5198 + $0x4] sm:$0xf]
  %v5201 = vld [vmem:[%s5198 + $0x8] sm:$0xf]
  %v5202 = vld [vmem:[%s5198 + $0xc] sm:$0xf]
  %v5203 = vld [vmem:[%s5198 + $0x10] sm:$0xf]
  %v5204 = vld [vmem:[%s5198 + $0x14] sm:$0xf]
  %v5205 = vld [vmem:[%s5198 + $0x18] sm:$0xf]
  %v5206 = vld [vmem:[%s5198 + $0x1c] sm:$0xf]
  %v5207 = vld [vmem:[%s5198 + $0x20] sm:$0xf]
  %v5208 = vld [vmem:[%s5198 + $0x24] sm:$0xf]
  %v5209 = vld [vmem:[%s5198 + $0x28] sm:$0xf]
  %v5210 = vld [vmem:[%s5198 + $0x2c] sm:$0xf]
  %v5211 = vld [vmem:[%s5198 + $0x30] sm:$0xf]
  %v5212 = vld [vmem:[%s5198 + $0x34] sm:$0xf]
  %v5213 = vld [vmem:[%s5198 + $0x38] sm:$0xf]
  %v5214 = vld [vmem:[%s5198 + $0x3c] sm:$0xf]
  %v5215 = vld [vmem:[%s5198 + $0x40] sm:$0xf]
  %v5216 = vld [vmem:[%s5198 + $0x44] sm:$0xf]
  %v5217 = vld [vmem:[%s5198 + $0x48] sm:$0xf]
  %v5218 = vld [vmem:[%s5198 + $0x4c] sm:$0xf]
  %v5239 = vunpack.c.l.b16 %v5199
  %v5240 = vunpack.c.l.b16 %v5200
  %v5241 = vunpack.c.l.b16 %v5201
  %v5242 = vunpack.c.l.b16 %v5202
  %v5243 = vunpack.c.l.b16 %v5203
  %v5244 = vunpack.c.l.b16 %v5204
  %v5245 = vunpack.c.l.b16 %v5205
  %v5246 = vunpack.c.l.b16 %v5206
  %v5247 = vunpack.c.l.b16 %v5207
  %v5248 = vunpack.c.l.b16 %v5208
  %v5249 = vunpack.c.l.b16 %v5209
  %v5250 = vunpack.c.l.b16 %v5210
  %v5251 = vunpack.c.l.b16 %v5211
  %v5252 = vunpack.c.l.b16 %v5212
  %v5253 = vunpack.c.l.b16 %v5213
  %v5254 = vunpack.c.l.b16 %v5214
  %v5255 = vunpack.c.l.b16 %v5215
  %v5256 = vunpack.c.l.b16 %v5216
  %v5257 = vunpack.c.l.b16 %v5217
  %v5258 = vunpack.c.l.b16 %v5218
  %v5259 = vpack.c.b16 %v5240, %v5239
  %v5260 = vpack.c.b16 %v5242, %v5241
  %v5261 = vpack.c.b16 %v5244, %v5243
  %v5262 = vpack.c.b16 %v5246, %v5245
  %v5263 = vpack.c.b16 %v5248, %v5247
  %v5264 = vpack.c.b16 %v5250, %v5249
  %v5265 = vpack.c.b16 %v5252, %v5251
  %v5266 = vpack.c.b16 %v5254, %v5253
  %v5267 = vpack.c.b16 %v5256, %v5255
  %v5268 = vpack.c.b16 %v5258, %v5257
  %v5280 = vsel %vm170, %v5197, 0
  %5282 = vmatprep.subr.bf16.mxu0 0
  %5283 = vmatpush1.bf16.msra.mxu0 %v5259
  %5284 = vmatprep.subr.bf16.mxu0 0
  %5285 = vmatpush1.bf16.msra.mxu0 %v5260
  %5286 = vmatprep.subr.bf16.mxu0 0
  %5287 = vmatpush1.bf16.msra.mxu0 %v5261
  %5288 = vmatprep.subr.bf16.mxu0 0
  %5289 = vmatpush1.bf16.msra.mxu0 %v5262
  %5290 = vmatprep.subr.bf16.mxu0 0
  %5291 = vmatpush1.bf16.msra.mxu0 %v5263
  %5292 = vmatprep.subr.bf16.mxu0 0
  %5293 = vmatpush1.bf16.msra.mxu0 %v5264
  %5294 = vmatprep.subr.bf16.mxu0 0
  %5295 = vmatpush1.bf16.msra.mxu0 %v5265
  %5296 = vmatprep.subr.bf16.mxu0 0
  %5297 = vmatpush1.bf16.msra.mxu0 %v5266
  %5298 = vmatprep.subr.bf16.mxu0 0
  %5299 = vmatpush1.bf16.msra.mxu0 %v5267
  %5300 = vmatprep.subr.bf16.mxu0 0
  %5301 = vmatpush1.bf16.msra.mxu0 %v5268
  %5302 = vmatprep.subr.bf16.mxu0 0
  %5303 = vmatpush1.bf16.msra.mxu0 0
  %5304 = vmatprep.subr.bf16.mxu0 0
  %5305 = vmatpush1.bf16.msra.mxu0 0
  %5306 = vmatprep.subr.bf16.mxu0 0
  %5307 = vmatpush1.bf16.msra.mxu0 0
  %5308 = vmatprep.subr.bf16.mxu0 0
  %5309 = vmatpush1.bf16.msra.mxu0 0
  %5310 = vmatprep.subr.bf16.mxu0 0
  %5311 = vmatpush1.bf16.msra.mxu0 0
  %5312 = vmatprep.subr.bf16.mxu0 0
  %5313 = vmatpush1.bf16.msra.mxu0 0
  %5314 = vmatprep.mubr.bf16.mxu0 %v5280
  %5315 = vmatmul.mubr.bf16.gmra.mrb[0].mxu0 %v5196
  %v5316 = vpop.f32.mrb[0].mxu0
  %v5317 = vadd.f32 0.0, %v5316
  %v5318 = vpop.f32.mrb[0].mxu0
  %v5319 = vpop.f32.mrb[0].mxu0
  %v5320 = vpop.f32.mrb[0].mxu0
  %5321 = vdwg.mxu0
  %v5322 = vadd.f32 %v5152, %v5317
  %s5323 = scalar_lea.vmem %s6, 16
  %v5324 = vld [vmem:[%s5323] sm:$0xf]
  %5325 = vmatprep.subr.bf16.mxu0 %v4632
  %5326 = vmatpush1.bf16.msra.mxu0 %v4631
  %5327 = vmatprep.subr.bf16.mxu0 %v4634
  %5328 = vmatpush1.bf16.msra.mxu0 %v4633
  %5329 = vmatprep.subr.bf16.mxu0 %v4636
  %5330 = vmatpush1.bf16.msra.mxu0 %v4635
  %5331 = vmatprep.subr.bf16.mxu0 %v4638
  %5332 = vmatpush1.bf16.msra.mxu0 %v4637
  %5333 = vmatprep.subr.bf16.mxu0 %v4640
  %5334 = vmatpush1.bf16.msra.mxu0 %v4639
  %5335 = vmatprep.subr.bf16.mxu0 %v4642
  %5336 = vmatpush1.bf16.msra.mxu0 %v4641
  %5337 = vmatprep.subr.bf16.mxu0 %v4644
  %5338 = vmatpush1.bf16.msra.mxu0 %v4643
  %5339 = vmatprep.subr.bf16.mxu0 %v4646
  %5340 = vmatpush1.bf16.msra.mxu0 %v4645
  %5341 = vmatprep.subr.bf16.mxu0 0
  %5342 = vmatpush1.bf16.msra.mxu0 0
  %5343 = vmatprep.subr.bf16.mxu0 0
  %5344 = vmatpush1.bf16.msra.mxu0 0
  %5345 = vmatprep.subr.bf16.mxu0 0
  %5346 = vmatpush1.bf16.msra.mxu0 0
  %5347 = vmatprep.subr.bf16.mxu0 0
  %5348 = vmatpush1.bf16.msra.mxu0 0
  %5349 = vmatprep.subr.bf16.mxu0 0
  %5350 = vmatpush1.bf16.msra.mxu0 0
  %5351 = vmatprep.subr.bf16.mxu0 0
  %5352 = vmatpush1.bf16.msra.mxu0 0
  %5353 = vmatprep.subr.bf16.mxu0 0
  %5354 = vmatpush1.bf16.msra.mxu0 0
  %5355 = vmatprep.subr.bf16.mxu0 0
  %5356 = vmatpush1.bf16.msra.mxu0 0
  %5357 = vmatprep.mubr.bf16.mxu0 0
  %5358 = vmatmul.mubr.bf16.gmra.mrb[0].mxu0 %v5324
  %v5359 = vpop.f32.mrb[0].mxu0
  %v5360 = vadd.f32 0.0, %v5359
  %v5361 = vpop.f32.mrb[0].mxu0
  %v5362 = vadd.f32 0.0, %v5361
  %v5363 = vpop.f32.mrb[0].mxu0
  %v5364 = vpop.f32.mrb[0].mxu0
  %5365 = vdwg.mxu0
  %v5366 = vpack.c.bf16 %v5360, %v5360
  %v5367 = vpack.c.bf16 %v5362, %v5362
  %s5368 = scalar_lea.vmem %s7, 320
  %v5369 = vld [vmem:[%s5368] sm:$0xf]
  %v5370 = vld [vmem:[%s5368 + $0x4] sm:$0xf]
  %v5371 = vld [vmem:[%s5368 + $0x8] sm:$0xf]
  %v5372 = vld [vmem:[%s5368 + $0xc] sm:$0xf]
  %v5373 = vld [vmem:[%s5368 + $0x10] sm:$0xf]
  %v5374 = vld [vmem:[%s5368 + $0x14] sm:$0xf]
  %v5375 = vld [vmem:[%s5368 + $0x18] sm:$0xf]
  %v5376 = vld [vmem:[%s5368 + $0x1c] sm:$0xf]
  %v5377 = vld [vmem:[%s5368 + $0x20] sm:$0xf]
  %v5378 = vld [vmem:[%s5368 + $0x24] sm:$0xf]
  %v5379 = vld [vmem:[%s5368 + $0x28] sm:$0xf]
  %v5380 = vld [vmem:[%s5368 + $0x2c] sm:$0xf]
  %v5381 = vld [vmem:[%s5368 + $0x30] sm:$0xf]
  %v5382 = vld [vmem:[%s5368 + $0x34] sm:$0xf]
  %v5383 = vld [vmem:[%s5368 + $0x38] sm:$0xf]
  %v5384 = vld [vmem:[%s5368 + $0x3c] sm:$0xf]
  %v5385 = vld [vmem:[%s5368 + $0x40] sm:$0xf]
  %v5386 = vld [vmem:[%s5368 + $0x44] sm:$0xf]
  %v5387 = vld [vmem:[%s5368 + $0x48] sm:$0xf]
  %v5388 = vld [vmem:[%s5368 + $0x4c] sm:$0xf]
  %v5409 = vunpack.c.l.b16 %v5369
  %v5410 = vunpack.c.l.b16 %v5370
  %v5411 = vunpack.c.l.b16 %v5371
  %v5412 = vunpack.c.l.b16 %v5372
  %v5413 = vunpack.c.l.b16 %v5373
  %v5414 = vunpack.c.l.b16 %v5374
  %v5415 = vunpack.c.l.b16 %v5375
  %v5416 = vunpack.c.l.b16 %v5376
  %v5417 = vunpack.c.l.b16 %v5377
  %v5418 = vunpack.c.l.b16 %v5378
  %v5419 = vunpack.c.l.b16 %v5379
  %v5420 = vunpack.c.l.b16 %v5380
  %v5421 = vunpack.c.l.b16 %v5381
  %v5422 = vunpack.c.l.b16 %v5382
  %v5423 = vunpack.c.l.b16 %v5383
  %v5424 = vunpack.c.l.b16 %v5384
  %v5425 = vunpack.c.l.b16 %v5385
  %v5426 = vunpack.c.l.b16 %v5386
  %v5427 = vunpack.c.l.b16 %v5387
  %v5428 = vunpack.c.l.b16 %v5388
  %v5429 = vpack.c.b16 %v5410, %v5409
  %v5430 = vpack.c.b16 %v5412, %v5411
  %v5431 = vpack.c.b16 %v5414, %v5413
  %v5432 = vpack.c.b16 %v5416, %v5415
  %v5433 = vpack.c.b16 %v5418, %v5417
  %v5434 = vpack.c.b16 %v5420, %v5419
  %v5435 = vpack.c.b16 %v5422, %v5421
  %v5436 = vpack.c.b16 %v5424, %v5423
  %v5437 = vpack.c.b16 %v5426, %v5425
  %v5438 = vpack.c.b16 %v5428, %v5427
  %v5450 = vsel %vm170, %v5367, 0
  %5452 = vmatprep.subr.bf16.mxu0 0
  %5453 = vmatpush1.bf16.msra.mxu0 %v5429
  %5454 = vmatprep.subr.bf16.mxu0 0
  %5455 = vmatpush1.bf16.msra.mxu0 %v5430
  %5456 = vmatprep.subr.bf16.mxu0 0
  %5457 = vmatpush1.bf16.msra.mxu0 %v5431
  %5458 = vmatprep.subr.bf16.mxu0 0
  %5459 = vmatpush1.bf16.msra.mxu0 %v5432
  %5460 = vmatprep.subr.bf16.mxu0 0
  %5461 = vmatpush1.bf16.msra.mxu0 %v5433
  %5462 = vmatprep.subr.bf16.mxu0 0
  %5463 = vmatpush1.bf16.msra.mxu0 %v5434
  %5464 = vmatprep.subr.bf16.mxu0 0
  %5465 = vmatpush1.bf16.msra.mxu0 %v5435
  %5466 = vmatprep.subr.bf16.mxu0 0
  %5467 = vmatpush1.bf16.msra.mxu0 %v5436
  %5468 = vmatprep.subr.bf16.mxu0 0
  %5469 = vmatpush1.bf16.msra.mxu0 %v5437
  %5470 = vmatprep.subr.bf16.mxu0 0
  %5471 = vmatpush1.bf16.msra.mxu0 %v5438
  %5472 = vmatprep.subr.bf16.mxu0 0
  %5473 = vmatpush1.bf16.msra.mxu0 0
  %5474 = vmatprep.subr.bf16.mxu0 0
  %5475 = vmatpush1.bf16.msra.mxu0 0
  %5476 = vmatprep.subr.bf16.mxu0 0
  %5477 = vmatpush1.bf16.msra.mxu0 0
  %5478 = vmatprep.subr.bf16.mxu0 0
  %5479 = vmatpush1.bf16.msra.mxu0 0
  %5480 = vmatprep.subr.bf16.mxu0 0
  %5481 = vmatpush1.bf16.msra.mxu0 0
  %5482 = vmatprep.subr.bf16.mxu0 0
  %5483 = vmatpush1.bf16.msra.mxu0 0
  %5484 = vmatprep.mubr.bf16.mxu0 %v5450
  %5485 = vmatmul.mubr.bf16.gmra.mrb[0].mxu0 %v5366
  %v5486 = vpop.f32.mrb[0].mxu0
  %v5487 = vadd.f32 0.0, %v5486
  %v5488 = vpop.f32.mrb[0].mxu0
  %v5489 = vpop.f32.mrb[0].mxu0
  %v5490 = vpop.f32.mrb[0].mxu0
  %5491 = vdwg.mxu0
  %v5492 = vadd.f32 %v5322, %v5487
  %v5493 = vld [vmem:[%s8] sm:$0x1]
  %v5495 = vlaneseq
  %v5496 = vshrl.u32 %v5495, 7
  %v5497 = vsub.s32 0, %v5496
  %v5498 = vrot.slane %v5493, %v5497
  %v5500 = vadd.f32 %v5492, %v5498
  %v5501 = vmax.f32 %v5500, 0.0
  %v5502 = vpack.c.bf16 %v5501, %v5501
  %v5503 = vld [vmem:[%s9] sm:$0xf]
  %v5504 = vld [vmem:[%s9 + $0x4] sm:$0xf]
  %v5505 = vld [vmem:[%s9 + $0x8] sm:$0xf]
  %v5506 = vld [vmem:[%s9 + $0xc] sm:$0xf]
  %v5507 = vld [vmem:[%s9 + $0x10] sm:$0xf]
  %v5508 = vld [vmem:[%s9 + $0x14] sm:$0xf]
  %v5509 = vld [vmem:[%s9 + $0x18] sm:$0xf]
  %v5510 = vld [vmem:[%s9 + $0x1c] sm:$0xf]
  %v5511 = vld [vmem:[%s9 + $0x20] sm:$0xf]
  %v5512 = vld [vmem:[%s9 + $0x24] sm:$0xf]
  %v5513 = vld [vmem:[%s9 + $0x28] sm:$0xf]
  %v5514 = vld [vmem:[%s9 + $0x2c] sm:$0xf]
  %v5515 = vld [vmem:[%s9 + $0x30] sm:$0xf]
  %v5516 = vld [vmem:[%s9 + $0x34] sm:$0xf]
  %v5517 = vld [vmem:[%s9 + $0x38] sm:$0xf]
  %v5518 = vld [vmem:[%s10] sm:$0x1]
  %v5520 = vlaneseq
  %v5521 = vshrl.u32 %v5520, 7
  %v5522 = vsub.s32 0, %v5521
  %v5523 = vrot.slane %v5518, %v5522
  %v5540 = vunpack.c.l.b16 %v5503
  %v5541 = vunpack.c.l.b16 %v5504
  %v5542 = vunpack.c.l.b16 %v5505
  %v5543 = vunpack.c.l.b16 %v5506
  %v5544 = vunpack.c.l.b16 %v5507
  %v5545 = vunpack.c.l.b16 %v5508
  %v5546 = vunpack.c.l.b16 %v5509
  %v5547 = vunpack.c.l.b16 %v5510
  %v5548 = vunpack.c.l.b16 %v5511
  %v5549 = vunpack.c.l.b16 %v5512
  %v5550 = vunpack.c.l.b16 %v5513
  %v5551 = vunpack.c.l.b16 %v5514
  %v5552 = vunpack.c.l.b16 %v5515
  %v5553 = vunpack.c.l.b16 %v5516
  %v5554 = vunpack.c.l.b16 %v5517
  %v5555 = vpack.c.b16 %v5541, %v5540
  %v5556 = vpack.c.b16 %v5543, %v5542
  %v5557 = vpack.c.b16 %v5545, %v5544
  %v5558 = vpack.c.b16 %v5547, %v5546
  %v5559 = vpack.c.b16 %v5549, %v5548
  %v5560 = vpack.c.b16 %v5551, %v5550
  %v5561 = vpack.c.b16 %v5553, %v5552
  %v5562 = vpack.c.b16 %v5554, %v5554
  %vm5570 = vcmask 982016
  %v5572 = vsel %vm5570, %v5502, 0
  %v5575 = vsel %vm2603, %v5562, 0
  %5577 = vmatprep.subr.bf16.mxu0 0
  %5578 = vmatpush1.bf16.msra.mxu0 %v5555
  %5579 = vmatprep.subr.bf16.mxu0 0
  %5580 = vmatpush1.bf16.msra.mxu0 %v5556
  %5581 = vmatprep.subr.bf16.mxu0 0
  %5582 = vmatpush1.bf16.msra.mxu0 %v5557
  %5583 = vmatprep.subr.bf16.mxu0 0
  %5584 = vmatpush1.bf16.msra.mxu0 %v5558
  %5585 = vmatprep.subr.bf16.mxu0 0
  %5586 = vmatpush1.bf16.msra.mxu0 %v5559
  %5587 = vmatprep.subr.bf16.mxu0 0
  %5588 = vmatpush1.bf16.msra.mxu0 %v5560
  %5589 = vmatprep.subr.bf16.mxu0 0
  %5590 = vmatpush1.bf16.msra.mxu0 %v5561
  %5591 = vmatprep.subr.bf16.mxu0 0
  %5592 = vmatpush1.bf16.msra.mxu0 %v5575
  %5593 = vmatprep.subr.bf16.mxu0 0
  %5594 = vmatpush1.bf16.msra.mxu0 0
  %5595 = vmatprep.subr.bf16.mxu0 0
  %5596 = vmatpush1.bf16.msra.mxu0 0
  %5597 = vmatprep.subr.bf16.mxu0 0
  %5598 = vmatpush1.bf16.msra.mxu0 0
  %5599 = vmatprep.subr.bf16.mxu0 0
  %5600 = vmatpush1.bf16.msra.mxu0 0
  %5601 = vmatprep.subr.bf16.mxu0 0
  %5602 = vmatpush1.bf16.msra.mxu0 0
  %5603 = vmatprep.subr.bf16.mxu0 0
  %5604 = vmatpush1.bf16.msra.mxu0 0
  %5605 = vmatprep.subr.bf16.mxu0 0
  %5606 = vmatpush1.bf16.msra.mxu0 0
  %5607 = vmatprep.subr.bf16.mxu0 0
  %5608 = vmatpush1.bf16.msra.mxu0 0
  %5609 = vmatprep.mubr.bf16.mxu0 0
  %5610 = vmatmul.mubr.bf16.gmra.mrb[0].mxu0 %v5572
  %v5611 = vpop.f32.mrb[0].mxu0
  %v5612 = vadd.f32 %v5523, %v5611
  %v5613 = vpop.f32.mrb[0].mxu0
  %v5614 = vpop.f32.mrb[0].mxu0
  %v5615 = vpop.f32.mrb[0].mxu0
  %5616 = vdwg.mxu0
  %v5617 = vmax.f32 %v5612, 0.0
  %v5618 = vpack.c.bf16 %v5617, %v5617
  %v5619 = vld [vmem:[%s11] sm:$0xf]
  %v5620 = vld [vmem:[%s11 + $0x4] sm:$0xf]
  %v5621 = vld [vmem:[%s11 + $0x8] sm:$0xf]
  %v5622 = vld [vmem:[%s11 + $0xc] sm:$0xf]
  %v5623 = vld [vmem:[%s11 + $0x10] sm:$0xf]
  %v5624 = vld [vmem:[%s11 + $0x14] sm:$0xf]
  %v5625 = vld [vmem:[%s11 + $0x18] sm:$0xf]
  %v5626 = vld [vmem:[%s11 + $0x1c] sm:$0xf]
  %v5627 = vld [vmem:[%s11 + $0x20] sm:$0xf]
  %v5628 = vld [vmem:[%s11 + $0x24] sm:$0xf]
  %v5629 = vld [vmem:[%s11 + $0x28] sm:$0x3]
  %v5630 = vld [vmem:[%s12] sm:$0x1]
  %v5632 = vlaneseq
  %v5633 = vshrl.u32 %v5632, 7
  %v5634 = vsub.s32 0, %v5633
  %v5635 = vrot.slane %v5630, %v5634
  %v5648 = vunpack.c.l.b16 %v5619
  %v5649 = vunpack.c.l.b16 %v5620
  %v5650 = vunpack.c.l.b16 %v5621
  %v5651 = vunpack.c.l.b16 %v5622
  %v5652 = vunpack.c.l.b16 %v5623
  %v5653 = vunpack.c.l.b16 %v5624
  %v5654 = vunpack.c.l.b16 %v5625
  %v5655 = vunpack.c.l.b16 %v5626
  %v5656 = vunpack.c.l.b16 %v5627
  %v5657 = vunpack.c.l.b16 %v5628
  %v5658 = vunpack.c.l.b16 %v5629
  %v5659 = vpack.c.b16 %v5649, %v5648
  %v5660 = vpack.c.b16 %v5651, %v5650
  %v5661 = vpack.c.b16 %v5653, %v5652
  %v5662 = vpack.c.b16 %v5655, %v5654
  %v5663 = vpack.c.b16 %v5657, %v5656
  %v5664 = vpack.c.b16 %v5658, %v5658
  %vm5670 = vcmask 687104
  %v5672 = vsel %vm5670, %v5618, 0
  %vm5674 = vcmask 1041408
  %v5676 = vsel %vm5674, %v5664, 0
  %5678 = vmatprep.subr.bf16.mxu0 0
  %5679 = vmatpush1.bf16.msra.mxu0 %v5659
  %5680 = vmatprep.subr.bf16.mxu0 0
  %5681 = vmatpush1.bf16.msra.mxu0 %v5660
  %5682 = vmatprep.subr.bf16.mxu0 0
  %5683 = vmatpush1.bf16.msra.mxu0 %v5661
  %5684 = vmatprep.subr.bf16.mxu0 0
  %5685 = vmatpush1.bf16.msra.mxu0 %v5662
  %5686 = vmatprep.subr.bf16.mxu0 0
  %5687 = vmatpush1.bf16.msra.mxu0 %v5663
  %5688 = vmatprep.subr.bf16.mxu0 0
  %5689 = vmatpush1.bf16.msra.mxu0 %v5676
  %5690 = vmatprep.subr.bf16.mxu0 0
  %5691 = vmatpush1.bf16.msra.mxu0 0
  %5692 = vmatprep.subr.bf16.mxu0 0
  %5693 = vmatpush1.bf16.msra.mxu0 0
  %5694 = vmatprep.subr.bf16.mxu0 0
  %5695 = vmatpush1.bf16.msra.mxu0 0
  %5696 = vmatprep.subr.bf16.mxu0 0
  %5697 = vmatpush1.bf16.msra.mxu0 0
  %5698 = vmatprep.subr.bf16.mxu0 0
  %5699 = vmatpush1.bf16.msra.mxu0 0
  %5700 = vmatprep.subr.bf16.mxu0 0
  %5701 = vmatpush1.bf16.msra.mxu0 0
  %5702 = vmatprep.subr.bf16.mxu0 0
  %5703 = vmatpush1.bf16.msra.mxu0 0
  %5704 = vmatprep.subr.bf16.mxu0 0
  %5705 = vmatpush1.bf16.msra.mxu0 0
  %5706 = vmatprep.subr.bf16.mxu0 0
  %5707 = vmatpush1.bf16.msra.mxu0 0
  %5708 = vmatprep.subr.bf16.mxu0 0
  %5709 = vmatpush1.bf16.msra.mxu0 0
  %5710 = vmatprep.mubr.bf16.mxu0 0
  %5711 = vmatmul.mubr.bf16.gmra.mrb[0].mxu0 %v5672
  %v5712 = vpop.f32.mrb[0].mxu0
  %v5713 = vadd.f32 %v5635, %v5712
  %v5714 = vpop.f32.mrb[0].mxu0
  %v5715 = vpop.f32.mrb[0].mxu0
  %v5716 = vpop.f32.mrb[0].mxu0
  %5717 = vdwg.mxu0
  %5718 = vst [vmem:[%s13] sm:$0xff] %v5713
  // Predicated region
  $region54: #{lenet5_forward.1} parent=0 // pred_check
    _
  $region55: #{lenet5_forward.1} parent=0 // pred_check_branch
    %5720 = sbr.rel (0) target = $region57
  $region56: #{lenet5_forward.1} parent=0 // pred_region
    _
  $region57: #{lenet5_forward.1} parent=0 // pred_fallthru
    _
  // Predicated region
  $region58: #{lenet5_forward.1} parent=0 // pred_check
    _
  $region59: #{lenet5_forward.1} parent=0 // pred_check_branch
    %5722 = sbr.rel (0) target = $region61
  $region60: #{lenet5_forward.1} parent=0 // pred_region
    _
  $region61: #{lenet5_forward.1} parent=0 // pred_fallthru
    _

</llo_original>
